<compile_context>
chip_gen: v7x
topology: tpu7x:2x2x1
jax: 0.10.0
libtpu: 0.0.40
codegen_flags: <defaults>
</compile_context>

<pallas_src>
import jax
import jax.numpy as jnp
from jax.experimental import pallas as pl
from jax.experimental.pallas import tpu as pltpu


_BN_EPS = 1e-5
_TM_MAX = 1024                   # review: 512->85%, 1024->86% of HBM roofline
_VMEM_LIMIT = 48 * 1024 * 1024   # headroom but below v7x's 64 MiB/TC physical VMEM


def _round_up(x, m):
    return (x + m - 1) // m * m


def _pick_tiles(m, tm_max=_TM_MAX):
    """Pick (TM, Mp): TM multiple of 16, grid = Mp//TM has >=2 and an even number of steps."""
    steps = max(2, -(-m // tm_max))
    if steps % 2:
        steps += 1
    tm = _round_up(-(-m // steps), 16)
    return tm, tm * steps


# ----------------------------- Pallas kernels ------------------------------

def _conv_gemm_kernel(x_ref, w_ref, b_ref, o_ref):
    # x: (TM, K) bf16 patches, w: (K, N) bf16 folded weights, b: (1, N) f32 bias.
    acc = jnp.dot(x_ref[...], w_ref[...], preferred_element_type=jnp.float32)
    o_ref[...] = jnp.maximum(acc + b_ref[...], 0.0).astype(o_ref.dtype)


def _maxpool_kernel(x_ref, o_ref):
    # x: (1, Hp, Wp/2, 2C) bf16, -inf padded; o: (1, Ho, Wo, C) bf16.
    # Column taps come from the 128-lane "pair of columns" view; row taps from a
    # free leading-dim regrouping (no strided access, no HBM window materialization).
    _, ho, wo, c = o_ref.shape
    x = x_ref[0]                                   # (Hp, Wo+1, 2C)
    c0 = x[:, 0:wo, 0:c]                           # col 2j
    c1 = x[:, 0:wo, c:2 * c]                       # col 2j+1
    c2 = x[:, 1:wo + 1, 0:c]                       # col 2j+2
    cm = jnp.maximum(jnp.maximum(c0, c1), c2)      # (Hp, Wo, C)
    r01 = cm[0:2 * ho].reshape(ho, 2, wo, c)       # rows 2i / 2i+1
    r2 = cm[2:2 * ho + 2].reshape(ho, 2, wo, c)[:, 0]   # rows 2i+2
    o_ref[0] = jnp.maximum(jnp.maximum(r01[:, 0], r01[:, 1]), r2)


def _make_basic_block_kernel(h, w):
    """Fused BasicBlock: conv3x3+bn+relu -> conv3x3+bn + identity -> relu.

    Activations are flat zero-padded images of shape (Npx, 64):
    Npx = round_up((h+2)*(w+2)+2, 8); row-major over the (h+2, w+2) padded grid.
    Output is written in the same padded flat form -> feeds the next block directly.
    """
    wp = w + 2
    ell = h * wp                 # extended-grid length (h rows of padded width)

    def kernel(xp_ref, w1_ref, b1_ref, w2_ref, b2_ref, op_ref, yp_ref):
        c = xp_ref.shape[-1]
        npx = xp_ref.shape[1]
        head = wp + 1
        tail = npx - head - ell

        # validity mask on the extended (h, wp) grid: the last two columns of each
        # row are garbage (they alias the next row / tail) and must become zeros so
        # the stored result is a correctly zero-padded image.
        col = jax.lax.broadcasted_iota(jnp.int32, (ell, 1), 0) % wp
        valid = col < w

        def conv3x3(src_ref, w_ref, b_ref, extra=None):
            acc = jnp.zeros((ell, c), jnp.float32)
            for ki in range(3):
                for kj in range(3):
                    t = ki * 3 + kj
                    off = ki * wp + kj
                    acc = acc + jnp.dot(src_ref[pl.ds(off, ell), :], w_ref[t],
                                        preferred_element_type=jnp.float32)
            acc = acc + b_ref[...]
            if extra is not None:
                acc = acc + extra
            return jnp.where(valid, jnp.maximum(acc, 0.0), 0.0)

        zeros_head = jnp.zeros((head, c), jnp.bfloat16)
        zeros_tail = jnp.zeros((tail, c), jnp.bfloat16)

        # conv1 + bn1 + relu  -> zero-padded y kept only in VMEM scratch.
        y = conv3x3(xp_ref.at[0], w1_ref, b1_ref)
        yp_ref[pl.ds(0, head), :] = zeros_head
        yp_ref[pl.ds(head, ell), :] = y.astype(yp_ref.dtype)
        yp_ref[pl.ds(head + ell, tail), :] = zeros_tail

        # conv2 + bn2 + identity (bf16 -> f32 upcast) + relu -> padded block output.
        res = xp_ref[0, pl.ds(head, ell), :].astype(jnp.float32)
        out = conv3x3(yp_ref, w2_ref, b2_ref, extra=res)
        op_ref[0, pl.ds(0, head), :] = zeros_head.astype(op_ref.dtype)
        op_ref[0, pl.ds(head, ell), :] = out.astype(op_ref.dtype)
        op_ref[0, pl.ds(head + ell, tail), :] = zeros_tail.astype(op_ref.dtype)

    return kernel


# ------------------------------- JAX glue ----------------------------------

def _im2col(x, kh, kw, stride, pad):
    """x: (B, H, W, C) bf16 -> (B*Ho*Wo, kh*kw*C) bf16 patches."""
    b, hh, ww, c = x.shape
    xp = jnp.pad(x, ((0, 0), (pad, pad), (pad, pad), (0, 0)))
    ho = (hh + 2 * pad - kh) // stride + 1
    wo = (ww + 2 * pad - kw) // stride + 1
    cols = []
    for i in range(kh):
        for j in range(kw):
            cols.append(xp[:, i:i + stride * ho:stride, j:j + stride * wo:stride, :])
    patches = jnp.stack(cols, axis=3)                   # (B, Ho, Wo, kh*kw, C)
    return patches.reshape(b * ho * wo, kh * kw * c), (b, ho, wo)


def _conv1_bn_relu(x, w_flat, bias):
    """Stem 7x7/2 conv as a tiled bf16 GEMM with fused folded-BN bias + ReLU."""
    cols, (b, ho, wo) = _im2col(x, 7, 7, 2, 3)
    m, k = cols.shape
    kp, n = w_flat.shape                                # K pre-padded at init
    if kp != k:
        cols = jnp.pad(cols, ((0, 0), (0, kp - k)))
    tm, mp = _pick_tiles(m)
    if mp != m:
        cols = jnp.pad(cols, ((0, mp - m), (0, 0)))

    out = pl.pallas_call(
        _conv_gemm_kernel,
        out_shape=jax.ShapeDtypeStruct((mp, n), jnp.bfloat16),
        grid=(mp // tm,),
        in_specs=[pl.BlockSpec((tm, kp), lambda i: (i, 0)),   # streamed per tile
                  pl.BlockSpec((kp, n), lambda i: (0, 0)),    # VMEM resident
                  pl.BlockSpec((1, n), lambda i: (0, 0))],    # VMEM resident
        out_specs=pl.BlockSpec((tm, n), lambda i: (i, 0)),
        compiler_params=pltpu.CompilerParams(
            dimension_semantics=("parallel",),
            vmem_limit_bytes=_VMEM_LIMIT),
        cost_estimate=pl.CostEstimate(
            flops=2 * mp * kp * n,
            transcendentals=0,
            bytes_accessed=mp * kp * 2 + kp * n * 2 + n * 4 + mp * n * 2),
    )(cols, w_flat, bias)
    return out[:m].reshape(b, ho, wo, n)


def _maxpool_3x3_s2_p1(x):
    """x: (B, H, W, C) bf16 -> (B, Ho, Wo, C) bf16; one read + one write of the image."""
    b, hh, ww, c = x.shape
    ho = (hh + 2 - 3) // 2 + 1
    wo = (ww + 2 - 3) // 2 + 1
    hp = 2 * ho + 2
    wp = 2 * wo + 2
    xp = jnp.pad(x, ((0, 0), (1, hp - hh - 1), (1, wp - ww - 1), (0, 0)),
                 constant_values=-jnp.inf)
    xv = xp.reshape(b, hp, wp // 2, 2 * c)              # free row-major 128-lane view

    return pl.pallas_call(
        _maxpool_kernel,
        out_shape=jax.ShapeDtypeStruct((b, ho, wo, c), x.dtype),
        grid=(b,),
        in_specs=[pl.BlockSpec((1, hp, wp // 2, 2 * c), lambda i: (i, 0, 0, 0))],
        out_specs=pl.BlockSpec((1, ho, wo, c), lambda i: (i, 0, 0, 0)),
        compiler_params=pltpu.CompilerParams(
            dimension_semantics=("parallel",),
            vmem_limit_bytes=_VMEM_LIMIT),
        cost_estimate=pl.CostEstimate(
            flops=9 * b * ho * wo * c,
            transcendentals=0,
            bytes_accessed=b * hp * wp * c * 2 + b * ho * wo * c * 2),
    )(xv)


def _basic_block(xp, w1, b1, w2, b2, h, w):
    """One fused BasicBlock over flat padded images xp: (B, Npx, 64) bf16."""
    b, npx, c = xp.shape
    kernel = _make_basic_block_kernel(h, w)
    return pl.pallas_call(
        kernel,
        out_shape=jax.ShapeDtypeStruct((b, npx, c), xp.dtype),
        grid=(b,),
        in_specs=[pl.BlockSpec((1, npx, c), lambda i: (i, 0, 0)),
                  pl.BlockSpec((9, c, c), lambda i: (0, 0, 0)),   # VMEM resident
                  pl.BlockSpec((1, c), lambda i: (0, 0)),
                  pl.BlockSpec((9, c, c), lambda i: (0, 0, 0)),
                  pl.BlockSpec((1, c), lambda i: (0, 0))],
        out_specs=pl.BlockSpec((1, npx, c), lambda i: (i, 0, 0)),
        scratch_shapes=[pltpu.VMEM((npx, c), jnp.bfloat16)],      # y never hits HBM
        compiler_params=pltpu.CompilerParams(
            dimension_semantics=("parallel",),
            vmem_limit_bytes=_VMEM_LIMIT),
        cost_estimate=pl.CostEstimate(
            flops=2 * 2 * 9 * b * h * (w + 2) * c * c,
            transcendentals=0,
            bytes_accessed=2 * b * npx * c * 2 + 2 * 9 * c * c * 2 + 2 * c * 4),
    )(xp, w1, b1, w2, b2)


# --------------------------- parameter creation -----------------------------

def _init_conv_bn(key, kh, kw, cin, cout, fmt):
    """Conv (no bias) + BatchNorm folded (eval mode) into bf16 weights + f32 bias."""
    kw_, kg, kb, km, kv = jax.random.split(key, 5)
    w = 0.05 * jax.random.normal(kw_, (kh, kw, cin, cout), jnp.float32)
    gamma = 1.0 + 0.1 * jax.random.normal(kg, (cout,), jnp.float32)
    beta = 0.1 * jax.random.normal(kb, (cout,), jnp.float32)
    mean = 0.1 * jax.random.normal(km, (cout,), jnp.float32)
    var = jax.random.uniform(kv, (cout,), jnp.float32, minval=0.5, maxval=1.5)
    scale = gamma / jnp.sqrt(var + _BN_EPS)
    wf = w * scale
    bias = (beta - mean * scale)[None, :]                    # (1, N) f32
    if fmt == "gemm":                                        # conv1: im2col layout
        w_flat = wf.reshape(kh * kw * cin, cout)
        k = kh * kw * cin
        kp = _round_up(k, 8)
        if kp != k:
            w_flat = jnp.pad(w_flat, ((0, kp - k), (0, 0)))
        wq = w_flat
    else:                                                    # layer1: per-tap layout
        wq = wf.reshape(kh * kw, cin, cout)
    return {"w": wq.astype(jnp.bfloat16), "b": bias}


def init_params(key):
    keys = jax.random.split(key, 1 + 3 * 2)
    params = {"conv1": _init_conv_bn(keys[0], 7, 7, 3, 64, "gemm"), "layer1": []}
    for blk in range(3):
        params["layer1"].append({
            "c1": _init_conv_bn(keys[1 + 2 * blk], 3, 3, 64, 64, "taps"),
            "c2": _init_conv_bn(keys[2 + 2 * blk], 3, 3, 64, 64, "taps"),
        })
    return params


# --------------------------------- forward ----------------------------------

def resnet_features_forward(x_nchw, params):
    # NCHW f32 -> NHWC bf16 (single cast; activations stay bf16 in HBM from here on)
    x = jnp.transpose(x_nchw, (0, 2, 3, 1)).astype(jnp.bfloat16)

    # stem: conv1 7x7/2 + bn + relu, then maxpool 3x3/2
    x = _conv1_bn_relu(x, params["conv1"]["w"], params["conv1"]["b"])
    x = _maxpool_3x3_s2_p1(x)

    # layer1: three fused BasicBlocks over flat zero-padded images
    b, h2, w2, c = x.shape
    hp, wp = h2 + 2, w2 + 2
    np_ = hp * wp
    npx = _round_up(np_ + 2, 8)
    xp = jnp.pad(x, ((0, 0), (1, 1), (1, 1), (0, 0))).reshape(b, np_, c)
    xp = jnp.pad(xp, ((0, 0), (0, npx - np_), (0, 0)))
    for blk in params["layer1"]:
        xp = _basic_block(xp, blk["c1"]["w"], blk["c1"]["b"],
                          blk["c2"]["w"], blk["c2"]["b"], h2, w2)

    # strip padding, NHWC -> NCHW f32 (match PyTorch output layout/dtype)
    out = xp[:, :np_, :].reshape(b, hp, wp, c)[:, 1:h2 + 1, 1:w2 + 1, :]
    return jnp.transpose(out, (0, 3, 1, 2)).astype(jnp.float32)


# ----------------------------------- main ------------------------------------

if __name__ == "__main__":
    key = jax.random.PRNGKey(0)
    k_params, k_x = jax.random.split(key)
    params = init_params(k_params)

    # resnet34 stem expects 3 input channels; small spatial size for the demo.
    x = jax.random.normal(k_x, (2, 3, 16, 16), jnp.float32)

    fwd = jax.jit(lambda xx: resnet_features_forward(xx, params))
    out = jax.block_until_ready(fwd(x))

    assert out.shape == (2, 64, 4, 4), out.shape
    assert bool(jnp.all(jnp.isfinite(out)))
    print("KERNEL_OK")
</pallas_src>

<mosaic_0001>
module attributes {stable_mosaic.version = 11 : i64} {
  func.func @_conv_gemm_kernel(%arg0: i32, %arg1: memref<64x152xbf16, #tpu.memory_space<vmem>>, %arg2: memref<152x64xbf16, #tpu.memory_space<vmem>>, %arg3: memref<1x64xf32, #tpu.memory_space<vmem>>, %arg4: memref<64x64xbf16, #tpu.memory_space<vmem>>) attributes {dimension_semantics = [#tpu.dimension_semantics<parallel>], iteration_bounds = array<i64: 2>, scalar_prefetch = 0 : i64, scratch_operands = 0 : i64, tpu.core_type = #tpu.core_type<tc>, window_params = [{transform_indices = @transform_0, window_bounds = array<i64: 64, 152>}, {pipeline_mode = #tpu.pipeline_mode<synchronous>, transform_indices = @transform_1, window_bounds = array<i64: 152, 64>}, {pipeline_mode = #tpu.pipeline_mode<synchronous>, transform_indices = @transform_2, window_bounds = array<i64: 1, 64>}, {transform_indices = @transform_3, window_bounds = array<i64: 64, 64>}]} {
    %c0 = arith.constant 0 : index
    %c0_0 = arith.constant 0 : index
    %0 = vector.load %arg1[%c0, %c0_0] : memref<64x152xbf16, #tpu.memory_space<vmem>>, vector<64x152xbf16>
    %c0_1 = arith.constant 0 : index
    %c0_2 = arith.constant 0 : index
    %1 = vector.load %arg2[%c0_1, %c0_2] : memref<152x64xbf16, #tpu.memory_space<vmem>>, vector<152x64xbf16>
    %cst = arith.constant dense<0.000000e+00> : vector<64x64xf32>
    %2 = tpu.matmul %0, %1, %cst {dimension_numbers = #tpu.dot_dimension_numbers<[1], [0], [0], [1], [0, 0, 1, 1], [], []>} : vector<64x152xbf16>, vector<152x64xbf16>, vector<64x64xf32> -> vector<64x64xf32>
    %c0_3 = arith.constant 0 : index
    %c0_4 = arith.constant 0 : index
    %3 = vector.load %arg3[%c0_3, %c0_4] : memref<1x64xf32, #tpu.memory_space<vmem>>, vector<1x64xf32>
    %4 = vector.broadcast %3 : vector<1x64xf32> to vector<64x64xf32>
    %5 = arith.addf %2, %4 : vector<64x64xf32>
    %cst_5 = arith.constant 0.000000e+00 : f32
    %6 = vector.broadcast %cst_5 : f32 to vector<64x64xf32>
    %7 = arith.maximumf %5, %6 : vector<64x64xf32>
    %8 = arith.truncf %7 : vector<64x64xf32> to vector<64x64xbf16>
    %c0_6 = arith.constant 0 : index
    %c0_7 = arith.constant 0 : index
    %9 = vector.load %arg4[%c0_6, %c0_7] : memref<64x64xbf16, #tpu.memory_space<vmem>>, vector<64x64xbf16>
    tpu.vector_store %arg4[%c0_6, %c0_7], %8 {strides = array<i32>} : memref<64x64xbf16, #tpu.memory_space<vmem>>, vector<64x64xbf16>,
    return
  }
  func.func @transform_0(%arg0: i32) -> (i32, i32) {
    %c0_i32 = arith.constant 0 : i32
    %c0_i32_0 = arith.constant 0 : i32
    return %arg0, %c0_i32 : i32, i32
  }
  func.func @transform_1(%arg0: i32) -> (i32, i32) {
    %c0_i32 = arith.constant 0 : i32
    %c0_i32_0 = arith.constant 0 : i32
    %c0_i32_1 = arith.constant 0 : i32
    return %c0_i32, %c0_i32_0 : i32, i32
  }
  func.func @transform_2(%arg0: i32) -> (i32, i32) {
    %c0_i32 = arith.constant 0 : i32
    %c0_i32_0 = arith.constant 0 : i32
    %c0_i32_1 = arith.constant 0 : i32
    return %c0_i32, %c0_i32_0 : i32, i32
  }
  func.func @transform_3(%arg0: i32) -> (i32, i32) {
    %c0_i32 = arith.constant 0 : i32
    %c0_i32_0 = arith.constant 0 : i32
    return %arg0, %c0_i32 : i32, i32
  }
}

module attributes {stable_mosaic.version = 11 : i64} {
  func.func @_maxpool_kernel(%arg0: i32, %arg1: memref<1x10x5x128xbf16, #tpu.memory_space<vmem>>, %arg2: memref<1x4x4x64xbf16, #tpu.memory_space<vmem>>) attributes {dimension_semantics = [#tpu.dimension_semantics<parallel>], iteration_bounds = array<i64: 2>, scalar_prefetch = 0 : i64, scratch_operands = 0 : i64, tpu.core_type = #tpu.core_type<tc>, window_params = [{transform_indices = @transform_0, window_bounds = array<i64: 1, 10, 5, 128>}, {transform_indices = @transform_1, window_bounds = array<i64: 1, 4, 4, 64>}]} {
    %c0 = arith.constant 0 : index
    %c0_0 = arith.constant 0 : index
    %c0_1 = arith.constant 0 : index
    %c0_2 = arith.constant 0 : index
    %0 = vector.load %arg1[%c0, %c0_0, %c0_1, %c0_2] : memref<1x10x5x128xbf16, #tpu.memory_space<vmem>>, vector<1x10x5x128xbf16>
    %1 = vector.shape_cast %0 : vector<1x10x5x128xbf16> to vector<10x5x128xbf16>
    %2 = vector.extract_strided_slice %1 {offsets = [0, 0, 0], sizes = [10, 4, 64], strides = [1, 1, 1]} : vector<10x5x128xbf16> to vector<10x4x64xbf16>
    %3 = vector.extract_strided_slice %1 {offsets = [0, 0, 64], sizes = [10, 4, 64], strides = [1, 1, 1]} : vector<10x5x128xbf16> to vector<10x4x64xbf16>
    %4 = vector.extract_strided_slice %1 {offsets = [0, 1, 0], sizes = [10, 4, 64], strides = [1, 1, 1]} : vector<10x5x128xbf16> to vector<10x4x64xbf16>
    %5 = arith.maximumf %2, %3 : vector<10x4x64xbf16>
    %6 = arith.maximumf %5, %4 : vector<10x4x64xbf16>
    %7 = vector.extract_strided_slice %6 {offsets = [0, 0, 0], sizes = [8, 4, 64], strides = [1, 1, 1]} : vector<10x4x64xbf16> to vector<8x4x64xbf16>
    %8 = vector.shape_cast %7 : vector<8x4x64xbf16> to vector<4x2x4x64xbf16>
    %9 = vector.extract_strided_slice %6 {offsets = [2, 0, 0], sizes = [8, 4, 64], strides = [1, 1, 1]} : vector<10x4x64xbf16> to vector<8x4x64xbf16>
    %10 = vector.shape_cast %9 : vector<8x4x64xbf16> to vector<4x2x4x64xbf16>
    %11 = vector.extract_strided_slice %10 {offsets = [0, 0, 0, 0], sizes = [4, 1, 4, 64], strides = [1, 1, 1, 1]} : vector<4x2x4x64xbf16> to vector<4x1x4x64xbf16>
    %12 = vector.shape_cast %11 : vector<4x1x4x64xbf16> to vector<4x4x64xbf16>
    %13 = vector.extract_strided_slice %8 {offsets = [0, 0, 0, 0], sizes = [4, 1, 4, 64], strides = [1, 1, 1, 1]} : vector<4x2x4x64xbf16> to vector<4x1x4x64xbf16>
    %14 = vector.shape_cast %13 : vector<4x1x4x64xbf16> to vector<4x4x64xbf16>
    %15 = vector.extract_strided_slice %8 {offsets = [0, 1, 0, 0], sizes = [4, 1, 4, 64], strides = [1, 1, 1, 1]} : vector<4x2x4x64xbf16> to vector<4x1x4x64xbf16>
    %16 = vector.shape_cast %15 : vector<4x1x4x64xbf16> to vector<4x4x64xbf16>
    %17 = arith.maximumf %14, %16 : vector<4x4x64xbf16>
    %18 = arith.maximumf %17, %12 : vector<4x4x64xbf16>
    %c0_3 = arith.constant 0 : index
    %c0_4 = arith.constant 0 : index
    %c0_5 = arith.constant 0 : index
    %c0_6 = arith.constant 0 : index
    %19 = vector.load %arg2[%c0_3, %c0_4, %c0_5, %c0_6] : memref<1x4x4x64xbf16, #tpu.memory_space<vmem>>, vector<1x4x4x64xbf16>
    %20 = vector.shape_cast %19 : vector<1x4x4x64xbf16> to vector<4x4x64xbf16>
    %21 = vector.shape_cast %18 : vector<4x4x64xbf16> to vector<1x4x4x64xbf16>
    tpu.vector_store %arg2[%c0_3, %c0_4, %c0_5, %c0_6], %21 {strides = array<i32>} : memref<1x4x4x64xbf16, #tpu.memory_space<vmem>>, vector<1x4x4x64xbf16>,
    return
  }
  func.func @transform_0(%arg0: i32) -> (i32, i32, i32, i32) {
    %c0_i32 = arith.constant 0 : i32
    %c0_i32_0 = arith.constant 0 : i32
    %c0_i32_1 = arith.constant 0 : i32
    %c0_i32_2 = arith.constant 0 : i32
    return %arg0, %c0_i32, %c0_i32_0, %c0_i32_1 : i32, i32, i32, i32
  }
  func.func @transform_1(%arg0: i32) -> (i32, i32, i32, i32) {
    %c0_i32 = arith.constant 0 : i32
    %c0_i32_0 = arith.constant 0 : i32
    %c0_i32_1 = arith.constant 0 : i32
    %c0_i32_2 = arith.constant 0 : i32
    return %arg0, %c0_i32, %c0_i32_0, %c0_i32_1 : i32, i32, i32, i32
  }
}

module attributes {stable_mosaic.version = 11 : i64} {
  func.func @kernel(%arg0: i32, %arg1: memref<1x40x64xbf16, #tpu.memory_space<vmem>>, %arg2: memref<9x64x64xbf16, #tpu.memory_space<vmem>>, %arg3: memref<1x64xf32, #tpu.memory_space<vmem>>, %arg4: memref<9x64x64xbf16, #tpu.memory_space<vmem>>, %arg5: memref<1x64xf32, #tpu.memory_space<vmem>>, %arg6: memref<1x40x64xbf16, #tpu.memory_space<vmem>>, %arg7: memref<40x64xbf16, #tpu.memory_space<vmem>>) attributes {dimension_semantics = [#tpu.dimension_semantics<parallel>], iteration_bounds = array<i64: 2>, scalar_prefetch = 0 : i64, scratch_operands = 1 : i64, tpu.core_type = #tpu.core_type<tc>, window_params = [{transform_indices = @transform_0, window_bounds = array<i64: 1, 40, 64>}, {pipeline_mode = #tpu.pipeline_mode<synchronous>, transform_indices = @transform_1, window_bounds = array<i64: 9, 64, 64>}, {pipeline_mode = #tpu.pipeline_mode<synchronous>, transform_indices = @transform_2, window_bounds = array<i64: 1, 64>}, {pipeline_mode = #tpu.pipeline_mode<synchronous>, transform_indices = @transform_3, window_bounds = array<i64: 9, 64, 64>}, {pipeline_mode = #tpu.pipeline_mode<synchronous>, transform_indices = @transform_4, window_bounds = array<i64: 1, 64>}, {transform_indices = @transform_5, window_bounds = array<i64: 1, 40, 64>}]} {
    %0 = tpu.iota {dimensions = array<i32: 0>} : vector<24x1xi32>
    %c6_i32 = arith.constant 6 : i32
    %c0_i32 = arith.constant 0 : i32
    %1 = arith.cmpi eq, %c6_i32, %c0_i32 : i32
    %c1_i32 = arith.constant 1 : i32
    %2 = arith.select %1, %c1_i32, %c6_i32 : i32
    %3 = vector.broadcast %2 : i32 to vector<24x1xi32>
    %4 = arith.remsi %0, %3 : vector<24x1xi32>
    %c0_i32_0 = arith.constant 0 : i32
    %5 = vector.broadcast %c0_i32_0 : i32 to vector<24x1xi32>
    %6 = arith.cmpi ne, %4, %5 : vector<24x1xi32>
    %c0_i32_1 = arith.constant 0 : i32
    %7 = vector.broadcast %c0_i32_1 : i32 to vector<24x1xi32>
    %8 = arith.cmpi slt, %4, %7 : vector<24x1xi32>
    %c0_i32_2 = arith.constant 0 : i32
    %9 = arith.cmpi slt, %2, %c0_i32_2 : i32
    %10 = vector.broadcast %9 : i1 to vector<24x1xi1>
    %11 = vector.broadcast %10 : vector<24x1xi1> to vector<24x1xi1>
    %12 = arith.xori %8, %11 : vector<24x1xi1>
    %13 = arith.andi %12, %6 : vector<24x1xi1>
    %14 = vector.broadcast %2 : i32 to vector<24x1xi32>
    %15 = arith.addi %4, %14 : vector<24x1xi32>
    %16 = arith.select %13, %15, %4 : vector<24x1xi1>, vector<24x1xi32>
    %c4_i32 = arith.constant 4 : i32
    %17 = vector.broadcast %c4_i32 : i32 to vector<24x1xi32>
    %18 = arith.cmpi slt, %16, %17 : vector<24x1xi32>
    %cst = arith.constant 0.000000e+00 : bf16
    %19 = vector.broadcast %cst : bf16 to vector<7x64xbf16>
    %cst_3 = arith.constant 0.000000e+00 : bf16
    %20 = vector.broadcast %cst_3 : bf16 to vector<9x64xbf16>
    %cst_4 = arith.constant 0.000000e+00 : f32
    %21 = vector.broadcast %cst_4 : f32 to vector<24x64xf32>
    %c0_i32_5 = arith.constant 0 : i32
    %c0_i32_6 = arith.constant 0 : i32
    %c0_i32_7 = arith.constant 0 : i32
    %22 = tpu.memref_slice %arg1[%c0_i32_5, %c0_i32_6, %c0_i32_7] : memref<1x40x64xbf16, #tpu.memory_space<vmem>> -> memref<1x40x64xbf16, #tpu.memory_space<vmem>>
    %23 = tpu.memref_squeeze %22 : memref<1x40x64xbf16, #tpu.memory_space<vmem>> -> memref<40x64xbf16, #tpu.memory_space<vmem>>
    %c0 = arith.constant 0 : index
    %c0_8 = arith.constant 0 : index
    %24 = vector.load %23[%c0, %c0_8] : memref<40x64xbf16, #tpu.memory_space<vmem>>, vector<24x64xbf16>
    %c0_9 = arith.constant 0 : index
    %c0_10 = arith.constant 0 : index
    %c0_11 = arith.constant 0 : index
    %25 = vector.load %arg2[%c0_9, %c0_10, %c0_11] : memref<9x64x64xbf16, #tpu.memory_space<vmem>>, vector<1x64x64xbf16>
    %26 = vector.shape_cast %25 : vector<1x64x64xbf16> to vector<64x64xbf16>
    %cst_12 = arith.constant dense<0.000000e+00> : vector<24x64xf32>
    %27 = tpu.matmul %24, %26, %cst_12 {dimension_numbers = #tpu.dot_dimension_numbers<[1], [0], [0], [1], [0, 0, 1, 1], [], []>} : vector<24x64xbf16>, vector<64x64xbf16>, vector<24x64xf32> -> vector<24x64xf32>
    %28 = arith.addf %21, %27 : vector<24x64xf32>
    %c0_i32_13 = arith.constant 0 : i32
    %c0_i32_14 = arith.constant 0 : i32
    %c0_i32_15 = arith.constant 0 : i32
    %29 = tpu.memref_slice %arg1[%c0_i32_13, %c0_i32_14, %c0_i32_15] : memref<1x40x64xbf16, #tpu.memory_space<vmem>> -> memref<1x40x64xbf16, #tpu.memory_space<vmem>>
    %30 = tpu.memref_squeeze %29 : memref<1x40x64xbf16, #tpu.memory_space<vmem>> -> memref<40x64xbf16, #tpu.memory_space<vmem>>
    %c1 = arith.constant 1 : index
    %c0_16 = arith.constant 0 : index
    %31 = vector.load %30[%c1, %c0_16] : memref<40x64xbf16, #tpu.memory_space<vmem>>, vector<24x64xbf16>
    %c1_17 = arith.constant 1 : index
    %c0_18 = arith.constant 0 : index
    %c0_19 = arith.constant 0 : index
    %32 = vector.load %arg2[%c1_17, %c0_18, %c0_19] : memref<9x64x64xbf16, #tpu.memory_space<vmem>>, vector<1x64x64xbf16>
    %33 = vector.shape_cast %32 : vector<1x64x64xbf16> to vector<64x64xbf16>
    %cst_20 = arith.constant dense<0.000000e+00> : vector<24x64xf32>
    %34 = tpu.matmul %31, %33, %cst_20 {dimension_numbers = #tpu.dot_dimension_numbers<[1], [0], [0], [1], [0, 0, 1, 1], [], []>} : vector<24x64xbf16>, vector<64x64xbf16>, vector<24x64xf32> -> vector<24x64xf32>
    %35 = arith.addf %28, %34 : vector<24x64xf32>
    %c0_i32_21 = arith.constant 0 : i32
    %c0_i32_22 = arith.constant 0 : i32
    %c0_i32_23 = arith.constant 0 : i32
    %36 = tpu.memref_slice %arg1[%c0_i32_21, %c0_i32_22, %c0_i32_23] : memref<1x40x64xbf16, #tpu.memory_space<vmem>> -> memref<1x40x64xbf16, #tpu.memory_space<vmem>>
    %37 = tpu.memref_squeeze %36 : memref<1x40x64xbf16, #tpu.memory_space<vmem>> -> memref<40x64xbf16, #tpu.memory_space<vmem>>
    %c2 = arith.constant 2 : index
    %c0_24 = arith.constant 0 : index
    %38 = vector.load %37[%c2, %c0_24] : memref<40x64xbf16, #tpu.memory_space<vmem>>, vector<24x64xbf16>
    %c2_25 = arith.constant 2 : index
    %c0_26 = arith.constant 0 : index
    %c0_27 = arith.constant 0 : index
    %39 = vector.load %arg2[%c2_25, %c0_26, %c0_27] : memref<9x64x64xbf16, #tpu.memory_space<vmem>>, vector<1x64x64xbf16>
    %40 = vector.shape_cast %39 : vector<1x64x64xbf16> to vector<64x64xbf16>
    %cst_28 = arith.constant dense<0.000000e+00> : vector<24x64xf32>
    %41 = tpu.matmul %38, %40, %cst_28 {dimension_numbers = #tpu.dot_dimension_numbers<[1], [0], [0], [1], [0, 0, 1, 1], [], []>} : vector<24x64xbf16>, vector<64x64xbf16>, vector<24x64xf32> -> vector<24x64xf32>
    %42 = arith.addf %35, %41 : vector<24x64xf32>
    %c0_i32_29 = arith.constant 0 : i32
    %c0_i32_30 = arith.constant 0 : i32
    %c0_i32_31 = arith.constant 0 : i32
    %43 = tpu.memref_slice %arg1[%c0_i32_29, %c0_i32_30, %c0_i32_31] : memref<1x40x64xbf16, #tpu.memory_space<vmem>> -> memref<1x40x64xbf16, #tpu.memory_space<vmem>>
    %44 = tpu.memref_squeeze %43 : memref<1x40x64xbf16, #tpu.memory_space<vmem>> -> memref<40x64xbf16, #tpu.memory_space<vmem>>
    %c6 = arith.constant 6 : index
    %c0_32 = arith.constant 0 : index
    %45 = vector.load %44[%c6, %c0_32] : memref<40x64xbf16, #tpu.memory_space<vmem>>, vector<24x64xbf16>
    %c3 = arith.constant 3 : index
    %c0_33 = arith.constant 0 : index
    %c0_34 = arith.constant 0 : index
    %46 = vector.load %arg2[%c3, %c0_33, %c0_34] : memref<9x64x64xbf16, #tpu.memory_space<vmem>>, vector<1x64x64xbf16>
    %47 = vector.shape_cast %46 : vector<1x64x64xbf16> to vector<64x64xbf16>
    %cst_35 = arith.constant dense<0.000000e+00> : vector<24x64xf32>
    %48 = tpu.matmul %45, %47, %cst_35 {dimension_numbers = #tpu.dot_dimension_numbers<[1], [0], [0], [1], [0, 0, 1, 1], [], []>} : vector<24x64xbf16>, vector<64x64xbf16>, vector<24x64xf32> -> vector<24x64xf32>
    %49 = arith.addf %42, %48 : vector<24x64xf32>
    %c0_i32_36 = arith.constant 0 : i32
    %c0_i32_37 = arith.constant 0 : i32
    %c0_i32_38 = arith.constant 0 : i32
    %50 = tpu.memref_slice %arg1[%c0_i32_36, %c0_i32_37, %c0_i32_38] : memref<1x40x64xbf16, #tpu.memory_space<vmem>> -> memref<1x40x64xbf16, #tpu.memory_space<vmem>>
    %51 = tpu.memref_squeeze %50 : memref<1x40x64xbf16, #tpu.memory_space<vmem>> -> memref<40x64xbf16, #tpu.memory_space<vmem>>
    %c7 = arith.constant 7 : index
    %c0_39 = arith.constant 0 : index
    %52 = vector.load %51[%c7, %c0_39] : memref<40x64xbf16, #tpu.memory_space<vmem>>, vector<24x64xbf16>
    %c4 = arith.constant 4 : index
    %c0_40 = arith.constant 0 : index
    %c0_41 = arith.constant 0 : index
    %53 = vector.load %arg2[%c4, %c0_40, %c0_41] : memref<9x64x64xbf16, #tpu.memory_space<vmem>>, vector<1x64x64xbf16>
    %54 = vector.shape_cast %53 : vector<1x64x64xbf16> to vector<64x64xbf16>
    %cst_42 = arith.constant dense<0.000000e+00> : vector<24x64xf32>
    %55 = tpu.matmul %52, %54, %cst_42 {dimension_numbers = #tpu.dot_dimension_numbers<[1], [0], [0], [1], [0, 0, 1, 1], [], []>} : vector<24x64xbf16>, vector<64x64xbf16>, vector<24x64xf32> -> vector<24x64xf32>
    %56 = arith.addf %49, %55 : vector<24x64xf32>
    %c0_i32_43 = arith.constant 0 : i32
    %c0_i32_44 = arith.constant 0 : i32
    %c0_i32_45 = arith.constant 0 : i32
    %57 = tpu.memref_slice %arg1[%c0_i32_43, %c0_i32_44, %c0_i32_45] : memref<1x40x64xbf16, #tpu.memory_space<vmem>> -> memref<1x40x64xbf16, #tpu.memory_space<vmem>>
    %58 = tpu.memref_squeeze %57 : memref<1x40x64xbf16, #tpu.memory_space<vmem>> -> memref<40x64xbf16, #tpu.memory_space<vmem>>
    %c8 = arith.constant 8 : index
    %c0_46 = arith.constant 0 : index
    %59 = vector.load %58[%c8, %c0_46] : memref<40x64xbf16, #tpu.memory_space<vmem>>, vector<24x64xbf16>
    %c5 = arith.constant 5 : index
    %c0_47 = arith.constant 0 : index
    %c0_48 = arith.constant 0 : index
    %60 = vector.load %arg2[%c5, %c0_47, %c0_48] : memref<9x64x64xbf16, #tpu.memory_space<vmem>>, vector<1x64x64xbf16>
    %61 = vector.shape_cast %60 : vector<1x64x64xbf16> to vector<64x64xbf16>
    %cst_49 = arith.constant dense<0.000000e+00> : vector<24x64xf32>
    %62 = tpu.matmul %59, %61, %cst_49 {dimension_numbers = #tpu.dot_dimension_numbers<[1], [0], [0], [1], [0, 0, 1, 1], [], []>} : vector<24x64xbf16>, vector<64x64xbf16>, vector<24x64xf32> -> vector<24x64xf32>
    %63 = arith.addf %56, %62 : vector<24x64xf32>
    %c0_i32_50 = arith.constant 0 : i32
    %c0_i32_51 = arith.constant 0 : i32
    %c0_i32_52 = arith.constant 0 : i32
    %64 = tpu.memref_slice %arg1[%c0_i32_50, %c0_i32_51, %c0_i32_52] : memref<1x40x64xbf16, #tpu.memory_space<vmem>> -> memref<1x40x64xbf16, #tpu.memory_space<vmem>>
    %65 = tpu.memref_squeeze %64 : memref<1x40x64xbf16, #tpu.memory_space<vmem>> -> memref<40x64xbf16, #tpu.memory_space<vmem>>
    %c12 = arith.constant 12 : index
    %c0_53 = arith.constant 0 : index
    %66 = vector.load %65[%c12, %c0_53] : memref<40x64xbf16, #tpu.memory_space<vmem>>, vector<24x64xbf16>
    %c6_54 = arith.constant 6 : index
    %c0_55 = arith.constant 0 : index
    %c0_56 = arith.constant 0 : index
    %67 = vector.load %arg2[%c6_54, %c0_55, %c0_56] : memref<9x64x64xbf16, #tpu.memory_space<vmem>>, vector<1x64x64xbf16>
    %68 = vector.shape_cast %67 : vector<1x64x64xbf16> to vector<64x64xbf16>
    %cst_57 = arith.constant dense<0.000000e+00> : vector<24x64xf32>
    %69 = tpu.matmul %66, %68, %cst_57 {dimension_numbers = #tpu.dot_dimension_numbers<[1], [0], [0], [1], [0, 0, 1, 1], [], []>} : vector<24x64xbf16>, vector<64x64xbf16>, vector<24x64xf32> -> vector<24x64xf32>
    %70 = arith.addf %63, %69 : vector<24x64xf32>
    %c0_i32_58 = arith.constant 0 : i32
    %c0_i32_59 = arith.constant 0 : i32
    %c0_i32_60 = arith.constant 0 : i32
    %71 = tpu.memref_slice %arg1[%c0_i32_58, %c0_i32_59, %c0_i32_60] : memref<1x40x64xbf16, #tpu.memory_space<vmem>> -> memref<1x40x64xbf16, #tpu.memory_space<vmem>>
    %72 = tpu.memref_squeeze %71 : memref<1x40x64xbf16, #tpu.memory_space<vmem>> -> memref<40x64xbf16, #tpu.memory_space<vmem>>
    %c13 = arith.constant 13 : index
    %c0_61 = arith.constant 0 : index
    %73 = vector.load %72[%c13, %c0_61] : memref<40x64xbf16, #tpu.memory_space<vmem>>, vector<24x64xbf16>
    %c7_62 = arith.constant 7 : index
    %c0_63 = arith.constant 0 : index
    %c0_64 = arith.constant 0 : index
    %74 = vector.load %arg2[%c7_62, %c0_63, %c0_64] : memref<9x64x64xbf16, #tpu.memory_space<vmem>>, vector<1x64x64xbf16>
    %75 = vector.shape_cast %74 : vector<1x64x64xbf16> to vector<64x64xbf16>
    %cst_65 = arith.constant dense<0.000000e+00> : vector<24x64xf32>
    %76 = tpu.matmul %73, %75, %cst_65 {dimension_numbers = #tpu.dot_dimension_numbers<[1], [0], [0], [1], [0, 0, 1, 1], [], []>} : vector<24x64xbf16>, vector<64x64xbf16>, vector<24x64xf32> -> vector<24x64xf32>
    %77 = arith.addf %70, %76 : vector<24x64xf32>
    %c0_i32_66 = arith.constant 0 : i32
    %c0_i32_67 = arith.constant 0 : i32
    %c0_i32_68 = arith.constant 0 : i32
    %78 = tpu.memref_slice %arg1[%c0_i32_66, %c0_i32_67, %c0_i32_68] : memref<1x40x64xbf16, #tpu.memory_space<vmem>> -> memref<1x40x64xbf16, #tpu.memory_space<vmem>>
    %79 = tpu.memref_squeeze %78 : memref<1x40x64xbf16, #tpu.memory_space<vmem>> -> memref<40x64xbf16, #tpu.memory_space<vmem>>
    %c14 = arith.constant 14 : index
    %c0_69 = arith.constant 0 : index
    %80 = vector.load %79[%c14, %c0_69] : memref<40x64xbf16, #tpu.memory_space<vmem>>, vector<24x64xbf16>
    %c8_70 = arith.constant 8 : index
    %c0_71 = arith.constant 0 : index
    %c0_72 = arith.constant 0 : index
    %81 = vector.load %arg2[%c8_70, %c0_71, %c0_72] : memref<9x64x64xbf16, #tpu.memory_space<vmem>>, vector<1x64x64xbf16>
    %82 = vector.shape_cast %81 : vector<1x64x64xbf16> to vector<64x64xbf16>
    %cst_73 = arith.constant dense<0.000000e+00> : vector<24x64xf32>
    %83 = tpu.matmul %80, %82, %cst_73 {dimension_numbers = #tpu.dot_dimension_numbers<[1], [0], [0], [1], [0, 0, 1, 1], [], []>} : vector<24x64xbf16>, vector<64x64xbf16>, vector<24x64xf32> -> vector<24x64xf32>
    %84 = arith.addf %77, %83 : vector<24x64xf32>
    %c0_74 = arith.constant 0 : index
    %c0_75 = arith.constant 0 : index
    %85 = vector.load %arg3[%c0_74, %c0_75] : memref<1x64xf32, #tpu.memory_space<vmem>>, vector<1x64xf32>
    %86 = vector.broadcast %85 : vector<1x64xf32> to vector<24x64xf32>
    %87 = arith.addf %84, %86 : vector<24x64xf32>
    %cst_76 = arith.constant 0.000000e+00 : f32
    %88 = vector.broadcast %cst_76 : f32 to vector<24x64xf32>
    %89 = arith.maximumf %87, %88 : vector<24x64xf32>
    %cst_77 = arith.constant 0.000000e+00 : f32
    %90 = vector.shape_cast %18 : vector<24x1xi1> to vector<24x1xi1>
    %91 = vector.broadcast %90 : vector<24x1xi1> to vector<24x64xi1>
    %92 = vector.broadcast %cst_77 : f32 to vector<24x64xf32>
    %93 = arith.select %91, %89, %92 : vector<24x64xi1>, vector<24x64xf32>
    %c0_78 = arith.constant 0 : index
    %c0_79 = arith.constant 0 : index
    %94 = vector.load %arg7[%c0_78, %c0_79] : memref<40x64xbf16, #tpu.memory_space<vmem>>, vector<7x64xbf16>
    tpu.vector_store %arg7[%c0_78, %c0_79], %19 {strides = array<i32>} : memref<40x64xbf16, #tpu.memory_space<vmem>>, vector<7x64xbf16>,
    %95 = arith.truncf %93 : vector<24x64xf32> to vector<24x64xbf16>
    %c7_80 = arith.constant 7 : index
    %c0_81 = arith.constant 0 : index
    %96 = vector.load %arg7[%c7_80, %c0_81] : memref<40x64xbf16, #tpu.memory_space<vmem>>, vector<24x64xbf16>
    tpu.vector_store %arg7[%c7_80, %c0_81], %95 {strides = array<i32>} : memref<40x64xbf16, #tpu.memory_space<vmem>>, vector<24x64xbf16>,
    %c31 = arith.constant 31 : index
    %c0_82 = arith.constant 0 : index
    %97 = vector.load %arg7[%c31, %c0_82] : memref<40x64xbf16, #tpu.memory_space<vmem>>, vector<9x64xbf16>
    tpu.vector_store %arg7[%c31, %c0_82], %20 {strides = array<i32>} : memref<40x64xbf16, #tpu.memory_space<vmem>>, vector<9x64xbf16>,
    %c0_83 = arith.constant 0 : index
    %c7_84 = arith.constant 7 : index
    %c0_85 = arith.constant 0 : index
    %98 = vector.load %arg1[%c0_83, %c7_84, %c0_85] : memref<1x40x64xbf16, #tpu.memory_space<vmem>>, vector<1x24x64xbf16>
    %99 = vector.shape_cast %98 : vector<1x24x64xbf16> to vector<24x64xbf16>
    %100 = arith.extf %99 : vector<24x64xbf16> to vector<24x64xf32>
    %cst_86 = arith.constant 0.000000e+00 : f32
    %101 = vector.broadcast %cst_86 : f32 to vector<24x64xf32>
    %c0_87 = arith.constant 0 : index
    %c0_88 = arith.constant 0 : index
    %102 = vector.load %arg7[%c0_87, %c0_88] : memref<40x64xbf16, #tpu.memory_space<vmem>>, vector<24x64xbf16>
    %c0_89 = arith.constant 0 : index
    %c0_90 = arith.constant 0 : index
    %c0_91 = arith.constant 0 : index
    %103 = vector.load %arg4[%c0_89, %c0_90, %c0_91] : memref<9x64x64xbf16, #tpu.memory_space<vmem>>, vector<1x64x64xbf16>
    %104 = vector.shape_cast %103 : vector<1x64x64xbf16> to vector<64x64xbf16>
    %cst_92 = arith.constant dense<0.000000e+00> : vector<24x64xf32>
    %105 = tpu.matmul %102, %104, %cst_92 {dimension_numbers = #tpu.dot_dimension_numbers<[1], [0], [0], [1], [0, 0, 1, 1], [], []>} : vector<24x64xbf16>, vector<64x64xbf16>, vector<24x64xf32> -> vector<24x64xf32>
    %106 = arith.addf %101, %105 : vector<24x64xf32>
    %c1_93 = arith.constant 1 : index
    %c0_94 = arith.constant 0 : index
    %107 = vector.load %arg7[%c1_93, %c0_94] : memref<40x64xbf16, #tpu.memory_space<vmem>>, vector<24x64xbf16>
    %c1_95 = arith.constant 1 : index
    %c0_96 = arith.constant 0 : index
    %c0_97 = arith.constant 0 : index
    %108 = vector.load %arg4[%c1_95, %c0_96, %c0_97] : memref<9x64x64xbf16, #tpu.memory_space<vmem>>, vector<1x64x64xbf16>
    %109 = vector.shape_cast %108 : vector<1x64x64xbf16> to vector<64x64xbf16>
    %cst_98 = arith.constant dense<0.000000e+00> : vector<24x64xf32>
    %110 = tpu.matmul %107, %109, %cst_98 {dimension_numbers = #tpu.dot_dimension_numbers<[1], [0], [0], [1], [0, 0, 1, 1], [], []>} : vector<24x64xbf16>, vector<64x64xbf16>, vector<24x64xf32> -> vector<24x64xf32>
    %111 = arith.addf %106, %110 : vector<24x64xf32>
    %c2_99 = arith.constant 2 : index
    %c0_100 = arith.constant 0 : index
    %112 = vector.load %arg7[%c2_99, %c0_100] : memref<40x64xbf16, #tpu.memory_space<vmem>>, vector<24x64xbf16>
    %c2_101 = arith.constant 2 : index
    %c0_102 = arith.constant 0 : index
    %c0_103 = arith.constant 0 : index
    %113 = vector.load %arg4[%c2_101, %c0_102, %c0_103] : memref<9x64x64xbf16, #tpu.memory_space<vmem>>, vector<1x64x64xbf16>
    %114 = vector.shape_cast %113 : vector<1x64x64xbf16> to vector<64x64xbf16>
    %cst_104 = arith.constant dense<0.000000e+00> : vector<24x64xf32>
    %115 = tpu.matmul %112, %114, %cst_104 {dimension_numbers = #tpu.dot_dimension_numbers<[1], [0], [0], [1], [0, 0, 1, 1], [], []>} : vector<24x64xbf16>, vector<64x64xbf16>, vector<24x64xf32> -> vector<24x64xf32>
    %116 = arith.addf %111, %115 : vector<24x64xf32>
    %c6_105 = arith.constant 6 : index
    %c0_106 = arith.constant 0 : index
    %117 = vector.load %arg7[%c6_105, %c0_106] : memref<40x64xbf16, #tpu.memory_space<vmem>>, vector<24x64xbf16>
    %c3_107 = arith.constant 3 : index
    %c0_108 = arith.constant 0 : index
    %c0_109 = arith.constant 0 : index
    %118 = vector.load %arg4[%c3_107, %c0_108, %c0_109] : memref<9x64x64xbf16, #tpu.memory_space<vmem>>, vector<1x64x64xbf16>
    %119 = vector.shape_cast %118 : vector<1x64x64xbf16> to vector<64x64xbf16>
    %cst_110 = arith.constant dense<0.000000e+00> : vector<24x64xf32>
    %120 = tpu.matmul %117, %119, %cst_110 {dimension_numbers = #tpu.dot_dimension_numbers<[1], [0], [0], [1], [0, 0, 1, 1], [], []>} : vector<24x64xbf16>, vector<64x64xbf16>, vector<24x64xf32> -> vector<24x64xf32>
    %121 = arith.addf %116, %120 : vector<24x64xf32>
    %c7_111 = arith.constant 7 : index
    %c0_112 = arith.constant 0 : index
    %122 = vector.load %arg7[%c7_111, %c0_112] : memref<40x64xbf16, #tpu.memory_space<vmem>>, vector<24x64xbf16>
    %c4_113 = arith.constant 4 : index
    %c0_114 = arith.constant 0 : index
    %c0_115 = arith.constant 0 : index
    %123 = vector.load %arg4[%c4_113, %c0_114, %c0_115] : memref<9x64x64xbf16, #tpu.memory_space<vmem>>, vector<1x64x64xbf16>
    %124 = vector.shape_cast %123 : vector<1x64x64xbf16> to vector<64x64xbf16>
    %cst_116 = arith.constant dense<0.000000e+00> : vector<24x64xf32>
    %125 = tpu.matmul %122, %124, %cst_116 {dimension_numbers = #tpu.dot_dimension_numbers<[1], [0], [0], [1], [0, 0, 1, 1], [], []>} : vector<24x64xbf16>, vector<64x64xbf16>, vector<24x64xf32> -> vector<24x64xf32>
    %126 = arith.addf %121, %125 : vector<24x64xf32>
    %c8_117 = arith.constant 8 : index
    %c0_118 = arith.constant 0 : index
    %127 = vector.load %arg7[%c8_117, %c0_118] : memref<40x64xbf16, #tpu.memory_space<vmem>>, vector<24x64xbf16>
    %c5_119 = arith.constant 5 : index
    %c0_120 = arith.constant 0 : index
    %c0_121 = arith.constant 0 : index
    %128 = vector.load %arg4[%c5_119, %c0_120, %c0_121] : memref<9x64x64xbf16, #tpu.memory_space<vmem>>, vector<1x64x64xbf16>
    %129 = vector.shape_cast %128 : vector<1x64x64xbf16> to vector<64x64xbf16>
    %cst_122 = arith.constant dense<0.000000e+00> : vector<24x64xf32>
    %130 = tpu.matmul %127, %129, %cst_122 {dimension_numbers = #tpu.dot_dimension_numbers<[1], [0], [0], [1], [0, 0, 1, 1], [], []>} : vector<24x64xbf16>, vector<64x64xbf16>, vector<24x64xf32> -> vector<24x64xf32>
    %131 = arith.addf %126, %130 : vector<24x64xf32>
    %c12_123 = arith.constant 12 : index
    %c0_124 = arith.constant 0 : index
    %132 = vector.load %arg7[%c12_123, %c0_124] : memref<40x64xbf16, #tpu.memory_space<vmem>>, vector<24x64xbf16>
    %c6_125 = arith.constant 6 : index
    %c0_126 = arith.constant 0 : index
    %c0_127 = arith.constant 0 : index
    %133 = vector.load %arg4[%c6_125, %c0_126, %c0_127] : memref<9x64x64xbf16, #tpu.memory_space<vmem>>, vector<1x64x64xbf16>
    %134 = vector.shape_cast %133 : vector<1x64x64xbf16> to vector<64x64xbf16>
    %cst_128 = arith.constant dense<0.000000e+00> : vector<24x64xf32>
    %135 = tpu.matmul %132, %134, %cst_128 {dimension_numbers = #tpu.dot_dimension_numbers<[1], [0], [0], [1], [0, 0, 1, 1], [], []>} : vector<24x64xbf16>, vector<64x64xbf16>, vector<24x64xf32> -> vector<24x64xf32>
    %136 = arith.addf %131, %135 : vector<24x64xf32>
    %c13_129 = arith.constant 13 : index
    %c0_130 = arith.constant 0 : index
    %137 = vector.load %arg7[%c13_129, %c0_130] : memref<40x64xbf16, #tpu.memory_space<vmem>>, vector<24x64xbf16>
    %c7_131 = arith.constant 7 : index
    %c0_132 = arith.constant 0 : index
    %c0_133 = arith.constant 0 : index
    %138 = vector.load %arg4[%c7_131, %c0_132, %c0_133] : memref<9x64x64xbf16, #tpu.memory_space<vmem>>, vector<1x64x64xbf16>
    %139 = vector.shape_cast %138 : vector<1x64x64xbf16> to vector<64x64xbf16>
    %cst_134 = arith.constant dense<0.000000e+00> : vector<24x64xf32>
    %140 = tpu.matmul %137, %139, %cst_134 {dimension_numbers = #tpu.dot_dimension_numbers<[1], [0], [0], [1], [0, 0, 1, 1], [], []>} : vector<24x64xbf16>, vector<64x64xbf16>, vector<24x64xf32> -> vector<24x64xf32>
    %141 = arith.addf %136, %140 : vector<24x64xf32>
    %c14_135 = arith.constant 14 : index
    %c0_136 = arith.constant 0 : index
    %142 = vector.load %arg7[%c14_135, %c0_136] : memref<40x64xbf16, #tpu.memory_space<vmem>>, vector<24x64xbf16>
    %c8_137 = arith.constant 8 : index
    %c0_138 = arith.constant 0 : index
    %c0_139 = arith.constant 0 : index
    %143 = vector.load %arg4[%c8_137, %c0_138, %c0_139] : memref<9x64x64xbf16, #tpu.memory_space<vmem>>, vector<1x64x64xbf16>
    %144 = vector.shape_cast %143 : vector<1x64x64xbf16> to vector<64x64xbf16>
    %cst_140 = arith.constant dense<0.000000e+00> : vector<24x64xf32>
    %145 = tpu.matmul %142, %144, %cst_140 {dimension_numbers = #tpu.dot_dimension_numbers<[1], [0], [0], [1], [0, 0, 1, 1], [], []>} : vector<24x64xbf16>, vector<64x64xbf16>, vector<24x64xf32> -> vector<24x64xf32>
    %146 = arith.addf %141, %145 : vector<24x64xf32>
    %c0_141 = arith.constant 0 : index
    %c0_142 = arith.constant 0 : index
    %147 = vector.load %arg5[%c0_141, %c0_142] : memref<1x64xf32, #tpu.memory_space<vmem>>, vector<1x64xf32>
    %148 = vector.broadcast %147 : vector<1x64xf32> to vector<24x64xf32>
    %149 = arith.addf %146, %148 : vector<24x64xf32>
    %150 = arith.addf %149, %100 : vector<24x64xf32>
    %cst_143 = arith.constant 0.000000e+00 : f32
    %151 = vector.broadcast %cst_143 : f32 to vector<24x64xf32>
    %152 = arith.maximumf %150, %151 : vector<24x64xf32>
    %cst_144 = arith.constant 0.000000e+00 : f32
    %153 = vector.shape_cast %18 : vector<24x1xi1> to vector<24x1xi1>
    %154 = vector.broadcast %153 : vector<24x1xi1> to vector<24x64xi1>
    %155 = vector.broadcast %cst_144 : f32 to vector<24x64xf32>
    %156 = arith.select %154, %152, %155 : vector<24x64xi1>, vector<24x64xf32>
    %c0_145 = arith.constant 0 : index
    %c0_146 = arith.constant 0 : index
    %c0_147 = arith.constant 0 : index
    %157 = vector.load %arg6[%c0_145, %c0_146, %c0_147] : memref<1x40x64xbf16, #tpu.memory_space<vmem>>, vector<1x7x64xbf16>
    %158 = vector.shape_cast %157 : vector<1x7x64xbf16> to vector<7x64xbf16>
    %159 = vector.shape_cast %19 : vector<7x64xbf16> to vector<1x7x64xbf16>
    tpu.vector_store %arg6[%c0_145, %c0_146, %c0_147], %159 {strides = array<i32>} : memref<1x40x64xbf16, #tpu.memory_space<vmem>>, vector<1x7x64xbf16>,
    %160 = arith.truncf %156 : vector<24x64xf32> to vector<24x64xbf16>
    %c0_148 = arith.constant 0 : index
    %c7_149 = arith.constant 7 : index
    %c0_150 = arith.constant 0 : index
    %161 = vector.load %arg6[%c0_148, %c7_149, %c0_150] : memref<1x40x64xbf16, #tpu.memory_space<vmem>>, vector<1x24x64xbf16>
    %162 = vector.shape_cast %161 : vector<1x24x64xbf16> to vector<24x64xbf16>
    %163 = vector.shape_cast %160 : vector<24x64xbf16> to vector<1x24x64xbf16>
    tpu.vector_store %arg6[%c0_148, %c7_149, %c0_150], %163 {strides = array<i32>} : memref<1x40x64xbf16, #tpu.memory_space<vmem>>, vector<1x24x64xbf16>,
    %c0_151 = arith.constant 0 : index
    %c31_152 = arith.constant 31 : index
    %c0_153 = arith.constant 0 : index
    %164 = vector.load %arg6[%c0_151, %c31_152, %c0_153] : memref<1x40x64xbf16, #tpu.memory_space<vmem>>, vector<1x9x64xbf16>
    %165 = vector.shape_cast %164 : vector<1x9x64xbf16> to vector<9x64xbf16>
    %166 = vector.shape_cast %20 : vector<9x64xbf16> to vector<1x9x64xbf16>
    tpu.vector_store %arg6[%c0_151, %c31_152, %c0_153], %166 {strides = array<i32>} : memref<1x40x64xbf16, #tpu.memory_space<vmem>>, vector<1x9x64xbf16>,
    return
  }
  func.func @transform_0(%arg0: i32) -> (i32, i32, i32) {
    %c0_i32 = arith.constant 0 : i32
    %c0_i32_0 = arith.constant 0 : i32
    %c0_i32_1 = arith.constant 0 : i32
    return %arg0, %c0_i32, %c0_i32_0 : i32, i32, i32
  }
  func.func @transform_1(%arg0: i32) -> (i32, i32, i32) {
    %c0_i32 = arith.constant 0 : i32
    %c0_i32_0 = arith.constant 0 : i32
    %c0_i32_1 = arith.constant 0 : i32
    %c0_i32_2 = arith.constant 0 : i32
    return %c0_i32, %c0_i32_0, %c0_i32_1 : i32, i32, i32
  }
  func.func @transform_2(%arg0: i32) -> (i32, i32) {
    %c0_i32 = arith.constant 0 : i32
    %c0_i32_0 = arith.constant 0 : i32
    %c0_i32_1 = arith.constant 0 : i32
    return %c0_i32, %c0_i32_0 : i32, i32
  }
  func.func @transform_3(%arg0: i32) -> (i32, i32, i32) {
    %c0_i32 = arith.constant 0 : i32
    %c0_i32_0 = arith.constant 0 : i32
    %c0_i32_1 = arith.constant 0 : i32
    %c0_i32_2 = arith.constant 0 : i32
    return %c0_i32, %c0_i32_0, %c0_i32_1 : i32, i32, i32
  }
  func.func @transform_4(%arg0: i32) -> (i32, i32) {
    %c0_i32 = arith.constant 0 : i32
    %c0_i32_0 = arith.constant 0 : i32
    %c0_i32_1 = arith.constant 0 : i32
    return %c0_i32, %c0_i32_0 : i32, i32
  }
  func.func @transform_5(%arg0: i32) -> (i32, i32, i32) {
    %c0_i32 = arith.constant 0 : i32
    %c0_i32_0 = arith.constant 0 : i32
    %c0_i32_1 = arith.constant 0 : i32
    return %arg0, %c0_i32, %c0_i32_0 : i32, i32, i32
  }
}

</mosaic_0001>

<llo_original>
// kernel: _lambda_.5
$region0: #{_lambda_.5}
  #allocation0 [shape = 'u32[]', space=smem, size = 0x4, offset = 0x4, fixed_abs, tag = 'smem constant byte address 0x4 - core index']
  #allocation1 [shape = 'u32[144,128]{1,0:T(1,128)}', space=vmem, size = 0x12000, scoped, tag = 'internal scratch']
  %s0 = inlined_call_operand.vmem [shape: bf16[128,152], index: 0, kind: input, shape index: {}]
  %s1 = inlined_call_operand.vmem [shape: bf16[152,64], index: 1, kind: input, shape index: {}]
  %s2 = inlined_call_operand.vmem [shape: f32[1,64], index: 2, kind: input, shape index: {}]
  %s3 = inlined_call_operand.vmem [shape: bf16[128,64], index: 3, kind: output, shape index: {}]
  %s4 = sld [smem:[#allocation0]]
  $region45: #{_lambda_.5} parent=0
    _
  %s6 = ssub.s32 1, %s4
  %s7 = scalar_select 0, %s6, %s4
  loop: start=0, step=1, limit=4
  $region2: #{_lambda_.5} parent=0 // loop_pre_header
    _
  $region3: #{_lambda_.5} parent=0 // loop_header
    %s9 = sphi 0, %s13
    %p10 = scmp.ge.s32.totalorder %s9, 4
    %s19 = sphi 0, %s21
    %s22 = sphi 0, %s19
    %s23 = sphi 0, %s22
    %s39 = sphi 0, %s23
    %s43 = sphi 0, %s43
    %s45 = sphi 0, %s43
    %s46 = sphi 0, %s45
    %s60 = sphi 0, %s46
    %s64 = sphi 0, %s64
    %s66 = sphi 0, %s64
    %s67 = sphi 0, %s66
    %s81 = sphi 0, %s67
    %s87 = sphi 0, %s89
    %s90 = sphi 0, %s87
    %s91 = sphi 0, %s90
    %s107 = sphi 0, %s91
  $region4: #{_lambda_.5} parent=0 // loop_header_branch
    %12 = sbr.rel (%p10) target = $region8
  $region5: #{_lambda_.5} parent=0 // loop_body
    %s14 = ssub.s32 %s9, 1
    %s15 = ssub.s32 %s9, 2
    %s16 = sadd.s32 %s9, 1
    %s17 = ssub.s32 %s9, %s16
    %p18 = scmp.eq.s32.totalorder %s17, 0
    %s20 = sadd.s32 %s19, 1
    %s21 = scalar_select %p18, %s19, %s20
    %p24 = pneg %p18
    %p25 = scmp.eq.s32.totalorder %s9, 1
    %p26 = por %p24, %p25
    %p27 = scmp.ne.s32.totalorder %s19, %s22
    %p28 = scmp.eq.s32.totalorder %s9, 0
    %p29 = por %p27, %p28
    %p30 = scmp.ne.s32.totalorder %s19, %s22
    %p31 = scmp.eq.s32.totalorder %s14, 1
    %p32 = por %p30, %p31
    %p33 = scmp.ne.s32.totalorder %s22, %s23
    %p34 = scmp.eq.s32.totalorder %s14, 0
    %p35 = por %p33, %p34
    %p36 = scmp.ne.s32.totalorder %s22, %s23
    %p37 = scmp.eq.s32.totalorder %s15, 1
    %p38 = por %p36, %p37
    %p40 = scmp.ne.s32.totalorder %s23, %s39
    %p41 = scmp.eq.s32.totalorder %s15, 0
    %p42 = por %p40, %p41
    %s44 = sadd.s32 %s43, 1
    %p47 = scmp.eq.s32.totalorder %s9, 1
    %p48 = scmp.ne.s32.totalorder %s43, %s45
    %p49 = scmp.eq.s32.totalorder %s9, 0
    %p50 = por %p48, %p49
    %p51 = scmp.ne.s32.totalorder %s43, %s45
    %p52 = scmp.eq.s32.totalorder %s14, 1
    %p53 = por %p51, %p52
    %p54 = scmp.ne.s32.totalorder %s45, %s46
    %p55 = scmp.eq.s32.totalorder %s14, 0
    %p56 = por %p54, %p55
    %p57 = scmp.ne.s32.totalorder %s45, %s46
    %p58 = scmp.eq.s32.totalorder %s15, 1
    %p59 = por %p57, %p58
    %p61 = scmp.ne.s32.totalorder %s46, %s60
    %p62 = scmp.eq.s32.totalorder %s15, 0
    %p63 = por %p61, %p62
    %s65 = sadd.s32 %s64, 1
    %p68 = scmp.eq.s32.totalorder %s9, 1
    %p69 = scmp.ne.s32.totalorder %s64, %s66
    %p70 = scmp.eq.s32.totalorder %s9, 0
    %p71 = por %p69, %p70
    %p72 = scmp.ne.s32.totalorder %s64, %s66
    %p73 = scmp.eq.s32.totalorder %s14, 1
    %p74 = por %p72, %p73
    %p75 = scmp.ne.s32.totalorder %s66, %s67
    %p76 = scmp.eq.s32.totalorder %s14, 0
    %p77 = por %p75, %p76
    %p78 = scmp.ne.s32.totalorder %s66, %s67
    %p79 = scmp.eq.s32.totalorder %s15, 1
    %p80 = por %p78, %p79
    %p82 = scmp.ne.s32.totalorder %s67, %s81
    %p83 = scmp.eq.s32.totalorder %s15, 0
    %p84 = por %p82, %p83
    %s85 = ssub.s32 %s9, %s16
    %p86 = scmp.eq.s32.totalorder %s85, 0
    %s88 = sadd.s32 %s87, 1
    %s89 = scalar_select %p86, %s87, %s88
    %p92 = pneg %p86
    %p93 = scmp.eq.s32.totalorder %s9, 1
    %p94 = por %p92, %p93
    %p95 = scmp.ne.s32.totalorder %s87, %s90
    %p96 = scmp.eq.s32.totalorder %s9, 0
    %p97 = por %p95, %p96
    %p98 = scmp.ne.s32.totalorder %s87, %s90
    %p99 = scmp.eq.s32.totalorder %s14, 1
    %p100 = por %p98, %p99
    %p101 = scmp.ne.s32.totalorder %s90, %s91
    %p102 = scmp.eq.s32.totalorder %s14, 0
    %p103 = por %p101, %p102
    %p104 = scmp.ne.s32.totalorder %s90, %s91
    %p105 = scmp.eq.s32.totalorder %s15, 1
    %p106 = por %p104, %p105
    %p108 = scmp.ne.s32.totalorder %s91, %s107
    %p109 = scmp.eq.s32.totalorder %s15, 0
    %p110 = por %p108, %p109
    %p111 = scmp.le.s32.totalorder 1, %s9
    %p112 = scmp.lt.s32.totalorder %s9, 3
    %p113 = pnand %p111, %p112
    %p114 = pneg %p113
    // Predicated region
    $region9: #{_lambda_.5} parent=5 // pred_check
      _
    $region10: #{_lambda_.5} parent=5 // pred_check_branch
      %116 = sbr.rel (%p113) target = $region12
    $region11: #{_lambda_.5} parent=5 // pred_region
      %s117 = ssub.s32 %s9, 1
      // Predicated region
      $region13: #{_lambda_.5} parent=11 // pred_check
        %p118 = pneg %p56
      $region14: #{_lambda_.5} parent=11 // pred_check_branch
        %120 = sbr.rel (%p118) target = $region16
      $region15: #{_lambda_.5} parent=11 // pred_region
        _
      $region16: #{_lambda_.5} parent=11 // pred_fallthru
        _
      // Predicated region
      $region17: #{_lambda_.5} parent=11 // pred_check
        %p121 = pneg %p77
      $region18: #{_lambda_.5} parent=11 // pred_check_branch
        %123 = sbr.rel (%p121) target = $region20
      $region19: #{_lambda_.5} parent=11 // pred_region
        _
      $region20: #{_lambda_.5} parent=11 // pred_fallthru
        _
    $region12: #{_lambda_.5} parent=5 // pred_fallthru
      _
    %p124 = scmp.lt.s32.totalorder %s9, 2
    // Predicated region
    $region21: #{_lambda_.5} parent=5 // pred_check
      %p125 = pneg %p124
    $region22: #{_lambda_.5} parent=5 // pred_check_branch
      %127 = sbr.rel (%p125) target = $region24
    $region23: #{_lambda_.5} parent=5 // pred_region
      // Predicated region
      $region25: #{_lambda_.5} parent=23 // pred_check
        %p128 = pneg %p29
      $region26: #{_lambda_.5} parent=23 // pred_check_branch
        %130 = sbr.rel (%p128) target = $region28
      $region27: #{_lambda_.5} parent=23 // pred_region
        %s131 = smul.u32 8, %s9
        %p132 = scmp.lt.s32.totalorder %s131, 15
        %s133 = scalar_select %p132, %s131, 15
        %s134 = smul.addr %s133, 2
        %s135 = smul.addr %s134, 4
        %s136 = scalar_lea.vmem %s0, %s135
        %s137 = smul.u32 8, %s9
      $region28: #{_lambda_.5} parent=23 // pred_fallthru
        _
    $region24: #{_lambda_.5} parent=5 // pred_fallthru
      _
    %p138 = scmp.le.s32.totalorder 1, %s9
    %p139 = scmp.lt.s32.totalorder %s9, 3
    %p140 = pnand %p138, %p139
    %p141 = pneg %p140
    // Predicated region
    $region29: #{_lambda_.5} parent=5 // pred_check
      _
    $region30: #{_lambda_.5} parent=5 // pred_check_branch
      %143 = sbr.rel (%p140) target = $region32
    $region31: #{_lambda_.5} parent=5 // pred_region
      %s144 = ssub.s32 %s9, 1
      %s145 = smul.u32 8, %s14
      %p146 = scmp.lt.s32.totalorder %s145, 15
      %s147 = scalar_select %p146, %s145, 15
      %s148 = smul.addr %s147, 2
      %s149 = smul.addr %s148, 4
      %s150 = scalar_lea.vmem %s0, %s149
      %p151 = pneg %p35
      %p152 = pneg %p32
      %p153 = pneg %p56
      %p154 = pneg %p53
      %p155 = pneg %p77
      %p156 = pneg %p74
      %p157 = pneg %p103
      %p158 = pneg %p100
      %s159 = smul.u32 8, %s14
      %p160 = scmp.lt.s32.totalorder %s159, 15
      %s161 = scalar_select %p160, %s159, 15
      %s162 = smul.addr %s161, 4
      %s163 = scalar_lea.vmem %s3, %s162
      %s164 = smul.u32 8, %s14
      %p165 = scmp.lt.s32.totalorder %s164, 15
      %s166 = scalar_select %p165, %s164, 15
      %s167 = smul.addr %s166, 2
      %s168 = smul.addr %s167, 4
      %s169 = scalar_lea.vmem %s0, %s168
      %s170 = smul.u32 8, %s14
      %s171 = smul.u32 8, %s14
      %p172 = scmp.lt.s32.totalorder %s171, 15
      %s173 = scalar_select %p172, %s171, 15
      %s174 = smul.addr %s173, 4
      %s175 = scalar_lea.vmem %s3, %s174
      %s176 = smul.u32 8, %s14
      %v178 = vld [vmem:[%s169] sm:$0xff]
      %v179 = vld [vmem:[%s169 + $0x8] sm:$0xff]
      %v180 = vld [vmem:[%s169 + $0x10] sm:$0xff]
      %v181 = vld [vmem:[%s169 + $0x18] sm:$0xff]
      %v182 = vld [vmem:[%s169 + $0x20] sm:$0xff]
      %v183 = vld [vmem:[%s169 + $0x28] sm:$0xff]
      %v184 = vld [vmem:[%s169 + $0x30] sm:$0xff]
      %v185 = vld [vmem:[%s169 + $0x38] sm:$0xff]
      %v186 = vld [vmem:[%s1] sm:$0xf]
      %v187 = vld [vmem:[%s1 + $0x4] sm:$0xf]
      %v188 = vld [vmem:[%s1 + $0x8] sm:$0xf]
      %v189 = vld [vmem:[%s1 + $0xc] sm:$0xf]
      %v190 = vld [vmem:[%s1 + $0x10] sm:$0xf]
      %v191 = vld [vmem:[%s1 + $0x14] sm:$0xf]
      %v192 = vld [vmem:[%s1 + $0x18] sm:$0xf]
      %v193 = vld [vmem:[%s1 + $0x1c] sm:$0xf]
      %v194 = vld [vmem:[%s1 + $0x20] sm:$0xf]
      %v195 = vld [vmem:[%s1 + $0x24] sm:$0xf]
      %v196 = vld [vmem:[%s1 + $0x28] sm:$0xf]
      %v197 = vld [vmem:[%s1 + $0x2c] sm:$0xf]
      %v198 = vld [vmem:[%s1 + $0x30] sm:$0xf]
      %v199 = vld [vmem:[%s1 + $0x34] sm:$0xf]
      %v200 = vld [vmem:[%s1 + $0x38] sm:$0xf]
      %v201 = vld [vmem:[%s1 + $0x3c] sm:$0xf]
      %v202 = vld [vmem:[%s1 + $0x40] sm:$0xf]
      %v203 = vld [vmem:[%s1 + $0x44] sm:$0xf]
      %v204 = vld [vmem:[%s1 + $0x48] sm:$0xf]
      %v205 = vld [vmem:[%s2] sm:$0x1]
      %v207 = vlaneseq
      %v208 = vshrl.u32 %v207, 7
      %v209 = vsub.s32 0, %v208
      %v210 = vrot.slane %v205, %v209
      %v220 = vunpack.c.l.b16 %v178
      %v221 = vunpack.c.h.b16 %v178
      %v222 = vunpack.c.l.b16 %v179
      %v223 = vunpack.c.h.b16 %v179
      %v224 = vunpack.c.l.b16 %v180
      %v225 = vunpack.c.h.b16 %v180
      %v226 = vunpack.c.l.b16 %v181
      %v227 = vunpack.c.h.b16 %v181
      %v228 = vunpack.c.l.b16 %v182
      %v229 = vunpack.c.h.b16 %v182
      %v230 = vunpack.c.l.b16 %v183
      %v231 = vunpack.c.h.b16 %v183
      %v232 = vunpack.c.l.b16 %v184
      %v233 = vunpack.c.h.b16 %v184
      %v234 = vunpack.c.l.b16 %v185
      %v235 = vunpack.c.h.b16 %v185
      %v236 = vpack.c.b16 %v222, %v220
      %v237 = vpack.c.b16 %v223, %v221
      %v238 = vpack.c.b16 %v226, %v224
      %v239 = vpack.c.b16 %v227, %v225
      %v240 = vpack.c.b16 %v230, %v228
      %v241 = vpack.c.b16 %v231, %v229
      %v242 = vpack.c.b16 %v234, %v232
      %v243 = vpack.c.b16 %v235, %v233
      %v267 = vunpack.c.l.b16 %v186
      %v268 = vunpack.c.l.b16 %v187
      %v269 = vunpack.c.l.b16 %v188
      %v270 = vunpack.c.l.b16 %v189
      %v271 = vunpack.c.l.b16 %v190
      %v272 = vunpack.c.l.b16 %v191
      %v273 = vunpack.c.l.b16 %v192
      %v274 = vunpack.c.l.b16 %v193
      %v275 = vunpack.c.l.b16 %v194
      %v276 = vunpack.c.l.b16 %v195
      %v277 = vunpack.c.l.b16 %v196
      %v278 = vunpack.c.l.b16 %v197
      %v279 = vunpack.c.l.b16 %v198
      %v280 = vunpack.c.l.b16 %v199
      %v281 = vunpack.c.l.b16 %v200
      %v282 = vunpack.c.l.b16 %v201
      %v283 = vunpack.c.l.b16 %v202
      %v284 = vunpack.c.l.b16 %v203
      %v285 = vunpack.c.l.b16 %v204
      %v286 = vpack.c.b16 %v268, %v267
      %v287 = vpack.c.b16 %v270, %v269
      %v288 = vpack.c.b16 %v272, %v271
      %v289 = vpack.c.b16 %v274, %v273
      %v290 = vpack.c.b16 %v276, %v275
      %v291 = vpack.c.b16 %v278, %v277
      %v292 = vpack.c.b16 %v280, %v279
      %v293 = vpack.c.b16 %v282, %v281
      %v294 = vpack.c.b16 %v284, %v283
      %v295 = vpack.c.b16 %v285, %v285
      %vm305 = vcmask 195584
      %v307 = vsel %vm305, %v237, 0
      %v310 = vsel %vm305, %v239, 0
      %v313 = vsel %vm305, %v241, 0
      %v316 = vsel %vm305, %v243, 0
      %vm318 = vcmask 1043456
      %v320 = vsel %vm318, %v295, 0
      %322 = vmatprep.subr.bf16.mxu0 0
      %323 = vmatpush1.bf16.msra.mxu0 %v286
      %324 = vmatprep.subr.bf16.mxu0 0
      %325 = vmatpush1.bf16.msra.mxu0 %v287
      %326 = vmatprep.subr.bf16.mxu0 0
      %327 = vmatpush1.bf16.msra.mxu0 %v288
      %328 = vmatprep.subr.bf16.mxu0 0
      %329 = vmatpush1.bf16.msra.mxu0 %v289
      %330 = vmatprep.subr.bf16.mxu0 0
      %331 = vmatpush1.bf16.msra.mxu0 %v290
      %332 = vmatprep.subr.bf16.mxu0 0
      %333 = vmatpush1.bf16.msra.mxu0 %v291
      %334 = vmatprep.subr.bf16.mxu0 0
      %335 = vmatpush1.bf16.msra.mxu0 %v292
      %336 = vmatprep.subr.bf16.mxu0 0
      %337 = vmatpush1.bf16.msra.mxu0 %v293
      %338 = vmatprep.subr.bf16.mxu0 0
      %339 = vmatpush1.bf16.msra.mxu0 %v294
      %340 = vmatprep.subr.bf16.mxu0 0
      %341 = vmatpush1.bf16.msra.mxu0 %v320
      %342 = vmatprep.subr.bf16.mxu0 0
      %343 = vmatpush1.bf16.msra.mxu0 0
      %344 = vmatprep.subr.bf16.mxu0 0
      %345 = vmatpush1.bf16.msra.mxu0 0
      %346 = vmatprep.subr.bf16.mxu0 0
      %347 = vmatpush1.bf16.msra.mxu0 0
      %348 = vmatprep.subr.bf16.mxu0 0
      %349 = vmatpush1.bf16.msra.mxu0 0
      %350 = vmatprep.subr.bf16.mxu0 0
      %351 = vmatpush1.bf16.msra.mxu0 0
      %352 = vmatprep.subr.bf16.mxu0 0
      %353 = vmatpush1.bf16.msra.mxu0 0
      %354 = vmatprep.mubr.bf16.mxu0 %v307
      %355 = vmatmul.mubr.bf16.gmra.mrb[0].mxu0 %v236
      %v356 = vpop.f32.mrb[0].mxu0
      %v357 = vadd.f32 %v210, %v356
      %v358 = vpop.f32.mrb[0].mxu0
      %v359 = vpop.f32.mrb[0].mxu0
      %v360 = vadd.f32 %v210, %v359
      %v361 = vpop.f32.mrb[0].mxu0
      %362 = vmatprep.mubr.bf16.mxu0 %v310
      %363 = vmatmul.mubr.bf16.gmra.mrb[0].mxu0 %v238
      %v364 = vpop.f32.mrb[0].mxu0
      %v365 = vadd.f32 %v210, %v364
      %v366 = vpop.f32.mrb[0].mxu0
      %v367 = vpop.f32.mrb[0].mxu0
      %v368 = vadd.f32 %v210, %v367
      %v369 = vpop.f32.mrb[0].mxu0
      %370 = vmatprep.mubr.bf16.mxu0 %v313
      %371 = vmatmul.mubr.bf16.gmra.mrb[0].mxu0 %v240
      %v372 = vpop.f32.mrb[0].mxu0
      %v373 = vadd.f32 %v210, %v372
      %v374 = vpop.f32.mrb[0].mxu0
      %v375 = vpop.f32.mrb[0].mxu0
      %v376 = vadd.f32 %v210, %v375
      %v377 = vpop.f32.mrb[0].mxu0
      %378 = vmatprep.mubr.bf16.mxu0 %v316
      %379 = vmatmul.mubr.bf16.gmra.mrb[0].mxu0 %v242
      %v380 = vpop.f32.mrb[0].mxu0
      %v381 = vadd.f32 %v210, %v380
      %v382 = vpop.f32.mrb[0].mxu0
      %v383 = vpop.f32.mrb[0].mxu0
      %v384 = vadd.f32 %v210, %v383
      %v385 = vpop.f32.mrb[0].mxu0
      %386 = vdwg.mxu0
      %v387 = vmax.f32 %v357, 0.0
      %v388 = vmax.f32 %v360, 0.0
      %v389 = vmax.f32 %v365, 0.0
      %v390 = vmax.f32 %v368, 0.0
      %v391 = vmax.f32 %v373, 0.0
      %v392 = vmax.f32 %v376, 0.0
      %v393 = vmax.f32 %v381, 0.0
      %v394 = vmax.f32 %v384, 0.0
      %v395 = vpack.c.bf16 %v388, %v387
      %v396 = vpack.c.bf16 %v390, %v389
      %v397 = vpack.c.bf16 %v392, %v391
      %v398 = vpack.c.bf16 %v394, %v393
      %v403 = vunpack.c.l.b16 %v395
      %v404 = vunpack.c.h.b16 %v395
      %v405 = vunpack.c.l.b16 %v396
      %v406 = vunpack.c.h.b16 %v396
      %v407 = vunpack.c.l.b16 %v397
      %v408 = vunpack.c.h.b16 %v397
      %v409 = vunpack.c.l.b16 %v398
      %v410 = vunpack.c.h.b16 %v398
      %v411 = vpack.c.b16 %v403, %v403
      %v412 = vpack.c.b16 %v404, %v404
      %v413 = vpack.c.b16 %v405, %v405
      %v414 = vpack.c.b16 %v406, %v406
      %v415 = vpack.c.b16 %v407, %v407
      %v416 = vpack.c.b16 %v408, %v408
      %v417 = vpack.c.b16 %v409, %v409
      %v418 = vpack.c.b16 %v410, %v410
      %vm427 = vcmask 519168
      %428 = vst.msk [vmem:[%s175] sm:$0xf] %vm427, %v411
      %429 = vst.msk [vmem:[%s175 + $0x4] sm:$0xf] %vm427, %v412
      %430 = vst.msk [vmem:[%s175 + $0x8] sm:$0xf] %vm427, %v413
      %431 = vst.msk [vmem:[%s175 + $0xc] sm:$0xf] %vm427, %v414
      %432 = vst.msk [vmem:[%s175 + $0x10] sm:$0xf] %vm427, %v415
      %433 = vst.msk [vmem:[%s175 + $0x14] sm:$0xf] %vm427, %v416
      %434 = vst.msk [vmem:[%s175 + $0x18] sm:$0xf] %vm427, %v417
      %435 = vst.msk [vmem:[%s175 + $0x1c] sm:$0xf] %vm427, %v418
      %s436 = smul.u32 8, %s14
      %p437 = scmp.lt.s32.totalorder %s436, 15
      %s438 = scalar_select %p437, %s436, 15
      %s439 = smul.addr %s438, 4
      %s440 = scalar_lea.vmem %s3, %s439
      // Predicated region
      $region33: #{_lambda_.5} parent=31 // pred_check
        %p441 = pneg %p100
      $region34: #{_lambda_.5} parent=31 // pred_check_branch
        %443 = sbr.rel (%p441) target = $region36
      $region35: #{_lambda_.5} parent=31 // pred_region
        %s444 = smul.u32 8, %s14
      $region36: #{_lambda_.5} parent=31 // pred_fallthru
        _
    $region32: #{_lambda_.5} parent=5 // pred_fallthru
      _
    %p445 = scmp.le.s32.totalorder 2, %s9
    // Predicated region
    $region37: #{_lambda_.5} parent=5 // pred_check
      %p446 = pneg %p445
    $region38: #{_lambda_.5} parent=5 // pred_check_branch
      %448 = sbr.rel (%p446) target = $region40
    $region39: #{_lambda_.5} parent=5 // pred_region
      %s449 = ssub.s32 %s9, 2
      // Predicated region
      $region41: #{_lambda_.5} parent=39 // pred_check
        %p450 = pneg %p106
      $region42: #{_lambda_.5} parent=39 // pred_check_branch
        %452 = sbr.rel (%p450) target = $region44
      $region43: #{_lambda_.5} parent=39 // pred_region
        %s453 = smul.u32 8, %s15
        %p454 = scmp.lt.s32.totalorder %s453, 15
        %s455 = scalar_select %p454, %s453, 15
        %s456 = smul.addr %s455, 4
        %s457 = scalar_lea.vmem %s3, %s456
      $region44: #{_lambda_.5} parent=39 // pred_fallthru
        _
    $region40: #{_lambda_.5} parent=5 // pred_fallthru
      _
  $region6: #{_lambda_.5} parent=0 // loop_footer
    %s13 = sadd.s32 1, %s9
  $region7: #{_lambda_.5} parent=0 // loop_footer_branch
    %8 = sbr.rel target = $region3
  $region8: #{_lambda_.5} parent=0 // loop_exit
    _

// kernel: _lambda_.6
$region0: #{_lambda_.6}
  #allocation0 [shape = 'u32[]', space=smem, size = 0x4, offset = 0x4, fixed_abs, tag = 'smem constant byte address 0x4 - core index']
  #allocation1 [shape = 'u32[144,128]{1,0:T(1,128)}', space=vmem, size = 0x12000, scoped, tag = 'internal scratch']
  %s0 = inlined_call_operand.vmem [shape: bf16[2,10,5,128], index: 0, kind: input, shape index: {}]
  %s1 = inlined_call_operand.vmem [shape: bf16[2,4,4,64], index: 1, kind: output, shape index: {}]
  %s2 = sld [smem:[#allocation0]]
  $region37: #{_lambda_.6} parent=0
    _
  %s4 = ssub.s32 1, %s2
  %s5 = scalar_select 0, %s4, %s2
  loop: start=0, step=1, limit=4
  $region2: #{_lambda_.6} parent=0 // loop_pre_header
    _
  $region3: #{_lambda_.6} parent=0 // loop_header
    %s7 = sphi 0, %s11
    %p8 = scmp.ge.s32.totalorder %s7, 4
    %s17 = sphi 0, %s19
    %s20 = sphi 0, %s17
    %s21 = sphi 0, %s20
    %s37 = sphi 0, %s21
    %s43 = sphi 0, %s45
    %s46 = sphi 0, %s43
    %s47 = sphi 0, %s46
    %s63 = sphi 0, %s47
  $region4: #{_lambda_.6} parent=0 // loop_header_branch
    %10 = sbr.rel (%p8) target = $region8
  $region5: #{_lambda_.6} parent=0 // loop_body
    %s12 = ssub.s32 %s7, 1
    %s13 = ssub.s32 %s7, 2
    %s14 = sadd.s32 %s7, 1
    %s15 = ssub.s32 %s7, %s14
    %p16 = scmp.eq.s32.totalorder %s15, 0
    %s18 = sadd.s32 %s17, 1
    %s19 = scalar_select %p16, %s17, %s18
    %p22 = pneg %p16
    %p23 = scmp.eq.s32.totalorder %s7, 1
    %p24 = por %p22, %p23
    %p25 = scmp.ne.s32.totalorder %s17, %s20
    %p26 = scmp.eq.s32.totalorder %s7, 0
    %p27 = por %p25, %p26
    %p28 = scmp.ne.s32.totalorder %s17, %s20
    %p29 = scmp.eq.s32.totalorder %s12, 1
    %p30 = por %p28, %p29
    %p31 = scmp.ne.s32.totalorder %s20, %s21
    %p32 = scmp.eq.s32.totalorder %s12, 0
    %p33 = por %p31, %p32
    %p34 = scmp.ne.s32.totalorder %s20, %s21
    %p35 = scmp.eq.s32.totalorder %s13, 1
    %p36 = por %p34, %p35
    %p38 = scmp.ne.s32.totalorder %s21, %s37
    %p39 = scmp.eq.s32.totalorder %s13, 0
    %p40 = por %p38, %p39
    %s41 = ssub.s32 %s7, %s14
    %p42 = scmp.eq.s32.totalorder %s41, 0
    %s44 = sadd.s32 %s43, 1
    %s45 = scalar_select %p42, %s43, %s44
    %p48 = pneg %p42
    %p49 = scmp.eq.s32.totalorder %s7, 1
    %p50 = por %p48, %p49
    %p51 = scmp.ne.s32.totalorder %s43, %s46
    %p52 = scmp.eq.s32.totalorder %s7, 0
    %p53 = por %p51, %p52
    %p54 = scmp.ne.s32.totalorder %s43, %s46
    %p55 = scmp.eq.s32.totalorder %s12, 1
    %p56 = por %p54, %p55
    %p57 = scmp.ne.s32.totalorder %s46, %s47
    %p58 = scmp.eq.s32.totalorder %s12, 0
    %p59 = por %p57, %p58
    %p60 = scmp.ne.s32.totalorder %s46, %s47
    %p61 = scmp.eq.s32.totalorder %s13, 1
    %p62 = por %p60, %p61
    %p64 = scmp.ne.s32.totalorder %s47, %s63
    %p65 = scmp.eq.s32.totalorder %s13, 0
    %p66 = por %p64, %p65
    %p67 = scmp.le.s32.totalorder 1, %s7
    %p68 = scmp.lt.s32.totalorder %s7, 3
    %p69 = pnand %p67, %p68
    %p70 = pneg %p69
    // Predicated region
    $region9: #{_lambda_.6} parent=5 // pred_check
      _
    $region10: #{_lambda_.6} parent=5 // pred_check_branch
      %72 = sbr.rel (%p69) target = $region12
    $region11: #{_lambda_.6} parent=5 // pred_region
      %s73 = ssub.s32 %s7, 1
    $region12: #{_lambda_.6} parent=5 // pred_fallthru
      _
    %p74 = scmp.lt.s32.totalorder %s7, 2
    // Predicated region
    $region13: #{_lambda_.6} parent=5 // pred_check
      %p75 = pneg %p74
    $region14: #{_lambda_.6} parent=5 // pred_check_branch
      %77 = sbr.rel (%p75) target = $region16
    $region15: #{_lambda_.6} parent=5 // pred_region
      // Predicated region
      $region17: #{_lambda_.6} parent=15 // pred_check
        %p78 = pneg %p27
      $region18: #{_lambda_.6} parent=15 // pred_check_branch
        %80 = sbr.rel (%p78) target = $region20
      $region19: #{_lambda_.6} parent=15 // pred_region
        %p81 = scmp.lt.s32.totalorder %s7, 1
        %s82 = scalar_select %p81, %s7, 1
        %s83 = smul.addr %s82, 10
        %s84 = smul.addr %s83, 4
        %s85 = scalar_lea.vmem %s0, %s84
      $region20: #{_lambda_.6} parent=15 // pred_fallthru
        _
    $region16: #{_lambda_.6} parent=5 // pred_fallthru
      _
    %p86 = scmp.le.s32.totalorder 1, %s7
    %p87 = scmp.lt.s32.totalorder %s7, 3
    %p88 = pnand %p86, %p87
    %p89 = pneg %p88
    // Predicated region
    $region21: #{_lambda_.6} parent=5 // pred_check
      _
    $region22: #{_lambda_.6} parent=5 // pred_check_branch
      %91 = sbr.rel (%p88) target = $region24
    $region23: #{_lambda_.6} parent=5 // pred_region
      %s92 = ssub.s32 %s7, 1
      %p93 = scmp.lt.s32.totalorder %s12, 1
      %s94 = scalar_select %p93, %s12, 1
      %s95 = smul.addr %s94, 10
      %s96 = smul.addr %s95, 4
      %s97 = scalar_lea.vmem %s0, %s96
      %p98 = pneg %p33
      %p99 = pneg %p30
      %p100 = pneg %p59
      %p101 = pneg %p56
      %p102 = scmp.lt.s32.totalorder %s12, 1
      %s103 = scalar_select %p102, %s12, 1
      %s104 = smul.addr %s103, 4
      %s105 = smul.addr %s104, 2
      %s106 = scalar_lea.vmem %s1, %s105
      %p107 = scmp.lt.s32.totalorder %s12, 1
      %s108 = scalar_select %p107, %s12, 1
      %s109 = smul.addr %s108, 10
      %s110 = smul.addr %s109, 4
      %s111 = scalar_lea.vmem %s0, %s110
      %p112 = scmp.lt.s32.totalorder %s12, 1
      %s113 = scalar_select %p112, %s12, 1
      %s114 = smul.addr %s113, 4
      %s115 = smul.addr %s114, 2
      %s116 = scalar_lea.vmem %s1, %s115
      %v117 = vld [vmem:[%s111] sm:$0x7]
      %v118 = vld [vmem:[%s111 + $0x4] sm:$0x7]
      %v119 = vld [vmem:[%s111 + $0x8] sm:$0x7]
      %v120 = vld [vmem:[%s111 + $0xc] sm:$0x7]
      %v121 = vld [vmem:[%s111 + $0x10] sm:$0x7]
      %v122 = vld [vmem:[%s111 + $0x14] sm:$0x7]
      %v123 = vld [vmem:[%s111 + $0x18] sm:$0x7]
      %v124 = vld [vmem:[%s111 + $0x1c] sm:$0x7]
      %v125 = vld [vmem:[%s111 + $0x20] sm:$0x7]
      %135 = vrot.lane.b32.xlu0 %v117, 64
      %v136 = vpop.permute.xlu0 %135
      %137 = vrot.lane.b32.xlu0 %v118, 64
      %v138 = vpop.permute.xlu0 %137
      %139 = vrot.lane.b32.xlu0 %v119, 64
      %v140 = vpop.permute.xlu0 %139
      %141 = vrot.lane.b32.xlu0 %v120, 64
      %v142 = vpop.permute.xlu0 %141
      %143 = vrot.lane.b32.xlu0 %v121, 64
      %v144 = vpop.permute.xlu0 %143
      %145 = vrot.lane.b32.xlu0 %v122, 64
      %v146 = vpop.permute.xlu0 %145
      %147 = vrot.lane.b32.xlu0 %v123, 64
      %v148 = vpop.permute.xlu0 %147
      %149 = vrot.lane.b32.xlu0 %v124, 64
      %v150 = vpop.permute.xlu0 %149
      %151 = vrot.lane.b32.xlu0 %v125, 64
      %v152 = vpop.permute.xlu0 %151
      %v162 = vmax.bf16 %v117, %v136
      %v163 = vmax.bf16 %v118, %v138
      %v164 = vmax.bf16 %v119, %v140
      %v165 = vmax.bf16 %v120, %v142
      %v166 = vmax.bf16 %v121, %v144
      %v167 = vmax.bf16 %v122, %v146
      %v168 = vmax.bf16 %v123, %v148
      %v169 = vmax.bf16 %v124, %v150
      %v170 = vmax.bf16 %v125, %v152
      %v172 = vshrl.u32 %v117, 16
      %v174 = vrot.slane %v172, 4
      %v175 = vshll.u32 %v117, 16
      %v177 = vrot.slane %v175, 5
      %v178 = vor.u32 %v174, %v177
      %v179 = vrot.slane %v178, 4
      %v181 = vshrl.u32 %v118, 16
      %v183 = vrot.slane %v181, 4
      %v184 = vshll.u32 %v118, 16
      %v186 = vrot.slane %v184, 5
      %v187 = vor.u32 %v183, %v186
      %v188 = vrot.slane %v187, 4
      %v190 = vshrl.u32 %v119, 16
      %v192 = vrot.slane %v190, 4
      %v193 = vshll.u32 %v119, 16
      %v195 = vrot.slane %v193, 5
      %v196 = vor.u32 %v192, %v195
      %v197 = vrot.slane %v196, 4
      %v199 = vshrl.u32 %v120, 16
      %v201 = vrot.slane %v199, 4
      %v202 = vshll.u32 %v120, 16
      %v204 = vrot.slane %v202, 5
      %v205 = vor.u32 %v201, %v204
      %v206 = vrot.slane %v205, 4
      %v208 = vshrl.u32 %v121, 16
      %v210 = vrot.slane %v208, 4
      %v211 = vshll.u32 %v121, 16
      %v213 = vrot.slane %v211, 5
      %v214 = vor.u32 %v210, %v213
      %v215 = vrot.slane %v214, 4
      %v217 = vshrl.u32 %v122, 16
      %v219 = vrot.slane %v217, 4
      %v220 = vshll.u32 %v122, 16
      %v222 = vrot.slane %v220, 5
      %v223 = vor.u32 %v219, %v222
      %v224 = vrot.slane %v223, 4
      %v226 = vshrl.u32 %v123, 16
      %v228 = vrot.slane %v226, 4
      %v229 = vshll.u32 %v123, 16
      %v231 = vrot.slane %v229, 5
      %v232 = vor.u32 %v228, %v231
      %v233 = vrot.slane %v232, 4
      %v235 = vshrl.u32 %v124, 16
      %v237 = vrot.slane %v235, 4
      %v238 = vshll.u32 %v124, 16
      %v240 = vrot.slane %v238, 5
      %v241 = vor.u32 %v237, %v240
      %v242 = vrot.slane %v241, 4
      %v244 = vshrl.u32 %v125, 16
      %v246 = vrot.slane %v244, 4
      %v247 = vshll.u32 %v125, 16
      %v249 = vrot.slane %v247, 5
      %v250 = vor.u32 %v246, %v249
      %v251 = vrot.slane %v250, 4
      %v261 = vmax.bf16 %v162, %v179
      %v262 = vmax.bf16 %v163, %v188
      %v263 = vmax.bf16 %v164, %v197
      %v264 = vmax.bf16 %v165, %v206
      %v265 = vmax.bf16 %v166, %v215
      %v266 = vmax.bf16 %v167, %v224
      %v267 = vmax.bf16 %v168, %v233
      %v268 = vmax.bf16 %v169, %v242
      %v269 = vmax.bf16 %v170, %v251
      %v270 = vmax.bf16 %v261, %v262
      %v271 = vmax.bf16 %v263, %v264
      %v272 = vmax.bf16 %v265, %v266
      %v273 = vmax.bf16 %v267, %v268
      %v274 = vmax.bf16 %v270, %v263
      %v275 = vmax.bf16 %v271, %v265
      %v276 = vmax.bf16 %v272, %v267
      %v277 = vmax.bf16 %v273, %v269
      %vm278 = vcmask 517120
      %279 = vst.msk [vmem:[%s116] sm:$0x3] %vm278, %v274
      %280 = vst.msk [vmem:[%s116 + $0x2] sm:$0x3] %vm278, %v275
      %281 = vst.msk [vmem:[%s116 + $0x4] sm:$0x3] %vm278, %v276
      %282 = vst.msk [vmem:[%s116 + $0x6] sm:$0x3] %vm278, %v277
      %p283 = scmp.lt.s32.totalorder %s12, 1
      %s284 = scalar_select %p283, %s12, 1
      %s285 = smul.addr %s284, 4
      %s286 = smul.addr %s285, 2
      %s287 = scalar_lea.vmem %s1, %s286
      // Predicated region
      $region25: #{_lambda_.6} parent=23 // pred_check
        %p288 = pneg %p56
      $region26: #{_lambda_.6} parent=23 // pred_check_branch
        %290 = sbr.rel (%p288) target = $region28
      $region27: #{_lambda_.6} parent=23 // pred_region
        _
      $region28: #{_lambda_.6} parent=23 // pred_fallthru
        _
    $region24: #{_lambda_.6} parent=5 // pred_fallthru
      _
    %p291 = scmp.le.s32.totalorder 2, %s7
    // Predicated region
    $region29: #{_lambda_.6} parent=5 // pred_check
      %p292 = pneg %p291
    $region30: #{_lambda_.6} parent=5 // pred_check_branch
      %294 = sbr.rel (%p292) target = $region32
    $region31: #{_lambda_.6} parent=5 // pred_region
      %s295 = ssub.s32 %s7, 2
      // Predicated region
      $region33: #{_lambda_.6} parent=31 // pred_check
        %p296 = pneg %p62
      $region34: #{_lambda_.6} parent=31 // pred_check_branch
        %298 = sbr.rel (%p296) target = $region36
      $region35: #{_lambda_.6} parent=31 // pred_region
        %p299 = scmp.lt.s32.totalorder %s13, 1
        %s300 = scalar_select %p299, %s13, 1
        %s301 = smul.addr %s300, 4
        %s302 = smul.addr %s301, 2
        %s303 = scalar_lea.vmem %s1, %s302
      $region36: #{_lambda_.6} parent=31 // pred_fallthru
        _
    $region32: #{_lambda_.6} parent=5 // pred_fallthru
      _
  $region6: #{_lambda_.6} parent=0 // loop_footer
    %s11 = sadd.s32 1, %s7
  $region7: #{_lambda_.6} parent=0 // loop_footer_branch
    %6 = sbr.rel target = $region3
  $region8: #{_lambda_.6} parent=0 // loop_exit
    _

// kernel: _lambda_.7
$region0: #{_lambda_.7}
  #allocation0 [shape = 'u32[]', space=smem, size = 0x4, offset = 0x4, fixed_abs, tag = 'smem constant byte address 0x4 - core index']
  #allocation1 [shape = 'u32[144,128]{1,0:T(1,128)}', space=vmem, size = 0x12000, scoped, tag = 'internal scratch']
  #allocation2 [shape = 'bf16[40,64]{1,0:T(8,128)(2,1)}', space=vmem, size = 0x2800, scoped, tag = 'scratch operand']
  %s0 = inlined_call_operand.vmem [shape: bf16[2,40,64], index: 0, kind: input, shape index: {}]
  %s1 = inlined_call_operand.vmem [shape: bf16[9,64,64], index: 1, kind: input, shape index: {}]
  %s2 = inlined_call_operand.vmem [shape: f32[1,64], index: 2, kind: input, shape index: {}]
  %s3 = inlined_call_operand.vmem [shape: bf16[9,64,64], index: 3, kind: input, shape index: {}]
  %s4 = inlined_call_operand.vmem [shape: f32[1,64], index: 4, kind: input, shape index: {}]
  %s5 = inlined_call_operand.vmem [shape: bf16[2,40,64], index: 5, kind: output, shape index: {}]
  %s6 = sld [smem:[#allocation0]]
  $region53: #{_lambda_.7} parent=0
    _
  %s8 = ssub.s32 1, %s6
  %s9 = scalar_select 0, %s8, %s6
  loop: start=0, step=1, limit=4
  $region2: #{_lambda_.7} parent=0 // loop_pre_header
    _
  $region3: #{_lambda_.7} parent=0 // loop_header
    %s11 = sphi 0, %s15
    %p12 = scmp.ge.s32.totalorder %s11, 4
    %s21 = sphi 0, %s23
    %s24 = sphi 0, %s21
    %s25 = sphi 0, %s24
    %s41 = sphi 0, %s25
    %s45 = sphi 0, %s45
    %s47 = sphi 0, %s45
    %s48 = sphi 0, %s47
    %s62 = sphi 0, %s48
    %s66 = sphi 0, %s66
    %s68 = sphi 0, %s66
    %s69 = sphi 0, %s68
    %s83 = sphi 0, %s69
    %s87 = sphi 0, %s87
    %s89 = sphi 0, %s87
    %s90 = sphi 0, %s89
    %s104 = sphi 0, %s90
    %s108 = sphi 0, %s108
    %s110 = sphi 0, %s108
    %s111 = sphi 0, %s110
    %s125 = sphi 0, %s111
    %s131 = sphi 0, %s133
    %s134 = sphi 0, %s131
    %s135 = sphi 0, %s134
    %s151 = sphi 0, %s135
  $region4: #{_lambda_.7} parent=0 // loop_header_branch
    %14 = sbr.rel (%p12) target = $region8
  $region5: #{_lambda_.7} parent=0 // loop_body
    %s16 = ssub.s32 %s11, 1
    %s17 = ssub.s32 %s11, 2
    %s18 = sadd.s32 %s11, 1
    %s19 = ssub.s32 %s11, %s18
    %p20 = scmp.eq.s32.totalorder %s19, 0
    %s22 = sadd.s32 %s21, 1
    %s23 = scalar_select %p20, %s21, %s22
    %p26 = pneg %p20
    %p27 = scmp.eq.s32.totalorder %s11, 1
    %p28 = por %p26, %p27
    %p29 = scmp.ne.s32.totalorder %s21, %s24
    %p30 = scmp.eq.s32.totalorder %s11, 0
    %p31 = por %p29, %p30
    %p32 = scmp.ne.s32.totalorder %s21, %s24
    %p33 = scmp.eq.s32.totalorder %s16, 1
    %p34 = por %p32, %p33
    %p35 = scmp.ne.s32.totalorder %s24, %s25
    %p36 = scmp.eq.s32.totalorder %s16, 0
    %p37 = por %p35, %p36
    %p38 = scmp.ne.s32.totalorder %s24, %s25
    %p39 = scmp.eq.s32.totalorder %s17, 1
    %p40 = por %p38, %p39
    %p42 = scmp.ne.s32.totalorder %s25, %s41
    %p43 = scmp.eq.s32.totalorder %s17, 0
    %p44 = por %p42, %p43
    %s46 = sadd.s32 %s45, 1
    %p49 = scmp.eq.s32.totalorder %s11, 1
    %p50 = scmp.ne.s32.totalorder %s45, %s47
    %p51 = scmp.eq.s32.totalorder %s11, 0
    %p52 = por %p50, %p51
    %p53 = scmp.ne.s32.totalorder %s45, %s47
    %p54 = scmp.eq.s32.totalorder %s16, 1
    %p55 = por %p53, %p54
    %p56 = scmp.ne.s32.totalorder %s47, %s48
    %p57 = scmp.eq.s32.totalorder %s16, 0
    %p58 = por %p56, %p57
    %p59 = scmp.ne.s32.totalorder %s47, %s48
    %p60 = scmp.eq.s32.totalorder %s17, 1
    %p61 = por %p59, %p60
    %p63 = scmp.ne.s32.totalorder %s48, %s62
    %p64 = scmp.eq.s32.totalorder %s17, 0
    %p65 = por %p63, %p64
    %s67 = sadd.s32 %s66, 1
    %p70 = scmp.eq.s32.totalorder %s11, 1
    %p71 = scmp.ne.s32.totalorder %s66, %s68
    %p72 = scmp.eq.s32.totalorder %s11, 0
    %p73 = por %p71, %p72
    %p74 = scmp.ne.s32.totalorder %s66, %s68
    %p75 = scmp.eq.s32.totalorder %s16, 1
    %p76 = por %p74, %p75
    %p77 = scmp.ne.s32.totalorder %s68, %s69
    %p78 = scmp.eq.s32.totalorder %s16, 0
    %p79 = por %p77, %p78
    %p80 = scmp.ne.s32.totalorder %s68, %s69
    %p81 = scmp.eq.s32.totalorder %s17, 1
    %p82 = por %p80, %p81
    %p84 = scmp.ne.s32.totalorder %s69, %s83
    %p85 = scmp.eq.s32.totalorder %s17, 0
    %p86 = por %p84, %p85
    %s88 = sadd.s32 %s87, 1
    %p91 = scmp.eq.s32.totalorder %s11, 1
    %p92 = scmp.ne.s32.totalorder %s87, %s89
    %p93 = scmp.eq.s32.totalorder %s11, 0
    %p94 = por %p92, %p93
    %p95 = scmp.ne.s32.totalorder %s87, %s89
    %p96 = scmp.eq.s32.totalorder %s16, 1
    %p97 = por %p95, %p96
    %p98 = scmp.ne.s32.totalorder %s89, %s90
    %p99 = scmp.eq.s32.totalorder %s16, 0
    %p100 = por %p98, %p99
    %p101 = scmp.ne.s32.totalorder %s89, %s90
    %p102 = scmp.eq.s32.totalorder %s17, 1
    %p103 = por %p101, %p102
    %p105 = scmp.ne.s32.totalorder %s90, %s104
    %p106 = scmp.eq.s32.totalorder %s17, 0
    %p107 = por %p105, %p106
    %s109 = sadd.s32 %s108, 1
    %p112 = scmp.eq.s32.totalorder %s11, 1
    %p113 = scmp.ne.s32.totalorder %s108, %s110
    %p114 = scmp.eq.s32.totalorder %s11, 0
    %p115 = por %p113, %p114
    %p116 = scmp.ne.s32.totalorder %s108, %s110
    %p117 = scmp.eq.s32.totalorder %s16, 1
    %p118 = por %p116, %p117
    %p119 = scmp.ne.s32.totalorder %s110, %s111
    %p120 = scmp.eq.s32.totalorder %s16, 0
    %p121 = por %p119, %p120
    %p122 = scmp.ne.s32.totalorder %s110, %s111
    %p123 = scmp.eq.s32.totalorder %s17, 1
    %p124 = por %p122, %p123
    %p126 = scmp.ne.s32.totalorder %s111, %s125
    %p127 = scmp.eq.s32.totalorder %s17, 0
    %p128 = por %p126, %p127
    %s129 = ssub.s32 %s11, %s18
    %p130 = scmp.eq.s32.totalorder %s129, 0
    %s132 = sadd.s32 %s131, 1
    %s133 = scalar_select %p130, %s131, %s132
    %p136 = pneg %p130
    %p137 = scmp.eq.s32.totalorder %s11, 1
    %p138 = por %p136, %p137
    %p139 = scmp.ne.s32.totalorder %s131, %s134
    %p140 = scmp.eq.s32.totalorder %s11, 0
    %p141 = por %p139, %p140
    %p142 = scmp.ne.s32.totalorder %s131, %s134
    %p143 = scmp.eq.s32.totalorder %s16, 1
    %p144 = por %p142, %p143
    %p145 = scmp.ne.s32.totalorder %s134, %s135
    %p146 = scmp.eq.s32.totalorder %s16, 0
    %p147 = por %p145, %p146
    %p148 = scmp.ne.s32.totalorder %s134, %s135
    %p149 = scmp.eq.s32.totalorder %s17, 1
    %p150 = por %p148, %p149
    %p152 = scmp.ne.s32.totalorder %s135, %s151
    %p153 = scmp.eq.s32.totalorder %s17, 0
    %p154 = por %p152, %p153
    %p155 = scmp.le.s32.totalorder 1, %s11
    %p156 = scmp.lt.s32.totalorder %s11, 3
    %p157 = pnand %p155, %p156
    %p158 = pneg %p157
    // Predicated region
    $region9: #{_lambda_.7} parent=5 // pred_check
      _
    $region10: #{_lambda_.7} parent=5 // pred_check_branch
      %160 = sbr.rel (%p157) target = $region12
    $region11: #{_lambda_.7} parent=5 // pred_region
      %s161 = ssub.s32 %s11, 1
      // Predicated region
      $region13: #{_lambda_.7} parent=11 // pred_check
        %p162 = pneg %p58
      $region14: #{_lambda_.7} parent=11 // pred_check_branch
        %164 = sbr.rel (%p162) target = $region16
      $region15: #{_lambda_.7} parent=11 // pred_region
        _
      $region16: #{_lambda_.7} parent=11 // pred_fallthru
        _
      // Predicated region
      $region17: #{_lambda_.7} parent=11 // pred_check
        %p165 = pneg %p79
      $region18: #{_lambda_.7} parent=11 // pred_check_branch
        %167 = sbr.rel (%p165) target = $region20
      $region19: #{_lambda_.7} parent=11 // pred_region
        _
      $region20: #{_lambda_.7} parent=11 // pred_fallthru
        _
      // Predicated region
      $region21: #{_lambda_.7} parent=11 // pred_check
        %p168 = pneg %p100
      $region22: #{_lambda_.7} parent=11 // pred_check_branch
        %170 = sbr.rel (%p168) target = $region24
      $region23: #{_lambda_.7} parent=11 // pred_region
        _
      $region24: #{_lambda_.7} parent=11 // pred_fallthru
        _
      // Predicated region
      $region25: #{_lambda_.7} parent=11 // pred_check
        %p171 = pneg %p121
      $region26: #{_lambda_.7} parent=11 // pred_check_branch
        %173 = sbr.rel (%p171) target = $region28
      $region27: #{_lambda_.7} parent=11 // pred_region
        _
      $region28: #{_lambda_.7} parent=11 // pred_fallthru
        _
    $region12: #{_lambda_.7} parent=5 // pred_fallthru
      _
    %p174 = scmp.lt.s32.totalorder %s11, 2
    // Predicated region
    $region29: #{_lambda_.7} parent=5 // pred_check
      %p175 = pneg %p174
    $region30: #{_lambda_.7} parent=5 // pred_check_branch
      %177 = sbr.rel (%p175) target = $region32
    $region31: #{_lambda_.7} parent=5 // pred_region
      // Predicated region
      $region33: #{_lambda_.7} parent=31 // pred_check
        %p178 = pneg %p31
      $region34: #{_lambda_.7} parent=31 // pred_check_branch
        %180 = sbr.rel (%p178) target = $region36
      $region35: #{_lambda_.7} parent=31 // pred_region
        %p181 = scmp.lt.s32.totalorder %s11, 1
        %s182 = scalar_select %p181, %s11, 1
        %s183 = smul.addr %s182, 5
        %s184 = smul.addr %s183, 4
        %s185 = scalar_lea.vmem %s0, %s184
      $region36: #{_lambda_.7} parent=31 // pred_fallthru
        _
    $region32: #{_lambda_.7} parent=5 // pred_fallthru
      _
    %p186 = scmp.le.s32.totalorder 1, %s11
    %p187 = scmp.lt.s32.totalorder %s11, 3
    %p188 = pnand %p186, %p187
    %p189 = pneg %p188
    // Predicated region
    $region37: #{_lambda_.7} parent=5 // pred_check
      _
    $region38: #{_lambda_.7} parent=5 // pred_check_branch
      %191 = sbr.rel (%p188) target = $region40
    $region39: #{_lambda_.7} parent=5 // pred_region
      %s192 = ssub.s32 %s11, 1
      %p193 = scmp.lt.s32.totalorder %s16, 1
      %s194 = scalar_select %p193, %s16, 1
      %s195 = smul.addr %s194, 5
      %s196 = smul.addr %s195, 4
      %s197 = scalar_lea.vmem %s0, %s196
      %p198 = pneg %p37
      %p199 = pneg %p34
      %p200 = pneg %p58
      %p201 = pneg %p55
      %p202 = pneg %p79
      %p203 = pneg %p76
      %p204 = pneg %p100
      %p205 = pneg %p97
      %p206 = pneg %p121
      %p207 = pneg %p118
      %p208 = pneg %p147
      %p209 = pneg %p144
      %p210 = scmp.lt.s32.totalorder %s16, 1
      %s211 = scalar_select %p210, %s16, 1
      %s212 = smul.addr %s211, 5
      %s213 = smul.addr %s212, 4
      %s214 = scalar_lea.vmem %s5, %s213
      %p215 = scmp.lt.s32.totalorder %s16, 1
      %s216 = scalar_select %p215, %s16, 1
      %s217 = smul.addr %s216, 5
      %s218 = smul.addr %s217, 4
      %s219 = scalar_lea.vmem %s0, %s218
      %p220 = scmp.lt.s32.totalorder %s16, 1
      %s221 = scalar_select %p220, %s16, 1
      %s222 = smul.addr %s221, 5
      %s223 = smul.addr %s222, 4
      %s224 = scalar_lea.vmem %s5, %s223
      %v226 = vlaneseq
      %v227 = vshrl.u32 %v226, 7
      %v228 = vadd.s32 %v227, 8
      %v229 = vadd.s32 %v227, 16
      %vm230 = vcmp.lt.s32.totalorder %v227, 0
      %v231 = vsub.s32 0, %v227
      %v232 = vsel %vm230, %v231, %v227
      %v233 = vmul.u32.u64.compose %v232, 2863311531
      %v234 = vextract.low.u32 %v233
      %v235 = vextract.high.u32 %v233
      %v236 = vshrl.u32 %v235, 2
      %v237 = vmul.u32 %v236, 6
      %v238 = vsub.s32 %v232, %v237
      %v239 = vsub.s32 0, %v238
      %v240 = vsel %vm230, %v239, %v238
      %vm241 = vcmp.lt.s32.totalorder %v228, 0
      %v242 = vsub.s32 0, %v228
      %v243 = vsel %vm241, %v242, %v228
      %v244 = vmul.u32.u64.compose %v243, 2863311531
      %v245 = vextract.low.u32 %v244
      %v246 = vextract.high.u32 %v244
      %v247 = vshrl.u32 %v246, 2
      %v248 = vmul.u32 %v247, 6
      %v249 = vsub.s32 %v243, %v248
      %v250 = vsub.s32 0, %v249
      %v251 = vsel %vm241, %v250, %v249
      %vm252 = vcmp.lt.s32.totalorder %v229, 0
      %v253 = vsub.s32 0, %v229
      %v254 = vsel %vm252, %v253, %v229
      %v255 = vmul.u32.u64.compose %v254, 2863311531
      %v256 = vextract.low.u32 %v255
      %v257 = vextract.high.u32 %v255
      %v258 = vshrl.u32 %v257, 2
      %v259 = vmul.u32 %v258, 6
      %v260 = vsub.s32 %v254, %v259
      %v261 = vsub.s32 0, %v260
      %v262 = vsel %vm252, %v261, %v260
      %vm263 = vcmp.ne.s32.totalorder %v240, 0
      %vm264 = vcmp.ne.s32.totalorder %v251, 0
      %vm265 = vcmp.ne.s32.totalorder %v262, 0
      %vm266 = vcmp.lt.s32.totalorder %v240, 0
      %vm267 = vcmp.lt.s32.totalorder %v251, 0
      %vm268 = vcmp.lt.s32.totalorder %v262, 0
      %vm269 = vmand %vm266, %vm263
      %vm270 = vmand %vm267, %vm264
      %vm271 = vmand %vm268, %vm265
      %v272 = vadd.s32 %v240, 6
      %v273 = vadd.s32 %v251, 6
      %v274 = vadd.s32 %v262, 6
      %v275 = vsel %vm269, %v272, %v240
      %v276 = vsel %vm270, %v273, %v251
      %v277 = vsel %vm271, %v274, %v262
      %vm278 = vcmp.lt.s32.totalorder %v275, 4
      %vm279 = vcmp.lt.s32.totalorder %v276, 4
      %vm280 = vcmp.lt.s32.totalorder %v277, 4
      %v281 = vld [vmem:[%s219] sm:$0xf]
      %v282 = vld [vmem:[%s219 + $0x4] sm:$0xf]
      %v283 = vld [vmem:[%s219 + $0x8] sm:$0xf]
      %v284 = vld [vmem:[%s1] sm:$0xf]
      %v285 = vld [vmem:[%s1 + $0x4] sm:$0xf]
      %v286 = vld [vmem:[%s1 + $0x8] sm:$0xf]
      %v287 = vld [vmem:[%s1 + $0xc] sm:$0xf]
      %v288 = vld [vmem:[%s1 + $0x10] sm:$0xf]
      %v289 = vld [vmem:[%s1 + $0x14] sm:$0xf]
      %v290 = vld [vmem:[%s1 + $0x18] sm:$0xf]
      %v291 = vld [vmem:[%s1 + $0x1c] sm:$0xf]
      %v292 = vld [vmem:[%s219 + $0xc] sm:$0x1]
      %s293 = scalar_lea.vmem %s1, 32
      %v294 = vld [vmem:[%s293] sm:$0xf]
      %v295 = vld [vmem:[%s293 + $0x4] sm:$0xf]
      %v296 = vld [vmem:[%s293 + $0x8] sm:$0xf]
      %v297 = vld [vmem:[%s293 + $0xc] sm:$0xf]
      %v298 = vld [vmem:[%s293 + $0x10] sm:$0xf]
      %v299 = vld [vmem:[%s293 + $0x14] sm:$0xf]
      %v300 = vld [vmem:[%s293 + $0x18] sm:$0xf]
      %v301 = vld [vmem:[%s293 + $0x1c] sm:$0xf]
      %v306 = vunpack.c.l.b16 %v281
      %v307 = vunpack.c.l.b16 %v282
      %v308 = vunpack.c.l.b16 %v283
      %v309 = vunpack.c.l.b16 %v292
      %v310 = vpack.c.b16 %v307, %v306
      %v311 = vpack.c.b16 %v309, %v308
      %vm312 = vsmask.f32 7424
      %v314 = vshrl.u32 %v310, 16
      %v316 = vshll.u32 %v310, 16
      %v318 = vrot.slane %v316, 1
      %v319 = vor.u32 %v314, %v318
      %v321 = vshll.u32 %v311, 16
      %v323 = vrot.slane %v321, 1
      %v324 = vsel %vm312, %v319, %v323
      %v325 = vshrl.u32 %v311, 16
      %v327 = vor.u32 %v325, %v323
      %v336 = vunpack.c.l.b16 %v294
      %v337 = vunpack.c.l.b16 %v295
      %v338 = vunpack.c.l.b16 %v296
      %v339 = vunpack.c.l.b16 %v297
      %v340 = vunpack.c.l.b16 %v298
      %v341 = vunpack.c.l.b16 %v299
      %v342 = vunpack.c.l.b16 %v300
      %v343 = vunpack.c.l.b16 %v301
      %v344 = vpack.c.b16 %v337, %v336
      %v345 = vpack.c.b16 %v339, %v338
      %v346 = vpack.c.b16 %v341, %v340
      %v347 = vpack.c.b16 %v343, %v342
      %vm352 = vcmask 523264
      %v354 = vsel %vm352, %v324, 0
      %v357 = vsel %vm352, %v327, 0
      %359 = vmatprep.subr.bf16.mxu0 0
      %360 = vmatpush1.bf16.msra.mxu0 %v344
      %361 = vmatprep.subr.bf16.mxu0 0
      %362 = vmatpush1.bf16.msra.mxu0 %v345
      %363 = vmatprep.subr.bf16.mxu0 0
      %364 = vmatpush1.bf16.msra.mxu0 %v346
      %365 = vmatprep.subr.bf16.mxu0 0
      %366 = vmatpush1.bf16.msra.mxu0 %v347
      %367 = vmatprep.subr.bf16.mxu0 0
      %368 = vmatpush1.bf16.msra.mxu0 0
      %369 = vmatprep.subr.bf16.mxu0 0
      %370 = vmatpush1.bf16.msra.mxu0 0
      %371 = vmatprep.subr.bf16.mxu0 0
      %372 = vmatpush1.bf16.msra.mxu0 0
      %373 = vmatprep.subr.bf16.mxu0 0
      %374 = vmatpush1.bf16.msra.mxu0 0
      %375 = vmatprep.subr.bf16.mxu0 0
      %376 = vmatpush1.bf16.msra.mxu0 0
      %377 = vmatprep.subr.bf16.mxu0 0
      %378 = vmatpush1.bf16.msra.mxu0 0
      %379 = vmatprep.subr.bf16.mxu0 0
      %380 = vmatpush1.bf16.msra.mxu0 0
      %381 = vmatprep.subr.bf16.mxu0 0
      %382 = vmatpush1.bf16.msra.mxu0 0
      %383 = vmatprep.subr.bf16.mxu0 0
      %384 = vmatpush1.bf16.msra.mxu0 0
      %385 = vmatprep.subr.bf16.mxu0 0
      %386 = vmatpush1.bf16.msra.mxu0 0
      %387 = vmatprep.subr.bf16.mxu0 0
      %388 = vmatpush1.bf16.msra.mxu0 0
      %389 = vmatprep.subr.bf16.mxu0 0
      %390 = vmatpush1.bf16.msra.mxu0 0
      %391 = vmatprep.mubr.bf16.mxu0 0
      %392 = vmatmul.mubr.bf16.gmra.mrb[0].mxu0 %v354
      %v393 = vpop.f32.mrb[0].mxu0
      %v394 = vadd.f32 0.0, %v393
      %v395 = vpop.f32.mrb[0].mxu0
      %v396 = vpop.f32.mrb[0].mxu0
      %v397 = vadd.f32 0.0, %v396
      %v398 = vpop.f32.mrb[0].mxu0
      %399 = vmatprep.mubr.bf16.mxu0 0
      %400 = vmatmul.mubr.bf16.gmra.mrb[0].mxu0 %v357
      %v401 = vpop.f32.mrb[0].mxu0
      %v402 = vadd.f32 0.0, %v401
      %v403 = vpop.f32.mrb[0].mxu0
      %v404 = vpop.f32.mrb[0].mxu0
      %v405 = vpop.f32.mrb[0].mxu0
      %406 = vdwg.mxu0
      %v407 = vpack.c.b16 %v308, %v308
      %v416 = vunpack.c.l.b16 %v284
      %v417 = vunpack.c.l.b16 %v285
      %v418 = vunpack.c.l.b16 %v286
      %v419 = vunpack.c.l.b16 %v287
      %v420 = vunpack.c.l.b16 %v288
      %v421 = vunpack.c.l.b16 %v289
      %v422 = vunpack.c.l.b16 %v290
      %v423 = vunpack.c.l.b16 %v291
      %v424 = vpack.c.b16 %v417, %v416
      %v425 = vpack.c.b16 %v419, %v418
      %v426 = vpack.c.b16 %v421, %v420
      %v427 = vpack.c.b16 %v423, %v422
      %v432 = vsel %vm352, %v310, 0
      %v435 = vsel %vm352, %v407, 0
      %437 = vmatprep.subr.bf16.mxu0 0
      %438 = vmatpush1.bf16.msra.mxu0 %v424
      %439 = vmatprep.subr.bf16.mxu0 0
      %440 = vmatpush1.bf16.msra.mxu0 %v425
      %441 = vmatprep.subr.bf16.mxu0 0
      %442 = vmatpush1.bf16.msra.mxu0 %v426
      %443 = vmatprep.subr.bf16.mxu0 0
      %444 = vmatpush1.bf16.msra.mxu0 %v427
      %445 = vmatprep.subr.bf16.mxu0 0
      %446 = vmatpush1.bf16.msra.mxu0 0
      %447 = vmatprep.subr.bf16.mxu0 0
      %448 = vmatpush1.bf16.msra.mxu0 0
      %449 = vmatprep.subr.bf16.mxu0 0
      %450 = vmatpush1.bf16.msra.mxu0 0
      %451 = vmatprep.subr.bf16.mxu0 0
      %452 = vmatpush1.bf16.msra.mxu0 0
      %453 = vmatprep.subr.bf16.mxu0 0
      %454 = vmatpush1.bf16.msra.mxu0 0
      %455 = vmatprep.subr.bf16.mxu0 0
      %456 = vmatpush1.bf16.msra.mxu0 0
      %457 = vmatprep.subr.bf16.mxu0 0
      %458 = vmatpush1.bf16.msra.mxu0 0
      %459 = vmatprep.subr.bf16.mxu0 0
      %460 = vmatpush1.bf16.msra.mxu0 0
      %461 = vmatprep.subr.bf16.mxu0 0
      %462 = vmatpush1.bf16.msra.mxu0 0
      %463 = vmatprep.subr.bf16.mxu0 0
      %464 = vmatpush1.bf16.msra.mxu0 0
      %465 = vmatprep.subr.bf16.mxu0 0
      %466 = vmatpush1.bf16.msra.mxu0 0
      %467 = vmatprep.subr.bf16.mxu0 0
      %468 = vmatpush1.bf16.msra.mxu0 0
      %469 = vmatprep.mubr.bf16.mxu0 0
      %470 = vmatmul.mubr.bf16.gmra.mrb[0].mxu0 %v432
      %v471 = vpop.f32.mrb[0].mxu0
      %v472 = vadd.f32 %v394, %v471
      %v473 = vpop.f32.mrb[0].mxu0
      %v474 = vpop.f32.mrb[0].mxu0
      %v475 = vadd.f32 %v397, %v474
      %v476 = vpop.f32.mrb[0].mxu0
      %477 = vmatprep.mubr.bf16.mxu0 0
      %478 = vmatmul.mubr.bf16.gmra.mrb[0].mxu0 %v435
      %v479 = vpop.f32.mrb[0].mxu0
      %v480 = vadd.f32 %v402, %v479
      %v481 = vpop.f32.mrb[0].mxu0
      %v482 = vpop.f32.mrb[0].mxu0
      %v483 = vpop.f32.mrb[0].mxu0
      %484 = vdwg.mxu0
      %v485 = vld [vmem:[%s219] sm:$0xe]
      %s486 = scalar_lea.vmem %s1, 64
      %v487 = vld [vmem:[%s486] sm:$0xf]
      %v488 = vld [vmem:[%s486 + $0x4] sm:$0xf]
      %v489 = vld [vmem:[%s486 + $0x8] sm:$0xf]
      %v490 = vld [vmem:[%s486 + $0xc] sm:$0xf]
      %v491 = vld [vmem:[%s486 + $0x10] sm:$0xf]
      %v492 = vld [vmem:[%s486 + $0x14] sm:$0xf]
      %v493 = vld [vmem:[%s486 + $0x18] sm:$0xf]
      %v494 = vld [vmem:[%s486 + $0x1c] sm:$0xf]
      %v496 = vunpack.c.l.b16 %v485
      %v497 = vpack.c.b16 %v307, %v496
      %vm498 = vcmask 1046528
      %v499 = vrot.slane %v497, 1
      %v500 = vrot.slane %v311, 1
      %v501 = vsel %vm498, %v499, %v500
      %v510 = vunpack.c.l.b16 %v487
      %v511 = vunpack.c.l.b16 %v488
      %v512 = vunpack.c.l.b16 %v489
      %v513 = vunpack.c.l.b16 %v490
      %v514 = vunpack.c.l.b16 %v491
      %v515 = vunpack.c.l.b16 %v492
      %v516 = vunpack.c.l.b16 %v493
      %v517 = vunpack.c.l.b16 %v494
      %v518 = vpack.c.b16 %v511, %v510
      %v519 = vpack.c.b16 %v513, %v512
      %v520 = vpack.c.b16 %v515, %v514
      %v521 = vpack.c.b16 %v517, %v516
      %v527 = vsel %vm352, %v501, 0
      %v530 = vsel %vm352, %v500, 0
      %532 = vmatprep.subr.bf16.mxu0 0
      %533 = vmatpush1.bf16.msra.mxu0 %v518
      %534 = vmatprep.subr.bf16.mxu0 0
      %535 = vmatpush1.bf16.msra.mxu0 %v519
      %536 = vmatprep.subr.bf16.mxu0 0
      %537 = vmatpush1.bf16.msra.mxu0 %v520
      %538 = vmatprep.subr.bf16.mxu0 0
      %539 = vmatpush1.bf16.msra.mxu0 %v521
      %540 = vmatprep.subr.bf16.mxu0 0
      %541 = vmatpush1.bf16.msra.mxu0 0
      %542 = vmatprep.subr.bf16.mxu0 0
      %543 = vmatpush1.bf16.msra.mxu0 0
      %544 = vmatprep.subr.bf16.mxu0 0
      %545 = vmatpush1.bf16.msra.mxu0 0
      %546 = vmatprep.subr.bf16.mxu0 0
      %547 = vmatpush1.bf16.msra.mxu0 0
      %548 = vmatprep.subr.bf16.mxu0 0
      %549 = vmatpush1.bf16.msra.mxu0 0
      %550 = vmatprep.subr.bf16.mxu0 0
      %551 = vmatpush1.bf16.msra.mxu0 0
      %552 = vmatprep.subr.bf16.mxu0 0
      %553 = vmatpush1.bf16.msra.mxu0 0
      %554 = vmatprep.subr.bf16.mxu0 0
      %555 = vmatpush1.bf16.msra.mxu0 0
      %556 = vmatprep.subr.bf16.mxu0 0
      %557 = vmatpush1.bf16.msra.mxu0 0
      %558 = vmatprep.subr.bf16.mxu0 0
      %559 = vmatpush1.bf16.msra.mxu0 0
      %560 = vmatprep.subr.bf16.mxu0 0
      %561 = vmatpush1.bf16.msra.mxu0 0
      %562 = vmatprep.subr.bf16.mxu0 0
      %563 = vmatpush1.bf16.msra.mxu0 0
      %564 = vmatprep.mubr.bf16.mxu0 0
      %565 = vmatmul.mubr.bf16.gmra.mrb[0].mxu0 %v527
      %v566 = vpop.f32.mrb[0].mxu0
      %v567 = vadd.f32 0.0, %v566
      %v568 = vpop.f32.mrb[0].mxu0
      %v569 = vpop.f32.mrb[0].mxu0
      %v570 = vadd.f32 0.0, %v569
      %v571 = vpop.f32.mrb[0].mxu0
      %572 = vmatprep.mubr.bf16.mxu0 0
      %573 = vmatmul.mubr.bf16.gmra.mrb[0].mxu0 %v530
      %v574 = vpop.f32.mrb[0].mxu0
      %v575 = vadd.f32 0.0, %v574
      %v576 = vpop.f32.mrb[0].mxu0
      %v577 = vpop.f32.mrb[0].mxu0
      %v578 = vpop.f32.mrb[0].mxu0
      %579 = vdwg.mxu0
      %v580 = vadd.f32 %v472, %v567
      %v581 = vadd.f32 %v475, %v570
      %v582 = vadd.f32 %v480, %v575
      %v583 = vld [vmem:[%s219] sm:$0x8]
      %v584 = vld [vmem:[%s219 + $0xc] sm:$0x7]
      %s585 = scalar_lea.vmem %s1, 96
      %v586 = vld [vmem:[%s585] sm:$0xf]
      %v587 = vld [vmem:[%s585 + $0x4] sm:$0xf]
      %v588 = vld [vmem:[%s585 + $0x8] sm:$0xf]
      %v589 = vld [vmem:[%s585 + $0xc] sm:$0xf]
      %v590 = vld [vmem:[%s585 + $0x10] sm:$0xf]
      %v591 = vld [vmem:[%s585 + $0x14] sm:$0xf]
      %v592 = vld [vmem:[%s585 + $0x18] sm:$0xf]
      %v593 = vld [vmem:[%s585 + $0x1c] sm:$0xf]
      %v596 = vunpack.c.l.b16 %v583
      %v597 = vunpack.c.l.b16 %v584
      %v598 = vpack.c.b16 %v307, %v596
      %v599 = vpack.c.b16 %v597, %v308
      %vm600 = vcmask 1044480
      %v601 = vrot.slane %v598, 3
      %v602 = vrot.slane %v599, 3
      %v603 = vsel %vm600, %v601, %v602
      %v612 = vunpack.c.l.b16 %v586
      %v613 = vunpack.c.l.b16 %v587
      %v614 = vunpack.c.l.b16 %v588
      %v615 = vunpack.c.l.b16 %v589
      %v616 = vunpack.c.l.b16 %v590
      %v617 = vunpack.c.l.b16 %v591
      %v618 = vunpack.c.l.b16 %v592
      %v619 = vunpack.c.l.b16 %v593
      %v620 = vpack.c.b16 %v613, %v612
      %v621 = vpack.c.b16 %v615, %v614
      %v622 = vpack.c.b16 %v617, %v616
      %v623 = vpack.c.b16 %v619, %v618
      %v629 = vsel %vm352, %v603, 0
      %v632 = vsel %vm352, %v602, 0
      %634 = vmatprep.subr.bf16.mxu0 0
      %635 = vmatpush1.bf16.msra.mxu0 %v620
      %636 = vmatprep.subr.bf16.mxu0 0
      %637 = vmatpush1.bf16.msra.mxu0 %v621
      %638 = vmatprep.subr.bf16.mxu0 0
      %639 = vmatpush1.bf16.msra.mxu0 %v622
      %640 = vmatprep.subr.bf16.mxu0 0
      %641 = vmatpush1.bf16.msra.mxu0 %v623
      %642 = vmatprep.subr.bf16.mxu0 0
      %643 = vmatpush1.bf16.msra.mxu0 0
      %644 = vmatprep.subr.bf16.mxu0 0
      %645 = vmatpush1.bf16.msra.mxu0 0
      %646 = vmatprep.subr.bf16.mxu0 0
      %647 = vmatpush1.bf16.msra.mxu0 0
      %648 = vmatprep.subr.bf16.mxu0 0
      %649 = vmatpush1.bf16.msra.mxu0 0
      %650 = vmatprep.subr.bf16.mxu0 0
      %651 = vmatpush1.bf16.msra.mxu0 0
      %652 = vmatprep.subr.bf16.mxu0 0
      %653 = vmatpush1.bf16.msra.mxu0 0
      %654 = vmatprep.subr.bf16.mxu0 0
      %655 = vmatpush1.bf16.msra.mxu0 0
      %656 = vmatprep.subr.bf16.mxu0 0
      %657 = vmatpush1.bf16.msra.mxu0 0
      %658 = vmatprep.subr.bf16.mxu0 0
      %659 = vmatpush1.bf16.msra.mxu0 0
      %660 = vmatprep.subr.bf16.mxu0 0
      %661 = vmatpush1.bf16.msra.mxu0 0
      %662 = vmatprep.subr.bf16.mxu0 0
      %663 = vmatpush1.bf16.msra.mxu0 0
      %664 = vmatprep.subr.bf16.mxu0 0
      %665 = vmatpush1.bf16.msra.mxu0 0
      %666 = vmatprep.mubr.bf16.mxu0 0
      %667 = vmatmul.mubr.bf16.gmra.mrb[0].mxu0 %v629
      %v668 = vpop.f32.mrb[0].mxu0
      %v669 = vadd.f32 0.0, %v668
      %v670 = vpop.f32.mrb[0].mxu0
      %v671 = vpop.f32.mrb[0].mxu0
      %v672 = vadd.f32 0.0, %v671
      %v673 = vpop.f32.mrb[0].mxu0
      %674 = vmatprep.mubr.bf16.mxu0 0
      %675 = vmatmul.mubr.bf16.gmra.mrb[0].mxu0 %v632
      %v676 = vpop.f32.mrb[0].mxu0
      %v677 = vadd.f32 0.0, %v676
      %v678 = vpop.f32.mrb[0].mxu0
      %v679 = vpop.f32.mrb[0].mxu0
      %v680 = vpop.f32.mrb[0].mxu0
      %681 = vdwg.mxu0
      %v682 = vadd.f32 %v580, %v669
      %v683 = vadd.f32 %v581, %v672
      %v684 = vadd.f32 %v582, %v677
      %v685 = vld [vmem:[%s219 + $0xc] sm:$0xf]
      %s686 = scalar_lea.vmem %s1, 128
      %v687 = vld [vmem:[%s686] sm:$0xf]
      %v688 = vld [vmem:[%s686 + $0x4] sm:$0xf]
      %v689 = vld [vmem:[%s686 + $0x8] sm:$0xf]
      %v690 = vld [vmem:[%s686 + $0xc] sm:$0xf]
      %v691 = vld [vmem:[%s686 + $0x10] sm:$0xf]
      %v692 = vld [vmem:[%s686 + $0x14] sm:$0xf]
      %v693 = vld [vmem:[%s686 + $0x18] sm:$0xf]
      %v694 = vld [vmem:[%s686 + $0x1c] sm:$0xf]
      %v696 = vunpack.c.l.b16 %v685
      %v697 = vpack.c.b16 %v696, %v308
      %vm698 = vsmask.f32 4352
      %v700 = vshrl.u32 %v598, 16
      %v702 = vrot.slane %v700, 3
      %v703 = vshll.u32 %v598, 16
      %v705 = vrot.slane %v703, 4
      %v706 = vor.u32 %v702, %v705
      %v708 = vshrl.u32 %v697, 16
      %v710 = vrot.slane %v708, 3
      %v711 = vshll.u32 %v697, 16
      %v713 = vrot.slane %v711, 4
      %v714 = vor.u32 %v710, %v713
      %v715 = vsel %vm698, %v706, %v714
      %v724 = vunpack.c.l.b16 %v687
      %v725 = vunpack.c.l.b16 %v688
      %v726 = vunpack.c.l.b16 %v689
      %v727 = vunpack.c.l.b16 %v690
      %v728 = vunpack.c.l.b16 %v691
      %v729 = vunpack.c.l.b16 %v692
      %v730 = vunpack.c.l.b16 %v693
      %v731 = vunpack.c.l.b16 %v694
      %v732 = vpack.c.b16 %v725, %v724
      %v733 = vpack.c.b16 %v727, %v726
      %v734 = vpack.c.b16 %v729, %v728
      %v735 = vpack.c.b16 %v731, %v730
      %v741 = vsel %vm352, %v715, 0
      %v744 = vsel %vm352, %v714, 0
      %746 = vmatprep.subr.bf16.mxu0 0
      %747 = vmatpush1.bf16.msra.mxu0 %v732
      %748 = vmatprep.subr.bf16.mxu0 0
      %749 = vmatpush1.bf16.msra.mxu0 %v733
      %750 = vmatprep.subr.bf16.mxu0 0
      %751 = vmatpush1.bf16.msra.mxu0 %v734
      %752 = vmatprep.subr.bf16.mxu0 0
      %753 = vmatpush1.bf16.msra.mxu0 %v735
      %754 = vmatprep.subr.bf16.mxu0 0
      %755 = vmatpush1.bf16.msra.mxu0 0
      %756 = vmatprep.subr.bf16.mxu0 0
      %757 = vmatpush1.bf16.msra.mxu0 0
      %758 = vmatprep.subr.bf16.mxu0 0
      %759 = vmatpush1.bf16.msra.mxu0 0
      %760 = vmatprep.subr.bf16.mxu0 0
      %761 = vmatpush1.bf16.msra.mxu0 0
      %762 = vmatprep.subr.bf16.mxu0 0
      %763 = vmatpush1.bf16.msra.mxu0 0
      %764 = vmatprep.subr.bf16.mxu0 0
      %765 = vmatpush1.bf16.msra.mxu0 0
      %766 = vmatprep.subr.bf16.mxu0 0
      %767 = vmatpush1.bf16.msra.mxu0 0
      %768 = vmatprep.subr.bf16.mxu0 0
      %769 = vmatpush1.bf16.msra.mxu0 0
      %770 = vmatprep.subr.bf16.mxu0 0
      %771 = vmatpush1.bf16.msra.mxu0 0
      %772 = vmatprep.subr.bf16.mxu0 0
      %773 = vmatpush1.bf16.msra.mxu0 0
      %774 = vmatprep.subr.bf16.mxu0 0
      %775 = vmatpush1.bf16.msra.mxu0 0
      %776 = vmatprep.subr.bf16.mxu0 0
      %777 = vmatpush1.bf16.msra.mxu0 0
      %778 = vmatprep.mubr.bf16.mxu0 0
      %779 = vmatmul.mubr.bf16.gmra.mrb[0].mxu0 %v741
      %v780 = vpop.f32.mrb[0].mxu0
      %v781 = vadd.f32 0.0, %v780
      %v782 = vpop.f32.mrb[0].mxu0
      %v783 = vpop.f32.mrb[0].mxu0
      %v784 = vadd.f32 0.0, %v783
      %v785 = vpop.f32.mrb[0].mxu0
      %786 = vmatprep.mubr.bf16.mxu0 0
      %787 = vmatmul.mubr.bf16.gmra.mrb[0].mxu0 %v744
      %v788 = vpop.f32.mrb[0].mxu0
      %v789 = vadd.f32 0.0, %v788
      %v790 = vpop.f32.mrb[0].mxu0
      %v791 = vpop.f32.mrb[0].mxu0
      %v792 = vpop.f32.mrb[0].mxu0
      %793 = vdwg.mxu0
      %v794 = vadd.f32 %v682, %v781
      %v795 = vadd.f32 %v683, %v784
      %v796 = vadd.f32 %v684, %v789
      %s797 = scalar_lea.vmem %s1, 160
      %v798 = vld [vmem:[%s797] sm:$0xf]
      %v799 = vld [vmem:[%s797 + $0x4] sm:$0xf]
      %v800 = vld [vmem:[%s797 + $0x8] sm:$0xf]
      %v801 = vld [vmem:[%s797 + $0xc] sm:$0xf]
      %v802 = vld [vmem:[%s797 + $0x10] sm:$0xf]
      %v803 = vld [vmem:[%s797 + $0x14] sm:$0xf]
      %v804 = vld [vmem:[%s797 + $0x18] sm:$0xf]
      %v805 = vld [vmem:[%s797 + $0x1c] sm:$0xf]
      %v806 = vpack.c.b16 %v308, %v307
      %v807 = vpack.c.b16 %v696, %v696
      %v816 = vunpack.c.l.b16 %v798
      %v817 = vunpack.c.l.b16 %v799
      %v818 = vunpack.c.l.b16 %v800
      %v819 = vunpack.c.l.b16 %v801
      %v820 = vunpack.c.l.b16 %v802
      %v821 = vunpack.c.l.b16 %v803
      %v822 = vunpack.c.l.b16 %v804
      %v823 = vunpack.c.l.b16 %v805
      %v824 = vpack.c.b16 %v817, %v816
      %v825 = vpack.c.b16 %v819, %v818
      %v826 = vpack.c.b16 %v821, %v820
      %v827 = vpack.c.b16 %v823, %v822
      %v833 = vsel %vm352, %v806, 0
      %v836 = vsel %vm352, %v807, 0
      %838 = vmatprep.subr.bf16.mxu0 0
      %839 = vmatpush1.bf16.msra.mxu0 %v824
      %840 = vmatprep.subr.bf16.mxu0 0
      %841 = vmatpush1.bf16.msra.mxu0 %v825
      %842 = vmatprep.subr.bf16.mxu0 0
      %843 = vmatpush1.bf16.msra.mxu0 %v826
      %844 = vmatprep.subr.bf16.mxu0 0
      %845 = vmatpush1.bf16.msra.mxu0 %v827
      %846 = vmatprep.subr.bf16.mxu0 0
      %847 = vmatpush1.bf16.msra.mxu0 0
      %848 = vmatprep.subr.bf16.mxu0 0
      %849 = vmatpush1.bf16.msra.mxu0 0
      %850 = vmatprep.subr.bf16.mxu0 0
      %851 = vmatpush1.bf16.msra.mxu0 0
      %852 = vmatprep.subr.bf16.mxu0 0
      %853 = vmatpush1.bf16.msra.mxu0 0
      %854 = vmatprep.subr.bf16.mxu0 0
      %855 = vmatpush1.bf16.msra.mxu0 0
      %856 = vmatprep.subr.bf16.mxu0 0
      %857 = vmatpush1.bf16.msra.mxu0 0
      %858 = vmatprep.subr.bf16.mxu0 0
      %859 = vmatpush1.bf16.msra.mxu0 0
      %860 = vmatprep.subr.bf16.mxu0 0
      %861 = vmatpush1.bf16.msra.mxu0 0
      %862 = vmatprep.subr.bf16.mxu0 0
      %863 = vmatpush1.bf16.msra.mxu0 0
      %864 = vmatprep.subr.bf16.mxu0 0
      %865 = vmatpush1.bf16.msra.mxu0 0
      %866 = vmatprep.subr.bf16.mxu0 0
      %867 = vmatpush1.bf16.msra.mxu0 0
      %868 = vmatprep.subr.bf16.mxu0 0
      %869 = vmatpush1.bf16.msra.mxu0 0
      %870 = vmatprep.mubr.bf16.mxu0 0
      %871 = vmatmul.mubr.bf16.gmra.mrb[0].mxu0 %v833
      %v872 = vpop.f32.mrb[0].mxu0
      %v873 = vadd.f32 0.0, %v872
      %v874 = vpop.f32.mrb[0].mxu0
      %v875 = vpop.f32.mrb[0].mxu0
      %v876 = vadd.f32 0.0, %v875
      %v877 = vpop.f32.mrb[0].mxu0
      %878 = vmatprep.mubr.bf16.mxu0 0
      %879 = vmatmul.mubr.bf16.gmra.mrb[0].mxu0 %v836
      %v880 = vpop.f32.mrb[0].mxu0
      %v881 = vadd.f32 0.0, %v880
      %v882 = vpop.f32.mrb[0].mxu0
      %v883 = vpop.f32.mrb[0].mxu0
      %v884 = vpop.f32.mrb[0].mxu0
      %885 = vdwg.mxu0
      %v886 = vadd.f32 %v794, %v873
      %v887 = vadd.f32 %v795, %v876
      %v888 = vadd.f32 %v796, %v881
      %v889 = vld [vmem:[%s219 + $0x4] sm:$0xc]
      %v890 = vld [vmem:[%s219 + $0x8] sm:$0xf]
      %v891 = vld [vmem:[%s219 + $0xc] sm:$0xf]
      %v892 = vld [vmem:[%s219 + $0x10] sm:$0x3]
      %s893 = scalar_lea.vmem %s1, 192
      %v894 = vld [vmem:[%s893] sm:$0xf]
      %v895 = vld [vmem:[%s893 + $0x4] sm:$0xf]
      %v896 = vld [vmem:[%s893 + $0x8] sm:$0xf]
      %v897 = vld [vmem:[%s893 + $0xc] sm:$0xf]
      %v898 = vld [vmem:[%s893 + $0x10] sm:$0xf]
      %v899 = vld [vmem:[%s893 + $0x14] sm:$0xf]
      %v900 = vld [vmem:[%s893 + $0x18] sm:$0xf]
      %v901 = vld [vmem:[%s893 + $0x1c] sm:$0xf]
      %v906 = vunpack.c.l.b16 %v889
      %v907 = vunpack.c.l.b16 %v890
      %v908 = vunpack.c.l.b16 %v891
      %v909 = vunpack.c.l.b16 %v892
      %v910 = vpack.c.b16 %v907, %v906
      %v911 = vpack.c.b16 %v909, %v908
      %vm912 = vcmask 1045504
      %v913 = vrot.slane %v910, 2
      %v914 = vrot.slane %v911, 2
      %v915 = vsel %vm912, %v913, %v914
      %v924 = vunpack.c.l.b16 %v894
      %v925 = vunpack.c.l.b16 %v895
      %v926 = vunpack.c.l.b16 %v896
      %v927 = vunpack.c.l.b16 %v897
      %v928 = vunpack.c.l.b16 %v898
      %v929 = vunpack.c.l.b16 %v899
      %v930 = vunpack.c.l.b16 %v900
      %v931 = vunpack.c.l.b16 %v901
      %v932 = vpack.c.b16 %v925, %v924
      %v933 = vpack.c.b16 %v927, %v926
      %v934 = vpack.c.b16 %v929, %v928
      %v935 = vpack.c.b16 %v931, %v930
      %v941 = vsel %vm352, %v915, 0
      %v944 = vsel %vm352, %v914, 0
      %946 = vmatprep.subr.bf16.mxu0 0
      %947 = vmatpush1.bf16.msra.mxu0 %v932
      %948 = vmatprep.subr.bf16.mxu0 0
      %949 = vmatpush1.bf16.msra.mxu0 %v933
      %950 = vmatprep.subr.bf16.mxu0 0
      %951 = vmatpush1.bf16.msra.mxu0 %v934
      %952 = vmatprep.subr.bf16.mxu0 0
      %953 = vmatpush1.bf16.msra.mxu0 %v935
      %954 = vmatprep.subr.bf16.mxu0 0
      %955 = vmatpush1.bf16.msra.mxu0 0
      %956 = vmatprep.subr.bf16.mxu0 0
      %957 = vmatpush1.bf16.msra.mxu0 0
      %958 = vmatprep.subr.bf16.mxu0 0
      %959 = vmatpush1.bf16.msra.mxu0 0
      %960 = vmatprep.subr.bf16.mxu0 0
      %961 = vmatpush1.bf16.msra.mxu0 0
      %962 = vmatprep.subr.bf16.mxu0 0
      %963 = vmatpush1.bf16.msra.mxu0 0
      %964 = vmatprep.subr.bf16.mxu0 0
      %965 = vmatpush1.bf16.msra.mxu0 0
      %966 = vmatprep.subr.bf16.mxu0 0
      %967 = vmatpush1.bf16.msra.mxu0 0
      %968 = vmatprep.subr.bf16.mxu0 0
      %969 = vmatpush1.bf16.msra.mxu0 0
      %970 = vmatprep.subr.bf16.mxu0 0
      %971 = vmatpush1.bf16.msra.mxu0 0
      %972 = vmatprep.subr.bf16.mxu0 0
      %973 = vmatpush1.bf16.msra.mxu0 0
      %974 = vmatprep.subr.bf16.mxu0 0
      %975 = vmatpush1.bf16.msra.mxu0 0
      %976 = vmatprep.subr.bf16.mxu0 0
      %977 = vmatpush1.bf16.msra.mxu0 0
      %978 = vmatprep.mubr.bf16.mxu0 0
      %979 = vmatmul.mubr.bf16.gmra.mrb[0].mxu0 %v941
      %v980 = vpop.f32.mrb[0].mxu0
      %v981 = vadd.f32 0.0, %v980
      %v982 = vpop.f32.mrb[0].mxu0
      %v983 = vpop.f32.mrb[0].mxu0
      %v984 = vadd.f32 0.0, %v983
      %v985 = vpop.f32.mrb[0].mxu0
      %986 = vmatprep.mubr.bf16.mxu0 0
      %987 = vmatmul.mubr.bf16.gmra.mrb[0].mxu0 %v944
      %v988 = vpop.f32.mrb[0].mxu0
      %v989 = vadd.f32 0.0, %v988
      %v990 = vpop.f32.mrb[0].mxu0
      %v991 = vpop.f32.mrb[0].mxu0
      %v992 = vpop.f32.mrb[0].mxu0
      %993 = vdwg.mxu0
      %v994 = vadd.f32 %v886, %v981
      %v995 = vadd.f32 %v887, %v984
      %v996 = vadd.f32 %v888, %v989
      %v997 = vld [vmem:[%s219 + $0x10] sm:$0x7]
      %s998 = scalar_lea.vmem %s1, 224
      %v999 = vld [vmem:[%s998] sm:$0xf]
      %v1000 = vld [vmem:[%s998 + $0x4] sm:$0xf]
      %v1001 = vld [vmem:[%s998 + $0x8] sm:$0xf]
      %v1002 = vld [vmem:[%s998 + $0xc] sm:$0xf]
      %v1003 = vld [vmem:[%s998 + $0x10] sm:$0xf]
      %v1004 = vld [vmem:[%s998 + $0x14] sm:$0xf]
      %v1005 = vld [vmem:[%s998 + $0x18] sm:$0xf]
      %v1006 = vld [vmem:[%s998 + $0x1c] sm:$0xf]
      %v1008 = vunpack.c.l.b16 %v997
      %v1009 = vpack.c.b16 %v1008, %v908
      %vm1010 = vsmask.f32 5376
      %v1012 = vshrl.u32 %v910, 16
      %v1014 = vrot.slane %v1012, 2
      %v1015 = vshll.u32 %v910, 16
      %v1017 = vrot.slane %v1015, 3
      %v1018 = vor.u32 %v1014, %v1017
      %v1020 = vshrl.u32 %v1009, 16
      %v1022 = vrot.slane %v1020, 2
      %v1023 = vshll.u32 %v1009, 16
      %v1025 = vrot.slane %v1023, 3
      %v1026 = vor.u32 %v1022, %v1025
      %v1027 = vsel %vm1010, %v1018, %v1026
      %v1036 = vunpack.c.l.b16 %v999
      %v1037 = vunpack.c.l.b16 %v1000
      %v1038 = vunpack.c.l.b16 %v1001
      %v1039 = vunpack.c.l.b16 %v1002
      %v1040 = vunpack.c.l.b16 %v1003
      %v1041 = vunpack.c.l.b16 %v1004
      %v1042 = vunpack.c.l.b16 %v1005
      %v1043 = vunpack.c.l.b16 %v1006
      %v1044 = vpack.c.b16 %v1037, %v1036
      %v1045 = vpack.c.b16 %v1039, %v1038
      %v1046 = vpack.c.b16 %v1041, %v1040
      %v1047 = vpack.c.b16 %v1043, %v1042
      %v1053 = vsel %vm352, %v1027, 0
      %v1056 = vsel %vm352, %v1026, 0
      %1058 = vmatprep.subr.bf16.mxu0 0
      %1059 = vmatpush1.bf16.msra.mxu0 %v1044
      %1060 = vmatprep.subr.bf16.mxu0 0
      %1061 = vmatpush1.bf16.msra.mxu0 %v1045
      %1062 = vmatprep.subr.bf16.mxu0 0
      %1063 = vmatpush1.bf16.msra.mxu0 %v1046
      %1064 = vmatprep.subr.bf16.mxu0 0
      %1065 = vmatpush1.bf16.msra.mxu0 %v1047
      %1066 = vmatprep.subr.bf16.mxu0 0
      %1067 = vmatpush1.bf16.msra.mxu0 0
      %1068 = vmatprep.subr.bf16.mxu0 0
      %1069 = vmatpush1.bf16.msra.mxu0 0
      %1070 = vmatprep.subr.bf16.mxu0 0
      %1071 = vmatpush1.bf16.msra.mxu0 0
      %1072 = vmatprep.subr.bf16.mxu0 0
      %1073 = vmatpush1.bf16.msra.mxu0 0
      %1074 = vmatprep.subr.bf16.mxu0 0
      %1075 = vmatpush1.bf16.msra.mxu0 0
      %1076 = vmatprep.subr.bf16.mxu0 0
      %1077 = vmatpush1.bf16.msra.mxu0 0
      %1078 = vmatprep.subr.bf16.mxu0 0
      %1079 = vmatpush1.bf16.msra.mxu0 0
      %1080 = vmatprep.subr.bf16.mxu0 0
      %1081 = vmatpush1.bf16.msra.mxu0 0
      %1082 = vmatprep.subr.bf16.mxu0 0
      %1083 = vmatpush1.bf16.msra.mxu0 0
      %1084 = vmatprep.subr.bf16.mxu0 0
      %1085 = vmatpush1.bf16.msra.mxu0 0
      %1086 = vmatprep.subr.bf16.mxu0 0
      %1087 = vmatpush1.bf16.msra.mxu0 0
      %1088 = vmatprep.subr.bf16.mxu0 0
      %1089 = vmatpush1.bf16.msra.mxu0 0
      %1090 = vmatprep.mubr.bf16.mxu0 0
      %1091 = vmatmul.mubr.bf16.gmra.mrb[0].mxu0 %v1053
      %v1092 = vpop.f32.mrb[0].mxu0
      %v1093 = vadd.f32 0.0, %v1092
      %v1094 = vpop.f32.mrb[0].mxu0
      %v1095 = vpop.f32.mrb[0].mxu0
      %v1096 = vadd.f32 0.0, %v1095
      %v1097 = vpop.f32.mrb[0].mxu0
      %1098 = vmatprep.mubr.bf16.mxu0 0
      %1099 = vmatmul.mubr.bf16.gmra.mrb[0].mxu0 %v1056
      %v1100 = vpop.f32.mrb[0].mxu0
      %v1101 = vadd.f32 0.0, %v1100
      %v1102 = vpop.f32.mrb[0].mxu0
      %v1103 = vpop.f32.mrb[0].mxu0
      %v1104 = vpop.f32.mrb[0].mxu0
      %1105 = vdwg.mxu0
      %v1106 = vadd.f32 %v994, %v1093
      %v1107 = vadd.f32 %v995, %v1096
      %v1108 = vadd.f32 %v996, %v1101
      %v1109 = vld [vmem:[%s219 + $0x4] sm:$0x8]
      %s1110 = scalar_lea.vmem %s1, 256
      %v1111 = vld [vmem:[%s1110] sm:$0xf]
      %v1112 = vld [vmem:[%s1110 + $0x4] sm:$0xf]
      %v1113 = vld [vmem:[%s1110 + $0x8] sm:$0xf]
      %v1114 = vld [vmem:[%s1110 + $0xc] sm:$0xf]
      %v1115 = vld [vmem:[%s1110 + $0x10] sm:$0xf]
      %v1116 = vld [vmem:[%s1110 + $0x14] sm:$0xf]
      %v1117 = vld [vmem:[%s1110 + $0x18] sm:$0xf]
      %v1118 = vld [vmem:[%s1110 + $0x1c] sm:$0xf]
      %v1120 = vunpack.c.l.b16 %v1109
      %v1121 = vpack.c.b16 %v907, %v1120
      %v1122 = vrot.slane %v1121, 3
      %v1123 = vrot.slane %v1009, 3
      %v1124 = vsel %vm600, %v1122, %v1123
      %v1133 = vunpack.c.l.b16 %v1111
      %v1134 = vunpack.c.l.b16 %v1112
      %v1135 = vunpack.c.l.b16 %v1113
      %v1136 = vunpack.c.l.b16 %v1114
      %v1137 = vunpack.c.l.b16 %v1115
      %v1138 = vunpack.c.l.b16 %v1116
      %v1139 = vunpack.c.l.b16 %v1117
      %v1140 = vunpack.c.l.b16 %v1118
      %v1141 = vpack.c.b16 %v1134, %v1133
      %v1142 = vpack.c.b16 %v1136, %v1135
      %v1143 = vpack.c.b16 %v1138, %v1137
      %v1144 = vpack.c.b16 %v1140, %v1139
      %v1150 = vsel %vm352, %v1124, 0
      %v1153 = vsel %vm352, %v1123, 0
      %1155 = vmatprep.subr.bf16.mxu0 0
      %1156 = vmatpush1.bf16.msra.mxu0 %v1141
      %1157 = vmatprep.subr.bf16.mxu0 0
      %1158 = vmatpush1.bf16.msra.mxu0 %v1142
      %1159 = vmatprep.subr.bf16.mxu0 0
      %1160 = vmatpush1.bf16.msra.mxu0 %v1143
      %1161 = vmatprep.subr.bf16.mxu0 0
      %1162 = vmatpush1.bf16.msra.mxu0 %v1144
      %1163 = vmatprep.subr.bf16.mxu0 0
      %1164 = vmatpush1.bf16.msra.mxu0 0
      %1165 = vmatprep.subr.bf16.mxu0 0
      %1166 = vmatpush1.bf16.msra.mxu0 0
      %1167 = vmatprep.subr.bf16.mxu0 0
      %1168 = vmatpush1.bf16.msra.mxu0 0
      %1169 = vmatprep.subr.bf16.mxu0 0
      %1170 = vmatpush1.bf16.msra.mxu0 0
      %1171 = vmatprep.subr.bf16.mxu0 0
      %1172 = vmatpush1.bf16.msra.mxu0 0
      %1173 = vmatprep.subr.bf16.mxu0 0
      %1174 = vmatpush1.bf16.msra.mxu0 0
      %1175 = vmatprep.subr.bf16.mxu0 0
      %1176 = vmatpush1.bf16.msra.mxu0 0
      %1177 = vmatprep.subr.bf16.mxu0 0
      %1178 = vmatpush1.bf16.msra.mxu0 0
      %1179 = vmatprep.subr.bf16.mxu0 0
      %1180 = vmatpush1.bf16.msra.mxu0 0
      %1181 = vmatprep.subr.bf16.mxu0 0
      %1182 = vmatpush1.bf16.msra.mxu0 0
      %1183 = vmatprep.subr.bf16.mxu0 0
      %1184 = vmatpush1.bf16.msra.mxu0 0
      %1185 = vmatprep.subr.bf16.mxu0 0
      %1186 = vmatpush1.bf16.msra.mxu0 0
      %1187 = vmatprep.mubr.bf16.mxu0 0
      %1188 = vmatmul.mubr.bf16.gmra.mrb[0].mxu0 %v1150
      %v1189 = vpop.f32.mrb[0].mxu0
      %v1190 = vadd.f32 0.0, %v1189
      %v1191 = vpop.f32.mrb[0].mxu0
      %v1192 = vpop.f32.mrb[0].mxu0
      %v1193 = vadd.f32 0.0, %v1192
      %v1194 = vpop.f32.mrb[0].mxu0
      %1195 = vmatprep.mubr.bf16.mxu0 0
      %1196 = vmatmul.mubr.bf16.gmra.mrb[0].mxu0 %v1153
      %v1197 = vpop.f32.mrb[0].mxu0
      %v1198 = vadd.f32 0.0, %v1197
      %v1199 = vpop.f32.mrb[0].mxu0
      %v1200 = vpop.f32.mrb[0].mxu0
      %v1201 = vpop.f32.mrb[0].mxu0
      %1202 = vdwg.mxu0
      %v1203 = vadd.f32 %v1106, %v1190
      %v1204 = vadd.f32 %v1107, %v1193
      %v1205 = vadd.f32 %v1108, %v1198
      %v1206 = vld [vmem:[%s2] sm:$0x1]
      %v1208 = vlaneseq
      %v1209 = vshrl.u32 %v1208, 7
      %v1210 = vsub.s32 0, %v1209
      %v1211 = vrot.slane %v1206, %v1210
      %v1213 = vadd.f32 %v1203, %v1211
      %v1214 = vadd.f32 %v1204, %v1211
      %v1215 = vadd.f32 %v1205, %v1211
      %v1216 = vmax.f32 %v1213, 0.0
      %v1217 = vmax.f32 %v1214, 0.0
      %v1218 = vmax.f32 %v1215, 0.0
      %v1219 = vsel %vm278, 1, 0
      %v1220 = vsel %vm279, 1, 0
      %v1221 = vsel %vm280, 1, 0
      %vm1222 = vcmp.eq.s32.totalorder %v1219, 1
      %vm1223 = vcmp.eq.s32.totalorder %v1220, 1
      %vm1224 = vcmp.eq.s32.totalorder %v1221, 1
      %v1225 = vsel %vm1222, %v1216, 0.0
      %v1226 = vsel %vm1223, %v1217, 0.0
      %v1227 = vsel %vm1224, %v1218, 0.0
      %vm1228 = vcmask 519168
      %vm1229 = vsmask.f32 3328
      %vm1230 = vmand %vm1228, %vm1229
      %v1231 = vld [vmem:[#allocation2] sm:$0xf]
      %v1232 = vsel %vm1230, 0, %v1231
      %1233 = vst [vmem:[#allocation2] sm:$0xf] %v1232
      %v1234 = vpack.c.bf16 %v1226, %v1225
      %v1235 = vpack.c.bf16 %v1227, %v1227
      %v1238 = vunpack.c.l.b16 %v1234
      %v1239 = vunpack.c.h.b16 %v1234
      %v1240 = vunpack.c.l.b16 %v1235
      %v1241 = vpack.c.b16 %v1238, %v1238
      %v1242 = vpack.c.b16 %v1239, %v1239
      %v1243 = vpack.c.b16 %v1240, %v1240
      %vm1244 = vsmask.f32 7440
      %vm1245 = vmor %vm1229, %vm1244
      %v1247 = vshll.u32 %v1241, 16
      %v1249 = vrot.slane %v1247, 5
      %v1250 = vshrl.u32 %v1241, 16
      %v1252 = vrot.slane %v1250, 4
      %v1253 = vor.u32 %v1252, %v1249
      %v1254 = vrot.slane %v1253, 4
      %v1256 = vshll.u32 %v1242, 16
      %v1258 = vrot.slane %v1256, 5
      %v1259 = vsel %vm1245, %v1254, %v1258
      %v1260 = vshrl.u32 %v1242, 16
      %v1262 = vrot.slane %v1260, 4
      %v1263 = vor.u32 %v1262, %v1258
      %v1264 = vrot.slane %v1263, 4
      %v1266 = vshll.u32 %v1243, 16
      %v1268 = vrot.slane %v1266, 5
      %v1269 = vsel %vm1245, %v1264, %v1268
      %v1270 = vshrl.u32 %v1243, 16
      %v1272 = vrot.slane %v1270, 4
      %v1273 = vor.u32 %v1272, %v1268
      %v1274 = vrot.slane %v1273, 4
      %vm1279 = vcmask 519171
      %vm1280 = vsmask.f32 7950
      %vm1281 = vmand %vm1279, %vm1280
      %v1282 = vld [vmem:[#allocation2] sm:$0x8]
      %v1283 = vsel %vm1281, %v1249, %v1282
      %1284 = vst [vmem:[#allocation2] sm:$0x8] %v1283
      %vm1285 = vcmask 519168
      %1286 = vst.msk [vmem:[#allocation2 + $0x4] sm:$0xf] %vm1285, %v1259
      %1287 = vst.msk [vmem:[#allocation2 + $0x8] sm:$0xf] %vm1285, %v1269
      %v1288 = vld [vmem:[#allocation2 + $0xc] sm:$0xf]
      %v1289 = vsel %vm1230, %v1274, %v1288
      %1290 = vst [vmem:[#allocation2 + $0xc] sm:$0xf] %v1289
      %v1291 = vld [vmem:[#allocation2 + $0xc] sm:$0x8]
      %v1292 = vsel %vm1281, 0, %v1291
      %1293 = vst [vmem:[#allocation2 + $0xc] sm:$0x8] %v1292
      %1294 = vst.msk [vmem:[#allocation2 + $0x10] sm:$0xf] %vm1285, 0
      %v1295 = vld [vmem:[%s219] sm:$0x8]
      %v1296 = vld [vmem:[%s219 + $0x4] sm:$0xf]
      %v1297 = vld [vmem:[%s219 + $0x8] sm:$0xf]
      %v1298 = vld [vmem:[%s219 + $0xc] sm:$0xf]
      %v1299 = vunpack.c.l.bf16 %v1295
      %v1300 = vunpack.c.l.bf16 %v1296
      %v1301 = vunpack.c.l.bf16 %v1297
      %v1302 = vunpack.c.l.bf16 %v1298
      %v1303 = vld [vmem:[#allocation2] sm:$0xf]
      %v1304 = vld [vmem:[#allocation2 + $0x4] sm:$0xf]
      %v1305 = vld [vmem:[#allocation2 + $0x8] sm:$0xf]
      %v1306 = vld [vmem:[%s3] sm:$0xf]
      %v1307 = vld [vmem:[%s3 + $0x4] sm:$0xf]
      %v1308 = vld [vmem:[%s3 + $0x8] sm:$0xf]
      %v1309 = vld [vmem:[%s3 + $0xc] sm:$0xf]
      %v1310 = vld [vmem:[%s3 + $0x10] sm:$0xf]
      %v1311 = vld [vmem:[%s3 + $0x14] sm:$0xf]
      %v1312 = vld [vmem:[%s3 + $0x18] sm:$0xf]
      %v1313 = vld [vmem:[%s3 + $0x1c] sm:$0xf]
      %v1314 = vld [vmem:[#allocation2 + $0xc] sm:$0x1]
      %s1315 = scalar_lea.vmem %s3, 32
      %v1316 = vld [vmem:[%s1315] sm:$0xf]
      %v1317 = vld [vmem:[%s1315 + $0x4] sm:$0xf]
      %v1318 = vld [vmem:[%s1315 + $0x8] sm:$0xf]
      %v1319 = vld [vmem:[%s1315 + $0xc] sm:$0xf]
      %v1320 = vld [vmem:[%s1315 + $0x10] sm:$0xf]
      %v1321 = vld [vmem:[%s1315 + $0x14] sm:$0xf]
      %v1322 = vld [vmem:[%s1315 + $0x18] sm:$0xf]
      %v1323 = vld [vmem:[%s1315 + $0x1c] sm:$0xf]
      %v1328 = vunpack.c.l.b16 %v1303
      %v1329 = vunpack.c.l.b16 %v1304
      %v1330 = vunpack.c.l.b16 %v1305
      %v1331 = vunpack.c.l.b16 %v1314
      %v1332 = vpack.c.b16 %v1329, %v1328
      %v1333 = vpack.c.b16 %v1331, %v1330
      %v1335 = vshrl.u32 %v1332, 16
      %v1337 = vshll.u32 %v1332, 16
      %v1339 = vrot.slane %v1337, 1
      %v1340 = vor.u32 %v1335, %v1339
      %v1342 = vshll.u32 %v1333, 16
      %v1344 = vrot.slane %v1342, 1
      %v1345 = vsel %vm312, %v1340, %v1344
      %v1346 = vshrl.u32 %v1333, 16
      %v1348 = vor.u32 %v1346, %v1344
      %v1357 = vunpack.c.l.b16 %v1316
      %v1358 = vunpack.c.l.b16 %v1317
      %v1359 = vunpack.c.l.b16 %v1318
      %v1360 = vunpack.c.l.b16 %v1319
      %v1361 = vunpack.c.l.b16 %v1320
      %v1362 = vunpack.c.l.b16 %v1321
      %v1363 = vunpack.c.l.b16 %v1322
      %v1364 = vunpack.c.l.b16 %v1323
      %v1365 = vpack.c.b16 %v1358, %v1357
      %v1366 = vpack.c.b16 %v1360, %v1359
      %v1367 = vpack.c.b16 %v1362, %v1361
      %v1368 = vpack.c.b16 %v1364, %v1363
      %v1374 = vsel %vm352, %v1345, 0
      %v1377 = vsel %vm352, %v1348, 0
      %1379 = vmatprep.subr.bf16.mxu0 0
      %1380 = vmatpush1.bf16.msra.mxu0 %v1365
      %1381 = vmatprep.subr.bf16.mxu0 0
      %1382 = vmatpush1.bf16.msra.mxu0 %v1366
      %1383 = vmatprep.subr.bf16.mxu0 0
      %1384 = vmatpush1.bf16.msra.mxu0 %v1367
      %1385 = vmatprep.subr.bf16.mxu0 0
      %1386 = vmatpush1.bf16.msra.mxu0 %v1368
      %1387 = vmatprep.subr.bf16.mxu0 0
      %1388 = vmatpush1.bf16.msra.mxu0 0
      %1389 = vmatprep.subr.bf16.mxu0 0
      %1390 = vmatpush1.bf16.msra.mxu0 0
      %1391 = vmatprep.subr.bf16.mxu0 0
      %1392 = vmatpush1.bf16.msra.mxu0 0
      %1393 = vmatprep.subr.bf16.mxu0 0
      %1394 = vmatpush1.bf16.msra.mxu0 0
      %1395 = vmatprep.subr.bf16.mxu0 0
      %1396 = vmatpush1.bf16.msra.mxu0 0
      %1397 = vmatprep.subr.bf16.mxu0 0
      %1398 = vmatpush1.bf16.msra.mxu0 0
      %1399 = vmatprep.subr.bf16.mxu0 0
      %1400 = vmatpush1.bf16.msra.mxu0 0
      %1401 = vmatprep.subr.bf16.mxu0 0
      %1402 = vmatpush1.bf16.msra.mxu0 0
      %1403 = vmatprep.subr.bf16.mxu0 0
      %1404 = vmatpush1.bf16.msra.mxu0 0
      %1405 = vmatprep.subr.bf16.mxu0 0
      %1406 = vmatpush1.bf16.msra.mxu0 0
      %1407 = vmatprep.subr.bf16.mxu0 0
      %1408 = vmatpush1.bf16.msra.mxu0 0
      %1409 = vmatprep.subr.bf16.mxu0 0
      %1410 = vmatpush1.bf16.msra.mxu0 0
      %1411 = vmatprep.mubr.bf16.mxu0 0
      %1412 = vmatmul.mubr.bf16.gmra.mrb[0].mxu0 %v1374
      %v1413 = vpop.f32.mrb[0].mxu0
      %v1414 = vadd.f32 0.0, %v1413
      %v1415 = vpop.f32.mrb[0].mxu0
      %v1416 = vpop.f32.mrb[0].mxu0
      %v1417 = vadd.f32 0.0, %v1416
      %v1418 = vpop.f32.mrb[0].mxu0
      %1419 = vmatprep.mubr.bf16.mxu0 0
      %1420 = vmatmul.mubr.bf16.gmra.mrb[0].mxu0 %v1377
      %v1421 = vpop.f32.mrb[0].mxu0
      %v1422 = vadd.f32 0.0, %v1421
      %v1423 = vpop.f32.mrb[0].mxu0
      %v1424 = vpop.f32.mrb[0].mxu0
      %v1425 = vpop.f32.mrb[0].mxu0
      %1426 = vdwg.mxu0
      %v1427 = vpack.c.b16 %v1330, %v1330
      %v1436 = vunpack.c.l.b16 %v1306
      %v1437 = vunpack.c.l.b16 %v1307
      %v1438 = vunpack.c.l.b16 %v1308
      %v1439 = vunpack.c.l.b16 %v1309
      %v1440 = vunpack.c.l.b16 %v1310
      %v1441 = vunpack.c.l.b16 %v1311
      %v1442 = vunpack.c.l.b16 %v1312
      %v1443 = vunpack.c.l.b16 %v1313
      %v1444 = vpack.c.b16 %v1437, %v1436
      %v1445 = vpack.c.b16 %v1439, %v1438
      %v1446 = vpack.c.b16 %v1441, %v1440
      %v1447 = vpack.c.b16 %v1443, %v1442
      %v1452 = vsel %vm352, %v1332, 0
      %v1455 = vsel %vm352, %v1427, 0
      %1457 = vmatprep.subr.bf16.mxu0 0
      %1458 = vmatpush1.bf16.msra.mxu0 %v1444
      %1459 = vmatprep.subr.bf16.mxu0 0
      %1460 = vmatpush1.bf16.msra.mxu0 %v1445
      %1461 = vmatprep.subr.bf16.mxu0 0
      %1462 = vmatpush1.bf16.msra.mxu0 %v1446
      %1463 = vmatprep.subr.bf16.mxu0 0
      %1464 = vmatpush1.bf16.msra.mxu0 %v1447
      %1465 = vmatprep.subr.bf16.mxu0 0
      %1466 = vmatpush1.bf16.msra.mxu0 0
      %1467 = vmatprep.subr.bf16.mxu0 0
      %1468 = vmatpush1.bf16.msra.mxu0 0
      %1469 = vmatprep.subr.bf16.mxu0 0
      %1470 = vmatpush1.bf16.msra.mxu0 0
      %1471 = vmatprep.subr.bf16.mxu0 0
      %1472 = vmatpush1.bf16.msra.mxu0 0
      %1473 = vmatprep.subr.bf16.mxu0 0
      %1474 = vmatpush1.bf16.msra.mxu0 0
      %1475 = vmatprep.subr.bf16.mxu0 0
      %1476 = vmatpush1.bf16.msra.mxu0 0
      %1477 = vmatprep.subr.bf16.mxu0 0
      %1478 = vmatpush1.bf16.msra.mxu0 0
      %1479 = vmatprep.subr.bf16.mxu0 0
      %1480 = vmatpush1.bf16.msra.mxu0 0
      %1481 = vmatprep.subr.bf16.mxu0 0
      %1482 = vmatpush1.bf16.msra.mxu0 0
      %1483 = vmatprep.subr.bf16.mxu0 0
      %1484 = vmatpush1.bf16.msra.mxu0 0
      %1485 = vmatprep.subr.bf16.mxu0 0
      %1486 = vmatpush1.bf16.msra.mxu0 0
      %1487 = vmatprep.subr.bf16.mxu0 0
      %1488 = vmatpush1.bf16.msra.mxu0 0
      %1489 = vmatprep.mubr.bf16.mxu0 0
      %1490 = vmatmul.mubr.bf16.gmra.mrb[0].mxu0 %v1452
      %v1491 = vpop.f32.mrb[0].mxu0
      %v1492 = vadd.f32 %v1414, %v1491
      %v1493 = vpop.f32.mrb[0].mxu0
      %v1494 = vpop.f32.mrb[0].mxu0
      %v1495 = vadd.f32 %v1417, %v1494
      %v1496 = vpop.f32.mrb[0].mxu0
      %1497 = vmatprep.mubr.bf16.mxu0 0
      %1498 = vmatmul.mubr.bf16.gmra.mrb[0].mxu0 %v1455
      %v1499 = vpop.f32.mrb[0].mxu0
      %v1500 = vadd.f32 %v1422, %v1499
      %v1501 = vpop.f32.mrb[0].mxu0
      %v1502 = vpop.f32.mrb[0].mxu0
      %v1503 = vpop.f32.mrb[0].mxu0
      %1504 = vdwg.mxu0
      %v1505 = vld [vmem:[#allocation2] sm:$0xe]
      %s1506 = scalar_lea.vmem %s3, 64
      %v1507 = vld [vmem:[%s1506] sm:$0xf]
      %v1508 = vld [vmem:[%s1506 + $0x4] sm:$0xf]
      %v1509 = vld [vmem:[%s1506 + $0x8] sm:$0xf]
      %v1510 = vld [vmem:[%s1506 + $0xc] sm:$0xf]
      %v1511 = vld [vmem:[%s1506 + $0x10] sm:$0xf]
      %v1512 = vld [vmem:[%s1506 + $0x14] sm:$0xf]
      %v1513 = vld [vmem:[%s1506 + $0x18] sm:$0xf]
      %v1514 = vld [vmem:[%s1506 + $0x1c] sm:$0xf]
      %v1516 = vunpack.c.l.b16 %v1505
      %v1517 = vpack.c.b16 %v1329, %v1516
      %v1518 = vrot.slane %v1517, 1
      %v1519 = vrot.slane %v1333, 1
      %v1520 = vsel %vm498, %v1518, %v1519
      %v1529 = vunpack.c.l.b16 %v1507
      %v1530 = vunpack.c.l.b16 %v1508
      %v1531 = vunpack.c.l.b16 %v1509
      %v1532 = vunpack.c.l.b16 %v1510
      %v1533 = vunpack.c.l.b16 %v1511
      %v1534 = vunpack.c.l.b16 %v1512
      %v1535 = vunpack.c.l.b16 %v1513
      %v1536 = vunpack.c.l.b16 %v1514
      %v1537 = vpack.c.b16 %v1530, %v1529
      %v1538 = vpack.c.b16 %v1532, %v1531
      %v1539 = vpack.c.b16 %v1534, %v1533
      %v1540 = vpack.c.b16 %v1536, %v1535
      %v1546 = vsel %vm352, %v1520, 0
      %v1549 = vsel %vm352, %v1519, 0
      %1551 = vmatprep.subr.bf16.mxu0 0
      %1552 = vmatpush1.bf16.msra.mxu0 %v1537
      %1553 = vmatprep.subr.bf16.mxu0 0
      %1554 = vmatpush1.bf16.msra.mxu0 %v1538
      %1555 = vmatprep.subr.bf16.mxu0 0
      %1556 = vmatpush1.bf16.msra.mxu0 %v1539
      %1557 = vmatprep.subr.bf16.mxu0 0
      %1558 = vmatpush1.bf16.msra.mxu0 %v1540
      %1559 = vmatprep.subr.bf16.mxu0 0
      %1560 = vmatpush1.bf16.msra.mxu0 0
      %1561 = vmatprep.subr.bf16.mxu0 0
      %1562 = vmatpush1.bf16.msra.mxu0 0
      %1563 = vmatprep.subr.bf16.mxu0 0
      %1564 = vmatpush1.bf16.msra.mxu0 0
      %1565 = vmatprep.subr.bf16.mxu0 0
      %1566 = vmatpush1.bf16.msra.mxu0 0
      %1567 = vmatprep.subr.bf16.mxu0 0
      %1568 = vmatpush1.bf16.msra.mxu0 0
      %1569 = vmatprep.subr.bf16.mxu0 0
      %1570 = vmatpush1.bf16.msra.mxu0 0
      %1571 = vmatprep.subr.bf16.mxu0 0
      %1572 = vmatpush1.bf16.msra.mxu0 0
      %1573 = vmatprep.subr.bf16.mxu0 0
      %1574 = vmatpush1.bf16.msra.mxu0 0
      %1575 = vmatprep.subr.bf16.mxu0 0
      %1576 = vmatpush1.bf16.msra.mxu0 0
      %1577 = vmatprep.subr.bf16.mxu0 0
      %1578 = vmatpush1.bf16.msra.mxu0 0
      %1579 = vmatprep.subr.bf16.mxu0 0
      %1580 = vmatpush1.bf16.msra.mxu0 0
      %1581 = vmatprep.subr.bf16.mxu0 0
      %1582 = vmatpush1.bf16.msra.mxu0 0
      %1583 = vmatprep.mubr.bf16.mxu0 0
      %1584 = vmatmul.mubr.bf16.gmra.mrb[0].mxu0 %v1546
      %v1585 = vpop.f32.mrb[0].mxu0
      %v1586 = vadd.f32 0.0, %v1585
      %v1587 = vpop.f32.mrb[0].mxu0
      %v1588 = vpop.f32.mrb[0].mxu0
      %v1589 = vadd.f32 0.0, %v1588
      %v1590 = vpop.f32.mrb[0].mxu0
      %1591 = vmatprep.mubr.bf16.mxu0 0
      %1592 = vmatmul.mubr.bf16.gmra.mrb[0].mxu0 %v1549
      %v1593 = vpop.f32.mrb[0].mxu0
      %v1594 = vadd.f32 0.0, %v1593
      %v1595 = vpop.f32.mrb[0].mxu0
      %v1596 = vpop.f32.mrb[0].mxu0
      %v1597 = vpop.f32.mrb[0].mxu0
      %1598 = vdwg.mxu0
      %v1599 = vadd.f32 %v1492, %v1586
      %v1600 = vadd.f32 %v1495, %v1589
      %v1601 = vadd.f32 %v1500, %v1594
      %v1602 = vld [vmem:[#allocation2] sm:$0x8]
      %v1603 = vld [vmem:[#allocation2 + $0xc] sm:$0x7]
      %s1604 = scalar_lea.vmem %s3, 96
      %v1605 = vld [vmem:[%s1604] sm:$0xf]
      %v1606 = vld [vmem:[%s1604 + $0x4] sm:$0xf]
      %v1607 = vld [vmem:[%s1604 + $0x8] sm:$0xf]
      %v1608 = vld [vmem:[%s1604 + $0xc] sm:$0xf]
      %v1609 = vld [vmem:[%s1604 + $0x10] sm:$0xf]
      %v1610 = vld [vmem:[%s1604 + $0x14] sm:$0xf]
      %v1611 = vld [vmem:[%s1604 + $0x18] sm:$0xf]
      %v1612 = vld [vmem:[%s1604 + $0x1c] sm:$0xf]
      %v1615 = vunpack.c.l.b16 %v1602
      %v1616 = vunpack.c.l.b16 %v1603
      %v1617 = vpack.c.b16 %v1329, %v1615
      %v1618 = vpack.c.b16 %v1616, %v1330
      %v1619 = vrot.slane %v1617, 3
      %v1620 = vrot.slane %v1618, 3
      %v1621 = vsel %vm600, %v1619, %v1620
      %v1630 = vunpack.c.l.b16 %v1605
      %v1631 = vunpack.c.l.b16 %v1606
      %v1632 = vunpack.c.l.b16 %v1607
      %v1633 = vunpack.c.l.b16 %v1608
      %v1634 = vunpack.c.l.b16 %v1609
      %v1635 = vunpack.c.l.b16 %v1610
      %v1636 = vunpack.c.l.b16 %v1611
      %v1637 = vunpack.c.l.b16 %v1612
      %v1638 = vpack.c.b16 %v1631, %v1630
      %v1639 = vpack.c.b16 %v1633, %v1632
      %v1640 = vpack.c.b16 %v1635, %v1634
      %v1641 = vpack.c.b16 %v1637, %v1636
      %v1647 = vsel %vm352, %v1621, 0
      %v1650 = vsel %vm352, %v1620, 0
      %1652 = vmatprep.subr.bf16.mxu0 0
      %1653 = vmatpush1.bf16.msra.mxu0 %v1638
      %1654 = vmatprep.subr.bf16.mxu0 0
      %1655 = vmatpush1.bf16.msra.mxu0 %v1639
      %1656 = vmatprep.subr.bf16.mxu0 0
      %1657 = vmatpush1.bf16.msra.mxu0 %v1640
      %1658 = vmatprep.subr.bf16.mxu0 0
      %1659 = vmatpush1.bf16.msra.mxu0 %v1641
      %1660 = vmatprep.subr.bf16.mxu0 0
      %1661 = vmatpush1.bf16.msra.mxu0 0
      %1662 = vmatprep.subr.bf16.mxu0 0
      %1663 = vmatpush1.bf16.msra.mxu0 0
      %1664 = vmatprep.subr.bf16.mxu0 0
      %1665 = vmatpush1.bf16.msra.mxu0 0
      %1666 = vmatprep.subr.bf16.mxu0 0
      %1667 = vmatpush1.bf16.msra.mxu0 0
      %1668 = vmatprep.subr.bf16.mxu0 0
      %1669 = vmatpush1.bf16.msra.mxu0 0
      %1670 = vmatprep.subr.bf16.mxu0 0
      %1671 = vmatpush1.bf16.msra.mxu0 0
      %1672 = vmatprep.subr.bf16.mxu0 0
      %1673 = vmatpush1.bf16.msra.mxu0 0
      %1674 = vmatprep.subr.bf16.mxu0 0
      %1675 = vmatpush1.bf16.msra.mxu0 0
      %1676 = vmatprep.subr.bf16.mxu0 0
      %1677 = vmatpush1.bf16.msra.mxu0 0
      %1678 = vmatprep.subr.bf16.mxu0 0
      %1679 = vmatpush1.bf16.msra.mxu0 0
      %1680 = vmatprep.subr.bf16.mxu0 0
      %1681 = vmatpush1.bf16.msra.mxu0 0
      %1682 = vmatprep.subr.bf16.mxu0 0
      %1683 = vmatpush1.bf16.msra.mxu0 0
      %1684 = vmatprep.mubr.bf16.mxu0 0
      %1685 = vmatmul.mubr.bf16.gmra.mrb[0].mxu0 %v1647
      %v1686 = vpop.f32.mrb[0].mxu0
      %v1687 = vadd.f32 0.0, %v1686
      %v1688 = vpop.f32.mrb[0].mxu0
      %v1689 = vpop.f32.mrb[0].mxu0
      %v1690 = vadd.f32 0.0, %v1689
      %v1691 = vpop.f32.mrb[0].mxu0
      %1692 = vmatprep.mubr.bf16.mxu0 0
      %1693 = vmatmul.mubr.bf16.gmra.mrb[0].mxu0 %v1650
      %v1694 = vpop.f32.mrb[0].mxu0
      %v1695 = vadd.f32 0.0, %v1694
      %v1696 = vpop.f32.mrb[0].mxu0
      %v1697 = vpop.f32.mrb[0].mxu0
      %v1698 = vpop.f32.mrb[0].mxu0
      %1699 = vdwg.mxu0
      %v1700 = vadd.f32 %v1599, %v1687
      %v1701 = vadd.f32 %v1600, %v1690
      %v1702 = vadd.f32 %v1601, %v1695
      %v1703 = vld [vmem:[#allocation2 + $0xc] sm:$0xf]
      %s1704 = scalar_lea.vmem %s3, 128
      %v1705 = vld [vmem:[%s1704] sm:$0xf]
      %v1706 = vld [vmem:[%s1704 + $0x4] sm:$0xf]
      %v1707 = vld [vmem:[%s1704 + $0x8] sm:$0xf]
      %v1708 = vld [vmem:[%s1704 + $0xc] sm:$0xf]
      %v1709 = vld [vmem:[%s1704 + $0x10] sm:$0xf]
      %v1710 = vld [vmem:[%s1704 + $0x14] sm:$0xf]
      %v1711 = vld [vmem:[%s1704 + $0x18] sm:$0xf]
      %v1712 = vld [vmem:[%s1704 + $0x1c] sm:$0xf]
      %v1714 = vunpack.c.l.b16 %v1703
      %v1715 = vpack.c.b16 %v1714, %v1330
      %v1717 = vshrl.u32 %v1617, 16
      %v1719 = vrot.slane %v1717, 3
      %v1720 = vshll.u32 %v1617, 16
      %v1722 = vrot.slane %v1720, 4
      %v1723 = vor.u32 %v1719, %v1722
      %v1725 = vshrl.u32 %v1715, 16
      %v1727 = vrot.slane %v1725, 3
      %v1728 = vshll.u32 %v1715, 16
      %v1730 = vrot.slane %v1728, 4
      %v1731 = vor.u32 %v1727, %v1730
      %v1732 = vsel %vm698, %v1723, %v1731
      %v1741 = vunpack.c.l.b16 %v1705
      %v1742 = vunpack.c.l.b16 %v1706
      %v1743 = vunpack.c.l.b16 %v1707
      %v1744 = vunpack.c.l.b16 %v1708
      %v1745 = vunpack.c.l.b16 %v1709
      %v1746 = vunpack.c.l.b16 %v1710
      %v1747 = vunpack.c.l.b16 %v1711
      %v1748 = vunpack.c.l.b16 %v1712
      %v1749 = vpack.c.b16 %v1742, %v1741
      %v1750 = vpack.c.b16 %v1744, %v1743
      %v1751 = vpack.c.b16 %v1746, %v1745
      %v1752 = vpack.c.b16 %v1748, %v1747
      %v1758 = vsel %vm352, %v1732, 0
      %v1761 = vsel %vm352, %v1731, 0
      %1763 = vmatprep.subr.bf16.mxu0 0
      %1764 = vmatpush1.bf16.msra.mxu0 %v1749
      %1765 = vmatprep.subr.bf16.mxu0 0
      %1766 = vmatpush1.bf16.msra.mxu0 %v1750
      %1767 = vmatprep.subr.bf16.mxu0 0
      %1768 = vmatpush1.bf16.msra.mxu0 %v1751
      %1769 = vmatprep.subr.bf16.mxu0 0
      %1770 = vmatpush1.bf16.msra.mxu0 %v1752
      %1771 = vmatprep.subr.bf16.mxu0 0
      %1772 = vmatpush1.bf16.msra.mxu0 0
      %1773 = vmatprep.subr.bf16.mxu0 0
      %1774 = vmatpush1.bf16.msra.mxu0 0
      %1775 = vmatprep.subr.bf16.mxu0 0
      %1776 = vmatpush1.bf16.msra.mxu0 0
      %1777 = vmatprep.subr.bf16.mxu0 0
      %1778 = vmatpush1.bf16.msra.mxu0 0
      %1779 = vmatprep.subr.bf16.mxu0 0
      %1780 = vmatpush1.bf16.msra.mxu0 0
      %1781 = vmatprep.subr.bf16.mxu0 0
      %1782 = vmatpush1.bf16.msra.mxu0 0
      %1783 = vmatprep.subr.bf16.mxu0 0
      %1784 = vmatpush1.bf16.msra.mxu0 0
      %1785 = vmatprep.subr.bf16.mxu0 0
      %1786 = vmatpush1.bf16.msra.mxu0 0
      %1787 = vmatprep.subr.bf16.mxu0 0
      %1788 = vmatpush1.bf16.msra.mxu0 0
      %1789 = vmatprep.subr.bf16.mxu0 0
      %1790 = vmatpush1.bf16.msra.mxu0 0
      %1791 = vmatprep.subr.bf16.mxu0 0
      %1792 = vmatpush1.bf16.msra.mxu0 0
      %1793 = vmatprep.subr.bf16.mxu0 0
      %1794 = vmatpush1.bf16.msra.mxu0 0
      %1795 = vmatprep.mubr.bf16.mxu0 0
      %1796 = vmatmul.mubr.bf16.gmra.mrb[0].mxu0 %v1758
      %v1797 = vpop.f32.mrb[0].mxu0
      %v1798 = vadd.f32 0.0, %v1797
      %v1799 = vpop.f32.mrb[0].mxu0
      %v1800 = vpop.f32.mrb[0].mxu0
      %v1801 = vadd.f32 0.0, %v1800
      %v1802 = vpop.f32.mrb[0].mxu0
      %1803 = vmatprep.mubr.bf16.mxu0 0
      %1804 = vmatmul.mubr.bf16.gmra.mrb[0].mxu0 %v1761
      %v1805 = vpop.f32.mrb[0].mxu0
      %v1806 = vadd.f32 0.0, %v1805
      %v1807 = vpop.f32.mrb[0].mxu0
      %v1808 = vpop.f32.mrb[0].mxu0
      %v1809 = vpop.f32.mrb[0].mxu0
      %1810 = vdwg.mxu0
      %v1811 = vadd.f32 %v1700, %v1798
      %v1812 = vadd.f32 %v1701, %v1801
      %v1813 = vadd.f32 %v1702, %v1806
      %s1814 = scalar_lea.vmem %s3, 160
      %v1815 = vld [vmem:[%s1814] sm:$0xf]
      %v1816 = vld [vmem:[%s1814 + $0x4] sm:$0xf]
      %v1817 = vld [vmem:[%s1814 + $0x8] sm:$0xf]
      %v1818 = vld [vmem:[%s1814 + $0xc] sm:$0xf]
      %v1819 = vld [vmem:[%s1814 + $0x10] sm:$0xf]
      %v1820 = vld [vmem:[%s1814 + $0x14] sm:$0xf]
      %v1821 = vld [vmem:[%s1814 + $0x18] sm:$0xf]
      %v1822 = vld [vmem:[%s1814 + $0x1c] sm:$0xf]
      %v1823 = vpack.c.b16 %v1330, %v1329
      %v1824 = vpack.c.b16 %v1714, %v1714
      %v1833 = vunpack.c.l.b16 %v1815
      %v1834 = vunpack.c.l.b16 %v1816
      %v1835 = vunpack.c.l.b16 %v1817
      %v1836 = vunpack.c.l.b16 %v1818
      %v1837 = vunpack.c.l.b16 %v1819
      %v1838 = vunpack.c.l.b16 %v1820
      %v1839 = vunpack.c.l.b16 %v1821
      %v1840 = vunpack.c.l.b16 %v1822
      %v1841 = vpack.c.b16 %v1834, %v1833
      %v1842 = vpack.c.b16 %v1836, %v1835
      %v1843 = vpack.c.b16 %v1838, %v1837
      %v1844 = vpack.c.b16 %v1840, %v1839
      %v1850 = vsel %vm352, %v1823, 0
      %v1853 = vsel %vm352, %v1824, 0
      %1855 = vmatprep.subr.bf16.mxu0 0
      %1856 = vmatpush1.bf16.msra.mxu0 %v1841
      %1857 = vmatprep.subr.bf16.mxu0 0
      %1858 = vmatpush1.bf16.msra.mxu0 %v1842
      %1859 = vmatprep.subr.bf16.mxu0 0
      %1860 = vmatpush1.bf16.msra.mxu0 %v1843
      %1861 = vmatprep.subr.bf16.mxu0 0
      %1862 = vmatpush1.bf16.msra.mxu0 %v1844
      %1863 = vmatprep.subr.bf16.mxu0 0
      %1864 = vmatpush1.bf16.msra.mxu0 0
      %1865 = vmatprep.subr.bf16.mxu0 0
      %1866 = vmatpush1.bf16.msra.mxu0 0
      %1867 = vmatprep.subr.bf16.mxu0 0
      %1868 = vmatpush1.bf16.msra.mxu0 0
      %1869 = vmatprep.subr.bf16.mxu0 0
      %1870 = vmatpush1.bf16.msra.mxu0 0
      %1871 = vmatprep.subr.bf16.mxu0 0
      %1872 = vmatpush1.bf16.msra.mxu0 0
      %1873 = vmatprep.subr.bf16.mxu0 0
      %1874 = vmatpush1.bf16.msra.mxu0 0
      %1875 = vmatprep.subr.bf16.mxu0 0
      %1876 = vmatpush1.bf16.msra.mxu0 0
      %1877 = vmatprep.subr.bf16.mxu0 0
      %1878 = vmatpush1.bf16.msra.mxu0 0
      %1879 = vmatprep.subr.bf16.mxu0 0
      %1880 = vmatpush1.bf16.msra.mxu0 0
      %1881 = vmatprep.subr.bf16.mxu0 0
      %1882 = vmatpush1.bf16.msra.mxu0 0
      %1883 = vmatprep.subr.bf16.mxu0 0
      %1884 = vmatpush1.bf16.msra.mxu0 0
      %1885 = vmatprep.subr.bf16.mxu0 0
      %1886 = vmatpush1.bf16.msra.mxu0 0
      %1887 = vmatprep.mubr.bf16.mxu0 0
      %1888 = vmatmul.mubr.bf16.gmra.mrb[0].mxu0 %v1850
      %v1889 = vpop.f32.mrb[0].mxu0
      %v1890 = vadd.f32 0.0, %v1889
      %v1891 = vpop.f32.mrb[0].mxu0
      %v1892 = vpop.f32.mrb[0].mxu0
      %v1893 = vadd.f32 0.0, %v1892
      %v1894 = vpop.f32.mrb[0].mxu0
      %1895 = vmatprep.mubr.bf16.mxu0 0
      %1896 = vmatmul.mubr.bf16.gmra.mrb[0].mxu0 %v1853
      %v1897 = vpop.f32.mrb[0].mxu0
      %v1898 = vadd.f32 0.0, %v1897
      %v1899 = vpop.f32.mrb[0].mxu0
      %v1900 = vpop.f32.mrb[0].mxu0
      %v1901 = vpop.f32.mrb[0].mxu0
      %1902 = vdwg.mxu0
      %v1903 = vadd.f32 %v1811, %v1890
      %v1904 = vadd.f32 %v1812, %v1893
      %v1905 = vadd.f32 %v1813, %v1898
      %v1906 = vld [vmem:[#allocation2 + $0x4] sm:$0xc]
      %v1907 = vld [vmem:[#allocation2 + $0x8] sm:$0xf]
      %v1908 = vld [vmem:[#allocation2 + $0xc] sm:$0xf]
      %v1909 = vld [vmem:[#allocation2 + $0x10] sm:$0x3]
      %s1910 = scalar_lea.vmem %s3, 192
      %v1911 = vld [vmem:[%s1910] sm:$0xf]
      %v1912 = vld [vmem:[%s1910 + $0x4] sm:$0xf]
      %v1913 = vld [vmem:[%s1910 + $0x8] sm:$0xf]
      %v1914 = vld [vmem:[%s1910 + $0xc] sm:$0xf]
      %v1915 = vld [vmem:[%s1910 + $0x10] sm:$0xf]
      %v1916 = vld [vmem:[%s1910 + $0x14] sm:$0xf]
      %v1917 = vld [vmem:[%s1910 + $0x18] sm:$0xf]
      %v1918 = vld [vmem:[%s1910 + $0x1c] sm:$0xf]
      %v1923 = vunpack.c.l.b16 %v1906
      %v1924 = vunpack.c.l.b16 %v1907
      %v1925 = vunpack.c.l.b16 %v1908
      %v1926 = vunpack.c.l.b16 %v1909
      %v1927 = vpack.c.b16 %v1924, %v1923
      %v1928 = vpack.c.b16 %v1926, %v1925
      %v1929 = vrot.slane %v1927, 2
      %v1930 = vrot.slane %v1928, 2
      %v1931 = vsel %vm912, %v1929, %v1930
      %v1940 = vunpack.c.l.b16 %v1911
      %v1941 = vunpack.c.l.b16 %v1912
      %v1942 = vunpack.c.l.b16 %v1913
      %v1943 = vunpack.c.l.b16 %v1914
      %v1944 = vunpack.c.l.b16 %v1915
      %v1945 = vunpack.c.l.b16 %v1916
      %v1946 = vunpack.c.l.b16 %v1917
      %v1947 = vunpack.c.l.b16 %v1918
      %v1948 = vpack.c.b16 %v1941, %v1940
      %v1949 = vpack.c.b16 %v1943, %v1942
      %v1950 = vpack.c.b16 %v1945, %v1944
      %v1951 = vpack.c.b16 %v1947, %v1946
      %v1957 = vsel %vm352, %v1931, 0
      %v1960 = vsel %vm352, %v1930, 0
      %1962 = vmatprep.subr.bf16.mxu0 0
      %1963 = vmatpush1.bf16.msra.mxu0 %v1948
      %1964 = vmatprep.subr.bf16.mxu0 0
      %1965 = vmatpush1.bf16.msra.mxu0 %v1949
      %1966 = vmatprep.subr.bf16.mxu0 0
      %1967 = vmatpush1.bf16.msra.mxu0 %v1950
      %1968 = vmatprep.subr.bf16.mxu0 0
      %1969 = vmatpush1.bf16.msra.mxu0 %v1951
      %1970 = vmatprep.subr.bf16.mxu0 0
      %1971 = vmatpush1.bf16.msra.mxu0 0
      %1972 = vmatprep.subr.bf16.mxu0 0
      %1973 = vmatpush1.bf16.msra.mxu0 0
      %1974 = vmatprep.subr.bf16.mxu0 0
      %1975 = vmatpush1.bf16.msra.mxu0 0
      %1976 = vmatprep.subr.bf16.mxu0 0
      %1977 = vmatpush1.bf16.msra.mxu0 0
      %1978 = vmatprep.subr.bf16.mxu0 0
      %1979 = vmatpush1.bf16.msra.mxu0 0
      %1980 = vmatprep.subr.bf16.mxu0 0
      %1981 = vmatpush1.bf16.msra.mxu0 0
      %1982 = vmatprep.subr.bf16.mxu0 0
      %1983 = vmatpush1.bf16.msra.mxu0 0
      %1984 = vmatprep.subr.bf16.mxu0 0
      %1985 = vmatpush1.bf16.msra.mxu0 0
      %1986 = vmatprep.subr.bf16.mxu0 0
      %1987 = vmatpush1.bf16.msra.mxu0 0
      %1988 = vmatprep.subr.bf16.mxu0 0
      %1989 = vmatpush1.bf16.msra.mxu0 0
      %1990 = vmatprep.subr.bf16.mxu0 0
      %1991 = vmatpush1.bf16.msra.mxu0 0
      %1992 = vmatprep.subr.bf16.mxu0 0
      %1993 = vmatpush1.bf16.msra.mxu0 0
      %1994 = vmatprep.mubr.bf16.mxu0 0
      %1995 = vmatmul.mubr.bf16.gmra.mrb[0].mxu0 %v1957
      %v1996 = vpop.f32.mrb[0].mxu0
      %v1997 = vadd.f32 0.0, %v1996
      %v1998 = vpop.f32.mrb[0].mxu0
      %v1999 = vpop.f32.mrb[0].mxu0
      %v2000 = vadd.f32 0.0, %v1999
      %v2001 = vpop.f32.mrb[0].mxu0
      %2002 = vmatprep.mubr.bf16.mxu0 0
      %2003 = vmatmul.mubr.bf16.gmra.mrb[0].mxu0 %v1960
      %v2004 = vpop.f32.mrb[0].mxu0
      %v2005 = vadd.f32 0.0, %v2004
      %v2006 = vpop.f32.mrb[0].mxu0
      %v2007 = vpop.f32.mrb[0].mxu0
      %v2008 = vpop.f32.mrb[0].mxu0
      %2009 = vdwg.mxu0
      %v2010 = vadd.f32 %v1903, %v1997
      %v2011 = vadd.f32 %v1904, %v2000
      %v2012 = vadd.f32 %v1905, %v2005
      %v2013 = vld [vmem:[#allocation2 + $0x10] sm:$0x7]
      %s2014 = scalar_lea.vmem %s3, 224
      %v2015 = vld [vmem:[%s2014] sm:$0xf]
      %v2016 = vld [vmem:[%s2014 + $0x4] sm:$0xf]
      %v2017 = vld [vmem:[%s2014 + $0x8] sm:$0xf]
      %v2018 = vld [vmem:[%s2014 + $0xc] sm:$0xf]
      %v2019 = vld [vmem:[%s2014 + $0x10] sm:$0xf]
      %v2020 = vld [vmem:[%s2014 + $0x14] sm:$0xf]
      %v2021 = vld [vmem:[%s2014 + $0x18] sm:$0xf]
      %v2022 = vld [vmem:[%s2014 + $0x1c] sm:$0xf]
      %v2024 = vunpack.c.l.b16 %v2013
      %v2025 = vpack.c.b16 %v2024, %v1925
      %v2027 = vshrl.u32 %v1927, 16
      %v2029 = vrot.slane %v2027, 2
      %v2030 = vshll.u32 %v1927, 16
      %v2032 = vrot.slane %v2030, 3
      %v2033 = vor.u32 %v2029, %v2032
      %v2035 = vshrl.u32 %v2025, 16
      %v2037 = vrot.slane %v2035, 2
      %v2038 = vshll.u32 %v2025, 16
      %v2040 = vrot.slane %v2038, 3
      %v2041 = vor.u32 %v2037, %v2040
      %v2042 = vsel %vm1010, %v2033, %v2041
      %v2051 = vunpack.c.l.b16 %v2015
      %v2052 = vunpack.c.l.b16 %v2016
      %v2053 = vunpack.c.l.b16 %v2017
      %v2054 = vunpack.c.l.b16 %v2018
      %v2055 = vunpack.c.l.b16 %v2019
      %v2056 = vunpack.c.l.b16 %v2020
      %v2057 = vunpack.c.l.b16 %v2021
      %v2058 = vunpack.c.l.b16 %v2022
      %v2059 = vpack.c.b16 %v2052, %v2051
      %v2060 = vpack.c.b16 %v2054, %v2053
      %v2061 = vpack.c.b16 %v2056, %v2055
      %v2062 = vpack.c.b16 %v2058, %v2057
      %v2068 = vsel %vm352, %v2042, 0
      %v2071 = vsel %vm352, %v2041, 0
      %2073 = vmatprep.subr.bf16.mxu0 0
      %2074 = vmatpush1.bf16.msra.mxu0 %v2059
      %2075 = vmatprep.subr.bf16.mxu0 0
      %2076 = vmatpush1.bf16.msra.mxu0 %v2060
      %2077 = vmatprep.subr.bf16.mxu0 0
      %2078 = vmatpush1.bf16.msra.mxu0 %v2061
      %2079 = vmatprep.subr.bf16.mxu0 0
      %2080 = vmatpush1.bf16.msra.mxu0 %v2062
      %2081 = vmatprep.subr.bf16.mxu0 0
      %2082 = vmatpush1.bf16.msra.mxu0 0
      %2083 = vmatprep.subr.bf16.mxu0 0
      %2084 = vmatpush1.bf16.msra.mxu0 0
      %2085 = vmatprep.subr.bf16.mxu0 0
      %2086 = vmatpush1.bf16.msra.mxu0 0
      %2087 = vmatprep.subr.bf16.mxu0 0
      %2088 = vmatpush1.bf16.msra.mxu0 0
      %2089 = vmatprep.subr.bf16.mxu0 0
      %2090 = vmatpush1.bf16.msra.mxu0 0
      %2091 = vmatprep.subr.bf16.mxu0 0
      %2092 = vmatpush1.bf16.msra.mxu0 0
      %2093 = vmatprep.subr.bf16.mxu0 0
      %2094 = vmatpush1.bf16.msra.mxu0 0
      %2095 = vmatprep.subr.bf16.mxu0 0
      %2096 = vmatpush1.bf16.msra.mxu0 0
      %2097 = vmatprep.subr.bf16.mxu0 0
      %2098 = vmatpush1.bf16.msra.mxu0 0
      %2099 = vmatprep.subr.bf16.mxu0 0
      %2100 = vmatpush1.bf16.msra.mxu0 0
      %2101 = vmatprep.subr.bf16.mxu0 0
      %2102 = vmatpush1.bf16.msra.mxu0 0
      %2103 = vmatprep.subr.bf16.mxu0 0
      %2104 = vmatpush1.bf16.msra.mxu0 0
      %2105 = vmatprep.mubr.bf16.mxu0 0
      %2106 = vmatmul.mubr.bf16.gmra.mrb[0].mxu0 %v2068
      %v2107 = vpop.f32.mrb[0].mxu0
      %v2108 = vadd.f32 0.0, %v2107
      %v2109 = vpop.f32.mrb[0].mxu0
      %v2110 = vpop.f32.mrb[0].mxu0
      %v2111 = vadd.f32 0.0, %v2110
      %v2112 = vpop.f32.mrb[0].mxu0
      %2113 = vmatprep.mubr.bf16.mxu0 0
      %2114 = vmatmul.mubr.bf16.gmra.mrb[0].mxu0 %v2071
      %v2115 = vpop.f32.mrb[0].mxu0
      %v2116 = vadd.f32 0.0, %v2115
      %v2117 = vpop.f32.mrb[0].mxu0
      %v2118 = vpop.f32.mrb[0].mxu0
      %v2119 = vpop.f32.mrb[0].mxu0
      %2120 = vdwg.mxu0
      %v2121 = vadd.f32 %v2010, %v2108
      %v2122 = vadd.f32 %v2011, %v2111
      %v2123 = vadd.f32 %v2012, %v2116
      %v2124 = vld [vmem:[#allocation2 + $0x4] sm:$0x8]
      %s2125 = scalar_lea.vmem %s3, 256
      %v2126 = vld [vmem:[%s2125] sm:$0xf]
      %v2127 = vld [vmem:[%s2125 + $0x4] sm:$0xf]
      %v2128 = vld [vmem:[%s2125 + $0x8] sm:$0xf]
      %v2129 = vld [vmem:[%s2125 + $0xc] sm:$0xf]
      %v2130 = vld [vmem:[%s2125 + $0x10] sm:$0xf]
      %v2131 = vld [vmem:[%s2125 + $0x14] sm:$0xf]
      %v2132 = vld [vmem:[%s2125 + $0x18] sm:$0xf]
      %v2133 = vld [vmem:[%s2125 + $0x1c] sm:$0xf]
      %v2135 = vunpack.c.l.b16 %v2124
      %v2136 = vpack.c.b16 %v1924, %v2135
      %v2137 = vrot.slane %v2136, 3
      %v2138 = vrot.slane %v2025, 3
      %v2139 = vsel %vm600, %v2137, %v2138
      %v2148 = vunpack.c.l.b16 %v2126
      %v2149 = vunpack.c.l.b16 %v2127
      %v2150 = vunpack.c.l.b16 %v2128
      %v2151 = vunpack.c.l.b16 %v2129
      %v2152 = vunpack.c.l.b16 %v2130
      %v2153 = vunpack.c.l.b16 %v2131
      %v2154 = vunpack.c.l.b16 %v2132
      %v2155 = vunpack.c.l.b16 %v2133
      %v2156 = vpack.c.b16 %v2149, %v2148
      %v2157 = vpack.c.b16 %v2151, %v2150
      %v2158 = vpack.c.b16 %v2153, %v2152
      %v2159 = vpack.c.b16 %v2155, %v2154
      %v2165 = vsel %vm352, %v2139, 0
      %v2168 = vsel %vm352, %v2138, 0
      %2170 = vmatprep.subr.bf16.mxu0 0
      %2171 = vmatpush1.bf16.msra.mxu0 %v2156
      %2172 = vmatprep.subr.bf16.mxu0 0
      %2173 = vmatpush1.bf16.msra.mxu0 %v2157
      %2174 = vmatprep.subr.bf16.mxu0 0
      %2175 = vmatpush1.bf16.msra.mxu0 %v2158
      %2176 = vmatprep.subr.bf16.mxu0 0
      %2177 = vmatpush1.bf16.msra.mxu0 %v2159
      %2178 = vmatprep.subr.bf16.mxu0 0
      %2179 = vmatpush1.bf16.msra.mxu0 0
      %2180 = vmatprep.subr.bf16.mxu0 0
      %2181 = vmatpush1.bf16.msra.mxu0 0
      %2182 = vmatprep.subr.bf16.mxu0 0
      %2183 = vmatpush1.bf16.msra.mxu0 0
      %2184 = vmatprep.subr.bf16.mxu0 0
      %2185 = vmatpush1.bf16.msra.mxu0 0
      %2186 = vmatprep.subr.bf16.mxu0 0
      %2187 = vmatpush1.bf16.msra.mxu0 0
      %2188 = vmatprep.subr.bf16.mxu0 0
      %2189 = vmatpush1.bf16.msra.mxu0 0
      %2190 = vmatprep.subr.bf16.mxu0 0
      %2191 = vmatpush1.bf16.msra.mxu0 0
      %2192 = vmatprep.subr.bf16.mxu0 0
      %2193 = vmatpush1.bf16.msra.mxu0 0
      %2194 = vmatprep.subr.bf16.mxu0 0
      %2195 = vmatpush1.bf16.msra.mxu0 0
      %2196 = vmatprep.subr.bf16.mxu0 0
      %2197 = vmatpush1.bf16.msra.mxu0 0
      %2198 = vmatprep.subr.bf16.mxu0 0
      %2199 = vmatpush1.bf16.msra.mxu0 0
      %2200 = vmatprep.subr.bf16.mxu0 0
      %2201 = vmatpush1.bf16.msra.mxu0 0
      %2202 = vmatprep.mubr.bf16.mxu0 0
      %2203 = vmatmul.mubr.bf16.gmra.mrb[0].mxu0 %v2165
      %v2204 = vpop.f32.mrb[0].mxu0
      %v2205 = vadd.f32 0.0, %v2204
      %v2206 = vpop.f32.mrb[0].mxu0
      %v2207 = vpop.f32.mrb[0].mxu0
      %v2208 = vadd.f32 0.0, %v2207
      %v2209 = vpop.f32.mrb[0].mxu0
      %2210 = vmatprep.mubr.bf16.mxu0 0
      %2211 = vmatmul.mubr.bf16.gmra.mrb[0].mxu0 %v2168
      %v2212 = vpop.f32.mrb[0].mxu0
      %v2213 = vadd.f32 0.0, %v2212
      %v2214 = vpop.f32.mrb[0].mxu0
      %v2215 = vpop.f32.mrb[0].mxu0
      %v2216 = vpop.f32.mrb[0].mxu0
      %2217 = vdwg.mxu0
      %v2218 = vadd.f32 %v2121, %v2205
      %v2219 = vadd.f32 %v2122, %v2208
      %v2220 = vadd.f32 %v2123, %v2213
      %v2221 = vld [vmem:[%s4] sm:$0x1]
      %v2223 = vlaneseq
      %v2224 = vshrl.u32 %v2223, 7
      %v2225 = vsub.s32 0, %v2224
      %v2226 = vrot.slane %v2221, %v2225
      %v2228 = vadd.f32 %v2218, %v2226
      %v2229 = vadd.f32 %v2219, %v2226
      %v2230 = vadd.f32 %v2220, %v2226
      %vm2235 = vcmask 1040384
      %v2236 = vrot.slane %v1299, 7
      %v2237 = vrot.slane %v1300, 7
      %v2238 = vsel %vm2235, %v2236, %v2237
      %v2239 = vrot.slane %v1301, 7
      %v2240 = vsel %vm2235, %v2237, %v2239
      %v2241 = vrot.slane %v1302, 7
      %v2242 = vsel %vm2235, %v2239, %v2241
      %v2246 = vadd.f32 %v2228, %v2238
      %v2247 = vadd.f32 %v2229, %v2240
      %v2248 = vadd.f32 %v2230, %v2242
      %v2249 = vmax.f32 %v2246, 0.0
      %v2250 = vmax.f32 %v2247, 0.0
      %v2251 = vmax.f32 %v2248, 0.0
      %v2252 = vsel %vm1222, %v2249, 0.0
      %v2253 = vsel %vm1223, %v2250, 0.0
      %v2254 = vsel %vm1224, %v2251, 0.0
      %v2255 = vld [vmem:[%s224] sm:$0xf]
      %v2256 = vsel %vm1230, 0, %v2255
      %2257 = vst [vmem:[%s224] sm:$0xf] %v2256
      %v2258 = vpack.c.bf16 %v2253, %v2252
      %v2259 = vpack.c.bf16 %v2254, %v2254
      %v2262 = vunpack.c.l.b16 %v2258
      %v2263 = vunpack.c.h.b16 %v2258
      %v2264 = vunpack.c.l.b16 %v2259
      %v2265 = vpack.c.b16 %v2262, %v2262
      %v2266 = vpack.c.b16 %v2263, %v2263
      %v2267 = vpack.c.b16 %v2264, %v2264
      %v2269 = vshll.u32 %v2265, 16
      %v2271 = vrot.slane %v2269, 5
      %v2272 = vshrl.u32 %v2265, 16
      %v2274 = vrot.slane %v2272, 4
      %v2275 = vor.u32 %v2274, %v2271
      %v2276 = vrot.slane %v2275, 4
      %v2278 = vshll.u32 %v2266, 16
      %v2280 = vrot.slane %v2278, 5
      %v2281 = vsel %vm1245, %v2276, %v2280
      %v2282 = vshrl.u32 %v2266, 16
      %v2284 = vrot.slane %v2282, 4
      %v2285 = vor.u32 %v2284, %v2280
      %v2286 = vrot.slane %v2285, 4
      %v2288 = vshll.u32 %v2267, 16
      %v2290 = vrot.slane %v2288, 5
      %v2291 = vsel %vm1245, %v2286, %v2290
      %v2292 = vshrl.u32 %v2267, 16
      %v2294 = vrot.slane %v2292, 4
      %v2295 = vor.u32 %v2294, %v2290
      %v2296 = vrot.slane %v2295, 4
      %v2301 = vld [vmem:[%s224] sm:$0x8]
      %v2302 = vsel %vm1281, %v2271, %v2301
      %2303 = vst [vmem:[%s224] sm:$0x8] %v2302
      %2304 = vst.msk [vmem:[%s224 + $0x4] sm:$0xf] %vm1285, %v2281
      %2305 = vst.msk [vmem:[%s224 + $0x8] sm:$0xf] %vm1285, %v2291
      %v2306 = vld [vmem:[%s224 + $0xc] sm:$0xf]
      %v2307 = vsel %vm1230, %v2296, %v2306
      %2308 = vst [vmem:[%s224 + $0xc] sm:$0xf] %v2307
      %v2309 = vld [vmem:[%s224 + $0xc] sm:$0x8]
      %v2310 = vsel %vm1281, 0, %v2309
      %2311 = vst [vmem:[%s224 + $0xc] sm:$0x8] %v2310
      %2312 = vst.msk [vmem:[%s224 + $0x10] sm:$0xf] %vm1285, 0
      %p2313 = scmp.lt.s32.totalorder %s16, 1
      %s2314 = scalar_select %p2313, %s16, 1
      %s2315 = smul.addr %s2314, 5
      %s2316 = smul.addr %s2315, 4
      %s2317 = scalar_lea.vmem %s5, %s2316
      // Predicated region
      $region41: #{_lambda_.7} parent=39 // pred_check
        %p2318 = pneg %p144
      $region42: #{_lambda_.7} parent=39 // pred_check_branch
        %2320 = sbr.rel (%p2318) target = $region44
      $region43: #{_lambda_.7} parent=39 // pred_region
        _
      $region44: #{_lambda_.7} parent=39 // pred_fallthru
        _
    $region40: #{_lambda_.7} parent=5 // pred_fallthru
      _
    %p2321 = scmp.le.s32.totalorder 2, %s11
    // Predicated region
    $region45: #{_lambda_.7} parent=5 // pred_check
      %p2322 = pneg %p2321
    $region46: #{_lambda_.7} parent=5 // pred_check_branch
      %2324 = sbr.rel (%p2322) target = $region48
    $region47: #{_lambda_.7} parent=5 // pred_region
      %s2325 = ssub.s32 %s11, 2
      // Predicated region
      $region49: #{_lambda_.7} parent=47 // pred_check
        %p2326 = pneg %p150
      $region50: #{_lambda_.7} parent=47 // pred_check_branch
        %2328 = sbr.rel (%p2326) target = $region52
      $region51: #{_lambda_.7} parent=47 // pred_region
        %p2329 = scmp.lt.s32.totalorder %s17, 1
        %s2330 = scalar_select %p2329, %s17, 1
        %s2331 = smul.addr %s2330, 5
        %s2332 = smul.addr %s2331, 4
        %s2333 = scalar_lea.vmem %s5, %s2332
      $region52: #{_lambda_.7} parent=47 // pred_fallthru
        _
    $region48: #{_lambda_.7} parent=5 // pred_fallthru
      _
  $region6: #{_lambda_.7} parent=0 // loop_footer
    %s15 = sadd.s32 1, %s11
  $region7: #{_lambda_.7} parent=0 // loop_footer_branch
    %10 = sbr.rel target = $region3
  $region8: #{_lambda_.7} parent=0 // loop_exit
    _

</llo_original>
